<compile_context>
chip_gen: v7x
topology: tpu7x:2x2x1
jax: 0.10.0
libtpu: 0.0.40
codegen_flags: <defaults>
</compile_context>

<pallas_src>
import functools

import jax
import jax.numpy as jnp
from jax.experimental import pallas as pl
from jax.experimental.pallas import tpu as pltpu


def resblock_kernel(xpad_ref, w1_ref, b1_ref, w2_ref, b2_ref,
                    out_ref, xbuf_ref, hp_ref, sem_ref, *,
                    H, W, Cp, K, pad, TH, res_scale):
    """One grid step = one (batch, row-block).

    xpad_ref : (N, H+4p, W+2p, Cp) zero-padded input, left in HBM (pl.ANY)
    w*_ref   : (K*K*Cp, Cp)        im2col-flattened conv weights
    b*_ref   : (1, Cp)             conv biases (lane-padded)
    out_ref  : (1, TH, W, Cp)      output row block
    xbuf_ref : (TH+4p, W+2p, Cp)   VMEM: fetched halo'd input rows
    hp_ref   : (TH+2p, W+2p, Cp)   VMEM: column-padded relu(conv1) rows
    """
    n = pl.program_id(0)
    rb = pl.program_id(1)
    HE = TH + 2 * pad          # intermediate rows needed by conv2 (with halo)
    THB = TH + 4 * pad         # input rows needed by conv1 for those HE rows
    f32 = jnp.float32

    # ---- fetch the overlapping (halo'd) input row block: HBM -> VMEM ----------
    row0 = pl.multiple_of(rb * TH, TH)
    cp = pltpu.make_async_copy(xpad_ref.at[n, pl.ds(row0, THB)], xbuf_ref, sem_ref)
    cp.start()
    cp.wait()

    # ---- conv1 as a single im2col matmul over the extended (halo) rows --------
    taps1 = [xbuf_ref[ky:ky + HE, kx:kx + W, :]
             for ky in range(K) for kx in range(K)]
    patches1 = jnp.concatenate(taps1, axis=-1)                    # (HE, W, K*K*Cp)
    y1 = jax.lax.dot_general(patches1, w1_ref[...],
                             dimension_numbers=(((2,), (0,)), ((), ())),
                             preferred_element_type=f32)
    h = jnp.maximum(y1 + b1_ref[0, :].astype(f32)[None, None, :], 0.0)

    # ---- stage relu(conv1) into the column-padded scratch ---------------------
    # Only the thin zero halo strips are filled; the interior is overwritten
    # every step, so no full-buffer zeroing and no stale data across grid steps.
    hp_ref[:, :pad, :] = jnp.zeros((HE, pad, Cp), hp_ref.dtype)
    hp_ref[:, pad + W:, :] = jnp.zeros((HE, pad, Cp), hp_ref.dtype)
    hp_ref[:, pad:pad + W, :] = h.astype(hp_ref.dtype)

    # Rows of the intermediate that fall outside the image must be exact zeros
    # (conv2's zero padding), not relu(bias) computed over padded input rows.
    @pl.when(rb == 0)
    def _():
        hp_ref[:pad, pad:pad + W, :] = jnp.zeros((pad, W, Cp), hp_ref.dtype)

    @pl.when(rb == pl.num_programs(1) - 1)
    def _():
        hp_ref[HE - pad:, pad:pad + W, :] = jnp.zeros((pad, W, Cp), hp_ref.dtype)

    # ---- conv2 as a single im2col matmul -> exactly this block's TH rows ------
    taps2 = [hp_ref[ky:ky + TH, kx:kx + W, :]
             for ky in range(K) for kx in range(K)]
    patches2 = jnp.concatenate(taps2, axis=-1)                    # (TH, W, K*K*Cp)
    y2 = jax.lax.dot_general(patches2, w2_ref[...],
                             dimension_numbers=(((2,), (0,)), ((), ())),
                             preferred_element_type=f32)
    y2 = y2 + b2_ref[0, :].astype(f32)[None, None, :]
    if res_scale != 1.0:                         # static python check (trace time)
        y2 = y2 * res_scale

    # ---- residual from the interior of the already-fetched block --------------
    x_res = xbuf_ref[2 * pad:2 * pad + TH, pad:pad + W, :]
    out_ref[0] = (y2 + x_res.astype(f32)).astype(out_ref.dtype)


def resblock_forward(x_nchw, w1, b1, w2, b2, res_scale=1.0, block_h=8):
    """x_nchw: (N, C, H, W); w*: (K, K, Cin, Cout) HWIO; b*: (C,). Returns NCHW."""
    N, C, H, W = x_nchw.shape
    K = w1.shape[0]
    pad = K // 2
    LANES = 128
    Cp = ((C + LANES - 1) // LANES) * LANES       # lane-dense channel padding

    # Row-block size: must divide H and be >= pad; otherwise fall back to full H.
    TH = block_h if (0 < block_h <= H and H % block_h == 0 and block_h >= pad) else H
    RB = H // TH
    THB = TH + 4 * pad
    Wp = W + 2 * pad

    x = jnp.transpose(x_nchw, (0, 2, 3, 1))       # NHWC
    # Single pad op: 2*pad zero rows top/bottom (conv1+conv2 halo), pad zero cols,
    # channels padded to Cp.  (Zero padding channels keeps results exact.)
    xpad = jnp.pad(x, ((0, 0), (2 * pad, 2 * pad), (pad, pad), (0, Cp - C)))

    def flat_w(w):
        wp = jnp.pad(w, ((0, 0), (0, 0), (0, Cp - C), (0, Cp - C)))
        return wp.reshape(K * K * Cp, Cp)         # im2col weight layout (tap-major)

    w1f, w2f = flat_w(w1), flat_w(w2)
    b1p = jnp.pad(b1, (0, Cp - C)).reshape(1, Cp)
    b2p = jnp.pad(b2, (0, Cp - C)).reshape(1, Cp)

    kern = functools.partial(resblock_kernel, H=H, W=W, Cp=Cp, K=K, pad=pad,
                             TH=TH, res_scale=float(res_scale))

    out = pl.pallas_call(
        kern,
        out_shape=jax.ShapeDtypeStruct((N, H, W, Cp), x.dtype),
        grid_spec=pltpu.PrefetchScalarGridSpec(
            num_scalar_prefetch=0,
            grid=(N, RB),
            in_specs=[
                pl.BlockSpec(memory_space=pl.ANY),                    # xpad in HBM
                pl.BlockSpec((K * K * Cp, Cp), lambda n, r: (0, 0)),  # w1 (resident)
                pl.BlockSpec((1, Cp), lambda n, r: (0, 0)),           # b1
                pl.BlockSpec((K * K * Cp, Cp), lambda n, r: (0, 0)),  # w2
                pl.BlockSpec((1, Cp), lambda n, r: (0, 0)),           # b2
            ],
            out_specs=pl.BlockSpec((1, TH, W, Cp), lambda n, r: (n, r, 0, 0)),
            scratch_shapes=[
                pltpu.VMEM((THB, Wp, Cp), x.dtype),           # halo'd input rows
                pltpu.VMEM((TH + 2 * pad, Wp, Cp), x.dtype),  # padded relu(conv1)
                pltpu.SemaphoreType.DMA,
            ],
        ),
        compiler_params=pltpu.CompilerParams(
            dimension_semantics=("parallel", "parallel")),
    )(xpad, w1f, b1p, w2f, b2p)

    out = out[..., :C]                            # drop lane-padding channels
    return jnp.transpose(out, (0, 3, 1, 2))       # back to NCHW


def resblock_reference(x_nchw, w1, b1, w2, b2, res_scale=1.0):
    """Plain-JAX reference (same semantics as the PyTorch module)."""
    x = jnp.transpose(x_nchw, (0, 2, 3, 1))
    dn = ('NHWC', 'HWIO', 'NHWC')
    y = jax.lax.conv_general_dilated(x, w1, (1, 1), 'SAME', dimension_numbers=dn) + b1
    y = jnp.maximum(y, 0.0)
    y = jax.lax.conv_general_dilated(y, w2, (1, 1), 'SAME', dimension_numbers=dn) + b2
    out = y * res_scale + x
    return jnp.transpose(out, (0, 3, 1, 2))


if __name__ == "__main__":
    # Small deterministic example consistent with ResBlock(conv, n_feat=4, kernel_size=3)
    N, C, H, W, K = 2, 4, 16, 16, 3
    res_scale = 1.0

    key = jax.random.PRNGKey(0)
    kx, kw1, kb1, kw2, kb2 = jax.random.split(key, 5)

    x = jax.random.normal(kx, (N, C, H, W), dtype=jnp.float32)
    # conv weights in HWIO = (K, K, Cin, Cout); biases (C,)
    w1 = 0.1 * jax.random.normal(kw1, (K, K, C, C), dtype=jnp.float32)
    b1 = 0.1 * jax.random.normal(kb1, (C,), dtype=jnp.float32)
    w2 = 0.1 * jax.random.normal(kw2, (K, K, C, C), dtype=jnp.float32)
    b2 = 0.1 * jax.random.normal(kb2, (C,), dtype=jnp.float32)

    out = resblock_forward(x, w1, b1, w2, b2, res_scale)
    out = jax.block_until_ready(out)

    ref = resblock_reference(x, w1, b1, w2, b2, res_scale)
    assert out.shape == (N, C, H, W)
    assert jnp.allclose(out, ref, atol=1e-4, rtol=1e-4), "Pallas kernel mismatch vs reference"

    print("KERNEL_OK")
</pallas_src>

<mosaic_0001>
module attributes {stable_mosaic.version = 11 : i64} {
  func.func @resblock_kernel(%arg0: i32, %arg1: i32, %arg2: memref<2x20x18x128xf32, #tpu.memory_space<any>>, %arg3: memref<1152x128xf32, #tpu.memory_space<vmem>>, %arg4: memref<1x128xf32, #tpu.memory_space<vmem>>, %arg5: memref<1152x128xf32, #tpu.memory_space<vmem>>, %arg6: memref<1x128xf32, #tpu.memory_space<vmem>>, %arg7: memref<1x8x16x128xf32, #tpu.memory_space<vmem>>, %arg8: memref<12x18x128xf32, #tpu.memory_space<vmem>>, %arg9: memref<10x18x128xf32, #tpu.memory_space<vmem>>, %arg10: memref<!tpu.dma_semaphore, #tpu.memory_space<semaphore_mem>>) attributes {dimension_semantics = [#tpu.dimension_semantics<parallel>, #tpu.dimension_semantics<parallel>], iteration_bounds = array<i64: 2, 2>, scalar_prefetch = 0 : i64, scratch_operands = 3 : i64, tpu.core_type = #tpu.core_type<tc>, window_params = [{}, {pipeline_mode = #tpu.pipeline_mode<synchronous>, transform_indices = @transform_1, window_bounds = array<i64: 1152, 128>}, {pipeline_mode = #tpu.pipeline_mode<synchronous>, transform_indices = @transform_2, window_bounds = array<i64: 1, 128>}, {pipeline_mode = #tpu.pipeline_mode<synchronous>, transform_indices = @transform_3, window_bounds = array<i64: 1152, 128>}, {pipeline_mode = #tpu.pipeline_mode<synchronous>, transform_indices = @transform_4, window_bounds = array<i64: 1, 128>}, {transform_indices = @transform_5, window_bounds = array<i64: 1, 8, 16, 128>}]} {
    %c8_i32 = arith.constant 8 : i32
    %0 = arith.muli %arg1, %c8_i32 : i32
    %1 = tpu.assume_multiple %0, 8 : i32
    %c0_i32 = arith.constant 0 : i32
    %c0_i32_0 = arith.constant 0 : i32
    %2 = tpu.memref_slice %arg2[%arg0, %1, %c0_i32, %c0_i32_0] : memref<2x20x18x128xf32, #tpu.memory_space<any>> -> memref<1x12x18x128xf32, #tpu.memory_space<any>>
    %3 = tpu.memref_squeeze %2 : memref<1x12x18x128xf32, #tpu.memory_space<any>> -> memref<12x18x128xf32, #tpu.memory_space<any>>
    tpu.enqueue_dma source(%3 : memref<12x18x128xf32, #tpu.memory_space<any>>) target(%arg8 : memref<12x18x128xf32, #tpu.memory_space<vmem>>) target_semaphore(%arg10 : memref<!tpu.dma_semaphore, #tpu.memory_space<semaphore_mem>>)
    %c0_i32_1 = arith.constant 0 : i32
    %c0_i32_2 = arith.constant 0 : i32
    %4 = tpu.memref_slice %arg2[%arg0, %1, %c0_i32_1, %c0_i32_2] : memref<2x20x18x128xf32, #tpu.memory_space<any>> -> memref<1x12x18x128xf32, #tpu.memory_space<any>>
    %5 = tpu.memref_squeeze %4 : memref<1x12x18x128xf32, #tpu.memory_space<any>> -> memref<12x18x128xf32, #tpu.memory_space<any>>
    tpu.wait_dma2 semaphore(%arg10 : memref<!tpu.dma_semaphore, #tpu.memory_space<semaphore_mem>>) src(%5 : memref<12x18x128xf32, #tpu.memory_space<any>>) dst(%arg8 : memref<12x18x128xf32, #tpu.memory_space<vmem>>)
    %c0 = arith.constant 0 : index
    %c0_3 = arith.constant 0 : index
    %c0_4 = arith.constant 0 : index
    %6 = vector.load %arg8[%c0, %c0_3, %c0_4] : memref<12x18x128xf32, #tpu.memory_space<vmem>>, vector<10x16x128xf32>
    %c0_5 = arith.constant 0 : index
    %c1 = arith.constant 1 : index
    %c0_6 = arith.constant 0 : index
    %7 = vector.load %arg8[%c0_5, %c1, %c0_6] : memref<12x18x128xf32, #tpu.memory_space<vmem>>, vector<10x16x128xf32>
    %c0_7 = arith.constant 0 : index
    %c2 = arith.constant 2 : index
    %c0_8 = arith.constant 0 : index
    %8 = vector.load %arg8[%c0_7, %c2, %c0_8] : memref<12x18x128xf32, #tpu.memory_space<vmem>>, vector<10x16x128xf32>
    %c1_9 = arith.constant 1 : index
    %c0_10 = arith.constant 0 : index
    %c0_11 = arith.constant 0 : index
    %9 = vector.load %arg8[%c1_9, %c0_10, %c0_11] : memref<12x18x128xf32, #tpu.memory_space<vmem>>, vector<10x16x128xf32>
    %c1_12 = arith.constant 1 : index
    %c1_13 = arith.constant 1 : index
    %c0_14 = arith.constant 0 : index
    %10 = vector.load %arg8[%c1_12, %c1_13, %c0_14] : memref<12x18x128xf32, #tpu.memory_space<vmem>>, vector<10x16x128xf32>
    %c1_15 = arith.constant 1 : index
    %c2_16 = arith.constant 2 : index
    %c0_17 = arith.constant 0 : index
    %11 = vector.load %arg8[%c1_15, %c2_16, %c0_17] : memref<12x18x128xf32, #tpu.memory_space<vmem>>, vector<10x16x128xf32>
    %c2_18 = arith.constant 2 : index
    %c0_19 = arith.constant 0 : index
    %c0_20 = arith.constant 0 : index
    %12 = vector.load %arg8[%c2_18, %c0_19, %c0_20] : memref<12x18x128xf32, #tpu.memory_space<vmem>>, vector<10x16x128xf32>
    %c2_21 = arith.constant 2 : index
    %c1_22 = arith.constant 1 : index
    %c0_23 = arith.constant 0 : index
    %13 = vector.load %arg8[%c2_21, %c1_22, %c0_23] : memref<12x18x128xf32, #tpu.memory_space<vmem>>, vector<10x16x128xf32>
    %c2_24 = arith.constant 2 : index
    %c2_25 = arith.constant 2 : index
    %c0_26 = arith.constant 0 : index
    %14 = vector.load %arg8[%c2_24, %c2_25, %c0_26] : memref<12x18x128xf32, #tpu.memory_space<vmem>>, vector<10x16x128xf32>
    %15 = tpu.concatenate %6, %7, %8, %9, %10, %11, %12, %13, %14 in 2 : vector<10x16x128xf32>, vector<10x16x128xf32>, vector<10x16x128xf32>, vector<10x16x128xf32>, vector<10x16x128xf32>, vector<10x16x128xf32>, vector<10x16x128xf32>, vector<10x16x128xf32>, vector<10x16x128xf32> -> vector<10x16x1152xf32>
    %c0_27 = arith.constant 0 : index
    %c0_28 = arith.constant 0 : index
    %16 = vector.load %arg3[%c0_27, %c0_28] : memref<1152x128xf32, #tpu.memory_space<vmem>>, vector<1152x128xf32>
    %cst = arith.constant dense<0.000000e+00> : vector<10x16x128xf32>
    %17 = tpu.matmul %15, %16, %cst {dimension_numbers = #tpu.dot_dimension_numbers<[2], [0], [0, 1], [1], [0, 0, 0, 1, 1, 1], [], []>} : vector<10x16x1152xf32>, vector<1152x128xf32>, vector<10x16x128xf32> -> vector<10x16x128xf32>
    %c0_29 = arith.constant 0 : index
    %c0_30 = arith.constant 0 : index
    %18 = vector.load %arg4[%c0_29, %c0_30] : memref<1x128xf32, #tpu.memory_space<vmem>>, vector<1x128xf32>
    %19 = vector.shape_cast %18 : vector<1x128xf32> to vector<128xf32>
    %20 = vector.shape_cast %19 : vector<128xf32> to vector<1x1x128xf32>
    %21 = vector.broadcast %20 : vector<1x1x128xf32> to vector<10x16x128xf32>
    %22 = arith.addf %17, %21 : vector<10x16x128xf32>
    %cst_31 = arith.constant 0.000000e+00 : f32
    %23 = vector.broadcast %cst_31 : f32 to vector<10x16x128xf32>
    %24 = arith.maximumf %22, %23 : vector<10x16x128xf32>
    %cst_32 = arith.constant 0.000000e+00 : f32
    %25 = vector.broadcast %cst_32 : f32 to vector<10x1x128xf32>
    %c0_33 = arith.constant 0 : index
    %c0_34 = arith.constant 0 : index
    %c0_35 = arith.constant 0 : index
    %26 = vector.load %arg9[%c0_33, %c0_34, %c0_35] : memref<10x18x128xf32, #tpu.memory_space<vmem>>, vector<10x1x128xf32>
    tpu.vector_store %arg9[%c0_33, %c0_34, %c0_35], %25 {strides = array<i32>} : memref<10x18x128xf32, #tpu.memory_space<vmem>>, vector<10x1x128xf32>,
    %cst_36 = arith.constant 0.000000e+00 : f32
    %27 = vector.broadcast %cst_36 : f32 to vector<10x1x128xf32>
    %c0_37 = arith.constant 0 : index
    %c17 = arith.constant 17 : index
    %c0_38 = arith.constant 0 : index
    %28 = vector.load %arg9[%c0_37, %c17, %c0_38] : memref<10x18x128xf32, #tpu.memory_space<vmem>>, vector<10x1x128xf32>
    tpu.vector_store %arg9[%c0_37, %c17, %c0_38], %27 {strides = array<i32>} : memref<10x18x128xf32, #tpu.memory_space<vmem>>, vector<10x1x128xf32>,
    %c0_39 = arith.constant 0 : index
    %c1_40 = arith.constant 1 : index
    %c0_41 = arith.constant 0 : index
    %29 = vector.load %arg9[%c0_39, %c1_40, %c0_41] : memref<10x18x128xf32, #tpu.memory_space<vmem>>, vector<10x16x128xf32>
    tpu.vector_store %arg9[%c0_39, %c1_40, %c0_41], %24 {strides = array<i32>} : memref<10x18x128xf32, #tpu.memory_space<vmem>>, vector<10x16x128xf32>,
    %c0_i32_42 = arith.constant 0 : i32
    %30 = arith.cmpi eq, %arg1, %c0_i32_42 : i32
    %31 = arith.extui %30 : i1 to i32
    %c0_i32_43 = arith.constant 0 : i32
    %32 = arith.cmpi ne, %31, %c0_i32_43 : i32
    scf.if %32 {
      %cst_84 = arith.constant 0.000000e+00 : f32
      %58 = vector.broadcast %cst_84 : f32 to vector<1x16x128xf32>
      %c0_85 = arith.constant 0 : index
      %c1_86 = arith.constant 1 : index
      %c0_87 = arith.constant 0 : index
      %59 = vector.load %arg9[%c0_85, %c1_86, %c0_87] : memref<10x18x128xf32, #tpu.memory_space<vmem>>, vector<1x16x128xf32>
      tpu.vector_store %arg9[%c0_85, %c1_86, %c0_87], %58 {strides = array<i32>} : memref<10x18x128xf32, #tpu.memory_space<vmem>>, vector<1x16x128xf32>,
    } else {
    }
    %c1_i32 = arith.constant 1 : i32
    %33 = arith.cmpi eq, %arg1, %c1_i32 : i32
    %34 = arith.extui %33 : i1 to i32
    %c0_i32_44 = arith.constant 0 : i32
    %35 = arith.cmpi ne, %34, %c0_i32_44 : i32
    scf.if %35 {
      %cst_84 = arith.constant 0.000000e+00 : f32
      %58 = vector.broadcast %cst_84 : f32 to vector<1x16x128xf32>
      %c9 = arith.constant 9 : index
      %c1_85 = arith.constant 1 : index
      %c0_86 = arith.constant 0 : index
      %59 = vector.load %arg9[%c9, %c1_85, %c0_86] : memref<10x18x128xf32, #tpu.memory_space<vmem>>, vector<1x16x128xf32>
      tpu.vector_store %arg9[%c9, %c1_85, %c0_86], %58 {strides = array<i32>} : memref<10x18x128xf32, #tpu.memory_space<vmem>>, vector<1x16x128xf32>,
    } else {
    }
    %c0_45 = arith.constant 0 : index
    %c0_46 = arith.constant 0 : index
    %c0_47 = arith.constant 0 : index
    %36 = vector.load %arg9[%c0_45, %c0_46, %c0_47] : memref<10x18x128xf32, #tpu.memory_space<vmem>>, vector<8x16x128xf32>
    %c0_48 = arith.constant 0 : index
    %c1_49 = arith.constant 1 : index
    %c0_50 = arith.constant 0 : index
    %37 = vector.load %arg9[%c0_48, %c1_49, %c0_50] : memref<10x18x128xf32, #tpu.memory_space<vmem>>, vector<8x16x128xf32>
    %c0_51 = arith.constant 0 : index
    %c2_52 = arith.constant 2 : index
    %c0_53 = arith.constant 0 : index
    %38 = vector.load %arg9[%c0_51, %c2_52, %c0_53] : memref<10x18x128xf32, #tpu.memory_space<vmem>>, vector<8x16x128xf32>
    %c1_54 = arith.constant 1 : index
    %c0_55 = arith.constant 0 : index
    %c0_56 = arith.constant 0 : index
    %39 = vector.load %arg9[%c1_54, %c0_55, %c0_56] : memref<10x18x128xf32, #tpu.memory_space<vmem>>, vector<8x16x128xf32>
    %c1_57 = arith.constant 1 : index
    %c1_58 = arith.constant 1 : index
    %c0_59 = arith.constant 0 : index
    %40 = vector.load %arg9[%c1_57, %c1_58, %c0_59] : memref<10x18x128xf32, #tpu.memory_space<vmem>>, vector<8x16x128xf32>
    %c1_60 = arith.constant 1 : index
    %c2_61 = arith.constant 2 : index
    %c0_62 = arith.constant 0 : index
    %41 = vector.load %arg9[%c1_60, %c2_61, %c0_62] : memref<10x18x128xf32, #tpu.memory_space<vmem>>, vector<8x16x128xf32>
    %c2_63 = arith.constant 2 : index
    %c0_64 = arith.constant 0 : index
    %c0_65 = arith.constant 0 : index
    %42 = vector.load %arg9[%c2_63, %c0_64, %c0_65] : memref<10x18x128xf32, #tpu.memory_space<vmem>>, vector<8x16x128xf32>
    %c2_66 = arith.constant 2 : index
    %c1_67 = arith.constant 1 : index
    %c0_68 = arith.constant 0 : index
    %43 = vector.load %arg9[%c2_66, %c1_67, %c0_68] : memref<10x18x128xf32, #tpu.memory_space<vmem>>, vector<8x16x128xf32>
    %c2_69 = arith.constant 2 : index
    %c2_70 = arith.constant 2 : index
    %c0_71 = arith.constant 0 : index
    %44 = vector.load %arg9[%c2_69, %c2_70, %c0_71] : memref<10x18x128xf32, #tpu.memory_space<vmem>>, vector<8x16x128xf32>
    %45 = tpu.concatenate %36, %37, %38, %39, %40, %41, %42, %43, %44 in 2 : vector<8x16x128xf32>, vector<8x16x128xf32>, vector<8x16x128xf32>, vector<8x16x128xf32>, vector<8x16x128xf32>, vector<8x16x128xf32>, vector<8x16x128xf32>, vector<8x16x128xf32>, vector<8x16x128xf32> -> vector<8x16x1152xf32>
    %c0_72 = arith.constant 0 : index
    %c0_73 = arith.constant 0 : index
    %46 = vector.load %arg5[%c0_72, %c0_73] : memref<1152x128xf32, #tpu.memory_space<vmem>>, vector<1152x128xf32>
    %cst_74 = arith.constant dense<0.000000e+00> : vector<8x16x128xf32>
    %47 = tpu.matmul %45, %46, %cst_74 {dimension_numbers = #tpu.dot_dimension_numbers<[2], [0], [0, 1], [1], [0, 0, 0, 1, 1, 1], [], []>} : vector<8x16x1152xf32>, vector<1152x128xf32>, vector<8x16x128xf32> -> vector<8x16x128xf32>
    %c0_75 = arith.constant 0 : index
    %c0_76 = arith.constant 0 : index
    %48 = vector.load %arg6[%c0_75, %c0_76] : memref<1x128xf32, #tpu.memory_space<vmem>>, vector<1x128xf32>
    %49 = vector.shape_cast %48 : vector<1x128xf32> to vector<128xf32>
    %50 = vector.shape_cast %49 : vector<128xf32> to vector<1x1x128xf32>
    %51 = vector.broadcast %50 : vector<1x1x128xf32> to vector<8x16x128xf32>
    %52 = arith.addf %47, %51 : vector<8x16x128xf32>
    %c2_77 = arith.constant 2 : index
    %c1_78 = arith.constant 1 : index
    %c0_79 = arith.constant 0 : index
    %53 = vector.load %arg8[%c2_77, %c1_78, %c0_79] : memref<12x18x128xf32, #tpu.memory_space<vmem>>, vector<8x16x128xf32>
    %54 = arith.addf %52, %53 : vector<8x16x128xf32>
    %c0_80 = arith.constant 0 : index
    %c0_81 = arith.constant 0 : index
    %c0_82 = arith.constant 0 : index
    %c0_83 = arith.constant 0 : index
    %55 = vector.load %arg7[%c0_80, %c0_81, %c0_82, %c0_83] : memref<1x8x16x128xf32, #tpu.memory_space<vmem>>, vector<1x8x16x128xf32>
    %56 = vector.shape_cast %55 : vector<1x8x16x128xf32> to vector<8x16x128xf32>
    %57 = vector.shape_cast %54 : vector<8x16x128xf32> to vector<1x8x16x128xf32>
    tpu.vector_store %arg7[%c0_80, %c0_81, %c0_82, %c0_83], %57 {strides = array<i32>} : memref<1x8x16x128xf32, #tpu.memory_space<vmem>>, vector<1x8x16x128xf32>,
    return
  }
  func.func @transform_1(%arg0: i32, %arg1: i32) -> (i32, i32) {
    %c0_i32 = arith.constant 0 : i32
    %c0_i32_0 = arith.constant 0 : i32
    %c0_i32_1 = arith.constant 0 : i32
    return %c0_i32, %c0_i32_0 : i32, i32
  }
  func.func @transform_2(%arg0: i32, %arg1: i32) -> (i32, i32) {
    %c0_i32 = arith.constant 0 : i32
    %c0_i32_0 = arith.constant 0 : i32
    %c0_i32_1 = arith.constant 0 : i32
    return %c0_i32, %c0_i32_0 : i32, i32
  }
  func.func @transform_3(%arg0: i32, %arg1: i32) -> (i32, i32) {
    %c0_i32 = arith.constant 0 : i32
    %c0_i32_0 = arith.constant 0 : i32
    %c0_i32_1 = arith.constant 0 : i32
    return %c0_i32, %c0_i32_0 : i32, i32
  }
  func.func @transform_4(%arg0: i32, %arg1: i32) -> (i32, i32) {
    %c0_i32 = arith.constant 0 : i32
    %c0_i32_0 = arith.constant 0 : i32
    %c0_i32_1 = arith.constant 0 : i32
    return %c0_i32, %c0_i32_0 : i32, i32
  }
  func.func @transform_5(%arg0: i32, %arg1: i32) -> (i32, i32, i32, i32) {
    %c0_i32 = arith.constant 0 : i32
    %c0_i32_0 = arith.constant 0 : i32
    %c0_i32_1 = arith.constant 0 : i32
    return %arg0, %arg1, %c0_i32, %c0_i32_0 : i32, i32, i32, i32
  }
}

</mosaic_0001>

<llo_original>
// kernel: tpu_custom_call.1
$region0: #{tpu_custom_call.1}
  #allocation0 [shape = 'u32[]', space=smem, size = 0x4, offset = 0x4, fixed_abs, tag = 'smem constant byte address 0x4 - core index']
  #allocation1 [shape = 'u32[144,128]{1,0:T(1,128)}', space=vmem, size = 0x12000, scoped, tag = 'internal scratch']
  #allocation2 [shape = 'f32[12,18,128]{2,1,0:T(8,128)}', space=vmem, size = 0x24000, scoped, tag = 'scratch operand']
  #allocation3 [shape = 'f32[10,18,128]{2,1,0:T(8,128)}', space=vmem, size = 0x1e000, scoped, tag = 'scratch operand']
  #allocation4 [shape = 's32[1]{0}', space=sflag, size = 0x4, scoped, tag = 'scratch operand']
  #allocation9 [shape = 's32[]', space=sflag, size = 0x4, offset = 0, fixed_abs, tag = 'sflag constant byte address 0x0 - dummy sync flag']
  %s0 = inlined_call_operand.vmem [shape: f32[2,20,18,128], index: 0, kind: input, shape index: {}]
  %s1 = inlined_call_operand.vmem [shape: f32[1152,128], index: 1, kind: input, shape index: {}]
  %s2 = inlined_call_operand.vmem [shape: f32[1,128], index: 2, kind: input, shape index: {}]
  %s3 = inlined_call_operand.hbm [shape: f32[1152,128], index: 3, kind: input, shape index: {}]
  %s4 = inlined_call_operand.vmem [shape: f32[1,128], index: 4, kind: input, shape index: {}]
  %s5 = inlined_call_operand.hbm [shape: f32[2,16,16,128], index: 5, kind: output, shape index: {}]
  %s6 = sld [smem:[#allocation0]]
  $region98: #{tpu_custom_call.1} parent=0
    _
  %s8 = ssub.s32 1, %s6
  %s9 = scalar_select 0, %s8, %s6
  $region1: #{tpu_custom_call.1} parent=0
    #allocation5 [shape = 'u8[589824]{0}', space=vmem, size = 0x90000, scoped, tag = 'input window, operand 3, single buffered']
    #allocation6 [shape = 's32[2]{0}', space=sflag, size = 0x8, scoped, tag = 'scoped memory for tpu_custom_call.1']
    #allocation7 [shape = 's32[2]{0}', space=sflag, size = 0x8, scoped, tag = 'scoped memory for tpu_custom_call.1']
    #allocation8 [shape = 'u8[131072]{0}', space=vmem, size = 0x20000, scoped, tag = 'output window, operand 0']
    %10 = vsyncpa [#allocation6], 0
    %11 = vsyncpa [#allocation7], 0
    %s12 = scalar_lea.sflag [#allocation7], 1
    %13 = vsyncpa %s12, 0
    loop: start=0, step=1, limit=6
    $region2: #{tpu_custom_call.1} parent=1 // loop_pre_header
      _
    $region3: #{tpu_custom_call.1} parent=1 // loop_header
      %s15 = sphi 0, %s19
      %p16 = scmp.ge.s32.totalorder %s15, 6
      %s22 = sphi 0, %s34
      %s23 = sphi 0, %s30
      %s24 = sphi 0, %s22
      %s25 = sphi 0, %s23
      %s26 = sphi 0, %s24
      %s27 = sphi 0, %s25
      %s35 = sphi 0, %s35
      %s37 = sphi 0, %s35
      %s38 = sphi 0, %s37
      %s52 = sphi 0, %s38
      %s56 = sphi 0, %s56
      %s58 = sphi 0, %s56
      %s59 = sphi 0, %s58
      %s73 = sphi 0, %s59
      %s77 = sphi 0, %s77
      %s79 = sphi 0, %s77
      %s80 = sphi 0, %s79
      %s94 = sphi 0, %s80
      %s98 = sphi 0, %s98
      %s100 = sphi 0, %s98
      %s101 = sphi 0, %s100
      %s115 = sphi 0, %s101
      %s123 = sphi 0, %s125
      %s126 = sphi 0, %s123
      %s127 = sphi 0, %s126
      %s143 = sphi 0, %s127
    $region4: #{tpu_custom_call.1} parent=1 // loop_header_branch
      %18 = sbr.rel (%p16) target = $region8
    $region5: #{tpu_custom_call.1} parent=1 // loop_body
      %s20 = ssub.s32 %s15, 1
      %s21 = ssub.s32 %s15, 2
      %s28 = sadd.s32 1, %s23
      %p29 = scmp.ge.s32.totalorder %s28, 2
      %s30 = scalar_select %p29, 0, %s28
      %s31 = sadd.s32 1, %s22
      %s32 = scalar_select %p29, %s31, %s22
      %p33 = scmp.ge.s32.totalorder %s32, 2
      %s34 = scalar_select %p33, 0, %s32
      %s36 = sadd.s32 %s35, 1
      %p39 = scmp.eq.s32.totalorder %s15, 3
      %p40 = scmp.ne.s32.totalorder %s35, %s37
      %p41 = scmp.eq.s32.totalorder %s15, 0
      %p42 = por %p40, %p41
      %p43 = scmp.ne.s32.totalorder %s35, %s37
      %p44 = scmp.eq.s32.totalorder %s20, 3
      %p45 = por %p43, %p44
      %p46 = scmp.ne.s32.totalorder %s37, %s38
      %p47 = scmp.eq.s32.totalorder %s20, 0
      %p48 = por %p46, %p47
      %p49 = scmp.ne.s32.totalorder %s37, %s38
      %p50 = scmp.eq.s32.totalorder %s21, 3
      %p51 = por %p49, %p50
      %p53 = scmp.ne.s32.totalorder %s38, %s52
      %p54 = scmp.eq.s32.totalorder %s21, 0
      %p55 = por %p53, %p54
      %s57 = sadd.s32 %s56, 1
      %p60 = scmp.eq.s32.totalorder %s15, 3
      %p61 = scmp.ne.s32.totalorder %s56, %s58
      %p62 = scmp.eq.s32.totalorder %s15, 0
      %p63 = por %p61, %p62
      %p64 = scmp.ne.s32.totalorder %s56, %s58
      %p65 = scmp.eq.s32.totalorder %s20, 3
      %p66 = por %p64, %p65
      %p67 = scmp.ne.s32.totalorder %s58, %s59
      %p68 = scmp.eq.s32.totalorder %s20, 0
      %p69 = por %p67, %p68
      %p70 = scmp.ne.s32.totalorder %s58, %s59
      %p71 = scmp.eq.s32.totalorder %s21, 3
      %p72 = por %p70, %p71
      %p74 = scmp.ne.s32.totalorder %s59, %s73
      %p75 = scmp.eq.s32.totalorder %s21, 0
      %p76 = por %p74, %p75
      %s78 = sadd.s32 %s77, 1
      %p81 = scmp.eq.s32.totalorder %s15, 3
      %p82 = scmp.ne.s32.totalorder %s77, %s79
      %p83 = scmp.eq.s32.totalorder %s15, 0
      %p84 = por %p82, %p83
      %p85 = scmp.ne.s32.totalorder %s77, %s79
      %p86 = scmp.eq.s32.totalorder %s20, 3
      %p87 = por %p85, %p86
      %p88 = scmp.ne.s32.totalorder %s79, %s80
      %p89 = scmp.eq.s32.totalorder %s20, 0
      %p90 = por %p88, %p89
      %p91 = scmp.ne.s32.totalorder %s79, %s80
      %p92 = scmp.eq.s32.totalorder %s21, 3
      %p93 = por %p91, %p92
      %p95 = scmp.ne.s32.totalorder %s80, %s94
      %p96 = scmp.eq.s32.totalorder %s21, 0
      %p97 = por %p95, %p96
      %s99 = sadd.s32 %s98, 1
      %p102 = scmp.eq.s32.totalorder %s15, 3
      %p103 = scmp.ne.s32.totalorder %s98, %s100
      %p104 = scmp.eq.s32.totalorder %s15, 0
      %p105 = por %p103, %p104
      %p106 = scmp.ne.s32.totalorder %s98, %s100
      %p107 = scmp.eq.s32.totalorder %s20, 3
      %p108 = por %p106, %p107
      %p109 = scmp.ne.s32.totalorder %s100, %s101
      %p110 = scmp.eq.s32.totalorder %s20, 0
      %p111 = por %p109, %p110
      %p112 = scmp.ne.s32.totalorder %s100, %s101
      %p113 = scmp.eq.s32.totalorder %s21, 3
      %p114 = por %p112, %p113
      %p116 = scmp.ne.s32.totalorder %s101, %s115
      %p117 = scmp.eq.s32.totalorder %s21, 0
      %p118 = por %p116, %p117
      %s119 = ssub.s32 %s22, %s34
      %s120 = ssub.s32 %s23, %s30
      %s121 = sor.u32 %s119, %s120
      %p122 = scmp.eq.s32.totalorder %s121, 0
      %s124 = sadd.s32 %s123, 1
      %s125 = scalar_select %p122, %s123, %s124
      %p128 = pneg %p122
      %p129 = scmp.eq.s32.totalorder %s15, 3
      %p130 = por %p128, %p129
      %p131 = scmp.ne.s32.totalorder %s123, %s126
      %p132 = scmp.eq.s32.totalorder %s15, 0
      %p133 = por %p131, %p132
      %p134 = scmp.ne.s32.totalorder %s123, %s126
      %p135 = scmp.eq.s32.totalorder %s20, 3
      %p136 = por %p134, %p135
      %p137 = scmp.ne.s32.totalorder %s126, %s127
      %p138 = scmp.eq.s32.totalorder %s20, 0
      %p139 = por %p137, %p138
      %p140 = scmp.ne.s32.totalorder %s126, %s127
      %p141 = scmp.eq.s32.totalorder %s21, 3
      %p142 = por %p140, %p141
      %p144 = scmp.ne.s32.totalorder %s127, %s143
      %p145 = scmp.eq.s32.totalorder %s21, 0
      %p146 = por %p144, %p145
      %p147 = scmp.le.s32.totalorder 1, %s15
      %p148 = scmp.lt.s32.totalorder %s15, 5
      %p149 = pnand %p147, %p148
      %p150 = pneg %p149
      // Predicated region
      $region9: #{tpu_custom_call.1} parent=5 // pred_check
        _
      $region10: #{tpu_custom_call.1} parent=5 // pred_check_branch
        %152 = sbr.rel (%p149) target = $region12
      $region11: #{tpu_custom_call.1} parent=5 // pred_region
        %s153 = ssub.s32 %s15, 1
        // Predicated region
        $region13: #{tpu_custom_call.1} parent=11 // pred_check
          %p154 = pneg %p48
        $region14: #{tpu_custom_call.1} parent=11 // pred_check_branch
          %156 = sbr.rel (%p154) target = $region16
        $region15: #{tpu_custom_call.1} parent=11 // pred_region
          _
        $region16: #{tpu_custom_call.1} parent=11 // pred_fallthru
          _
        // Predicated region
        $region17: #{tpu_custom_call.1} parent=11 // pred_check
          %p157 = pneg %p69
        $region18: #{tpu_custom_call.1} parent=11 // pred_check_branch
          %159 = sbr.rel (%p157) target = $region20
        $region19: #{tpu_custom_call.1} parent=11 // pred_region
          _
        $region20: #{tpu_custom_call.1} parent=11 // pred_fallthru
          _
        // Predicated region
        $region21: #{tpu_custom_call.1} parent=11 // pred_check
          %p160 = pneg %p90
        $region22: #{tpu_custom_call.1} parent=11 // pred_check_branch
          %162 = sbr.rel (%p160) target = $region24
        $region23: #{tpu_custom_call.1} parent=11 // pred_region
          %s164 = ssub.s32 18432, 18432
          %165 = vsyncadd [#allocation6], %s164
          %s166 = sshll.u32 [#allocation5], 4
          %s167 = int_to_ptr.vmem [resolvable:$true] %s166
          %172 = dma.hbm_to_vmem [thread:$0]  %s3, 18432, %s167, [#allocation6], 128, 128, 8
        $region24: #{tpu_custom_call.1} parent=11 // pred_fallthru
          _
        // Predicated region
        $region25: #{tpu_custom_call.1} parent=11 // pred_check
          %p173 = pneg %p111
        $region26: #{tpu_custom_call.1} parent=11 // pred_check_branch
          %175 = sbr.rel (%p173) target = $region28
        $region27: #{tpu_custom_call.1} parent=11 // pred_region
          _
        $region28: #{tpu_custom_call.1} parent=11 // pred_fallthru
          _
      $region12: #{tpu_custom_call.1} parent=5 // pred_fallthru
        _
      %p176 = scmp.lt.s32.totalorder %s15, 4
      // Predicated region
      $region29: #{tpu_custom_call.1} parent=5 // pred_check
        %p177 = pneg %p176
      $region30: #{tpu_custom_call.1} parent=5 // pred_check_branch
        %179 = sbr.rel (%p177) target = $region32
      $region31: #{tpu_custom_call.1} parent=5 // pred_region
        _
      $region32: #{tpu_custom_call.1} parent=5 // pred_fallthru
        _
      %p180 = scmp.le.s32.totalorder 1, %s15
      %p181 = scmp.lt.s32.totalorder %s15, 5
      %p182 = pnand %p180, %p181
      %p183 = pneg %p182
      // Predicated region
      $region33: #{tpu_custom_call.1} parent=5 // pred_check
        _
      $region34: #{tpu_custom_call.1} parent=5 // pred_check_branch
        %185 = sbr.rel (%p182) target = $region36
      $region35: #{tpu_custom_call.1} parent=5 // pred_region
        %s186 = ssub.s32 %s15, 1
        // Predicated region
        $region37: #{tpu_custom_call.1} parent=35 // pred_check
          %p187 = pneg %p90
        $region38: #{tpu_custom_call.1} parent=35 // pred_check_branch
          %189 = sbr.rel (%p187) target = $region40
        $region39: #{tpu_custom_call.1} parent=35 // pred_region
          %190 = dma.done [#allocation6], 18432
        $region40: #{tpu_custom_call.1} parent=35 // pred_fallthru
          _
        %p191 = pneg %p48
        %p192 = pneg %p45
        %p193 = pneg %p69
        %p194 = pneg %p66
        %p195 = pneg %p90
        %p196 = pneg %p87
        %p197 = pneg %p111
        %p198 = pneg %p108
        %p199 = pneg %p139
        %p200 = pneg %p136
        %s201 = sand.u32 %s126, 1
        %s202 = scalar_lea.sflag [#allocation7], %s201
        %s203 = sand.u32 %s126, 1
        %s204 = smul.addr %s203, 128
        %s205 = scalar_lea.vmem [#allocation8], %s204
        %s206 = smul.u32 8, %s25
        %s207 = smul.u32 %s25, 8
        %s208 = smul.u32 %s207, 24
        %s209 = smul.u32 %s24, 480
        %s210 = sadd.s32 %s208, %s209
        %s211 = scalar_lea.vmem %s0, %s210
        %p213 = scmp.lt.u32.totalorder 18, 8
        %p214 = pneg %p213
        // Predicated region
        $region41: #{tpu_custom_call.1} parent=35 // pred_check
          _
        $region42: #{tpu_custom_call.1} parent=35 // pred_check_branch
          %216 = sbr.rel (%p213) target = $region44
        $region43: #{tpu_custom_call.1} parent=35 // pred_region
          %s253 = sand.u32 18, 7
          %p254 = scmp.eq.s32.totalorder %s253, 0
          %p255 = pneg %p254
          // Predicated region
          $region56: #{tpu_custom_call.1} parent=43 // pred_check
            _
          $region57: #{tpu_custom_call.1} parent=43 // pred_check_branch
            %257 = sbr.rel (%p254) target = $region59
          $region58: #{tpu_custom_call.1} parent=43 // pred_region
            %s258 = sand.u32 18, 7
            %s259 = ssub.s32 18, %s258
            %s260 = scalar_lea.vmem %s211, %s259
            %s261 = ssub.s32 18, %s258
            %s262 = scalar_lea.vmem [#allocation2], %s261
            loop: start=0, step=1, limit=1
            $region60: #{tpu_custom_call.1} parent=58 // loop_pre_header
              _
            $region61: #{tpu_custom_call.1} parent=58 // loop_header
              %s264 = sphi 0, %s268
              %p265 = scmp.ge.s32.totalorder %s264, 1
              %s269 = sphi %s211, %s211
              %s270 = sphi [#allocation2], [#allocation2]
            $region62: #{tpu_custom_call.1} parent=58 // loop_header_branch
              %267 = sbr.rel (%p265) target = $region66
            $region63: #{tpu_custom_call.1} parent=58 // loop_body
              %v271 = vld [vmem:[%s269] sm:$0xff]
              %272 = vst [vmem:[%s270] sm:$0xff] %v271
              %v273 = vld [vmem:[%s269 + $0x8] sm:$0xff]
              %274 = vst [vmem:[%s270 + $0x8] sm:$0xff] %v273
              %v275 = vld [vmem:[%s269 + $0x18] sm:$0xff]
              %276 = vst [vmem:[%s270 + $0x18] sm:$0xff] %v275
              %v277 = vld [vmem:[%s269 + $0x20] sm:$0xff]
              %278 = vst [vmem:[%s270 + $0x20] sm:$0xff] %v277
              %v279 = vld [vmem:[%s269 + $0x30] sm:$0xff]
              %280 = vst [vmem:[%s270 + $0x30] sm:$0xff] %v279
              %v281 = vld [vmem:[%s269 + $0x38] sm:$0xff]
              %282 = vst [vmem:[%s270 + $0x38] sm:$0xff] %v281
              %v283 = vld [vmem:[%s269 + $0x48] sm:$0xff]
              %284 = vst [vmem:[%s270 + $0x48] sm:$0xff] %v283
              %v285 = vld [vmem:[%s269 + $0x50] sm:$0xff]
              %286 = vst [vmem:[%s270 + $0x50] sm:$0xff] %v285
              %v287 = vld [vmem:[%s269 + $0x60] sm:$0xff]
              %288 = vst [vmem:[%s270 + $0x60] sm:$0xff] %v287
              %v289 = vld [vmem:[%s269 + $0x68] sm:$0xff]
              %290 = vst [vmem:[%s270 + $0x68] sm:$0xff] %v289
              %v291 = vld [vmem:[%s269 + $0x78] sm:$0xff]
              %292 = vst [vmem:[%s270 + $0x78] sm:$0xff] %v291
              %v293 = vld [vmem:[%s269 + $0x80] sm:$0xff]
              %294 = vst [vmem:[%s270 + $0x80] sm:$0xff] %v293
              %v295 = vld [vmem:[%s269 + $0x90] sm:$0xff]
              %296 = vst [vmem:[%s270 + $0x90] sm:$0xff] %v295
              %v297 = vld [vmem:[%s269 + $0x98] sm:$0xff]
              %298 = vst [vmem:[%s270 + $0x98] sm:$0xff] %v297
              %v299 = vld [vmem:[%s269 + $0xa8] sm:$0xff]
              %300 = vst [vmem:[%s270 + $0xa8] sm:$0xff] %v299
              %v301 = vld [vmem:[%s269 + $0xb0] sm:$0xff]
              %302 = vst [vmem:[%s270 + $0xb0] sm:$0xff] %v301
              %v303 = vld [vmem:[%s269 + $0xc0] sm:$0xff]
              %304 = vst [vmem:[%s270 + $0xc0] sm:$0xff] %v303
              %v305 = vld [vmem:[%s269 + $0xc8] sm:$0xff]
              %306 = vst [vmem:[%s270 + $0xc8] sm:$0xff] %v305
              %v307 = vld [vmem:[%s269 + $0xd8] sm:$0xff]
              %308 = vst [vmem:[%s270 + $0xd8] sm:$0xff] %v307
              %v309 = vld [vmem:[%s269 + $0xe0] sm:$0xff]
              %310 = vst [vmem:[%s270 + $0xe0] sm:$0xff] %v309
              %v311 = vld [vmem:[%s269 + $0xf0] sm:$0xff]
              %312 = vst [vmem:[%s270 + $0xf0] sm:$0xff] %v311
              %v313 = vld [vmem:[%s269 + $0xf8] sm:$0xff]
              %314 = vst [vmem:[%s270 + $0xf8] sm:$0xff] %v313
              %v315 = vld [vmem:[%s269 + $0x108] sm:$0xff]
              %316 = vst [vmem:[%s270 + $0x108] sm:$0xff] %v315
              %v317 = vld [vmem:[%s269 + $0x110] sm:$0xff]
              %318 = vst [vmem:[%s270 + $0x110] sm:$0xff] %v317
            $region64: #{tpu_custom_call.1} parent=58 // loop_footer
              %s268 = sadd.s32 1, %s264
            $region65: #{tpu_custom_call.1} parent=58 // loop_footer_branch
              %263 = sbr.rel target = $region61
            $region66: #{tpu_custom_call.1} parent=58 // loop_exit
              _
            %s319 = sshllo.u32 0, %s258
            loop: start=0, step=1, limit=1
            $region67: #{tpu_custom_call.1} parent=58 // loop_pre_header
              _
            $region68: #{tpu_custom_call.1} parent=58 // loop_header
              %s321 = sphi 0, %s325
              %p322 = scmp.ge.s32.totalorder %s321, 1
              %s326 = sphi %s260, %s260
              %s327 = sphi %s262, %s262
            $region69: #{tpu_custom_call.1} parent=58 // loop_header_branch
              %324 = sbr.rel (%p322) target = $region73
            $region70: #{tpu_custom_call.1} parent=58 // loop_body
              %v328 = vld [vmem:[%s326] sm:%s319]
              %329 = vst [vmem:[%s327] sm:%s319] %v328
              %v330 = vld [vmem:[%s326 + $0x18] sm:%s319]
              %331 = vst [vmem:[%s327 + $0x18] sm:%s319] %v330
              %v332 = vld [vmem:[%s326 + $0x30] sm:%s319]
              %333 = vst [vmem:[%s327 + $0x30] sm:%s319] %v332
              %v334 = vld [vmem:[%s326 + $0x48] sm:%s319]
              %335 = vst [vmem:[%s327 + $0x48] sm:%s319] %v334
              %v336 = vld [vmem:[%s326 + $0x60] sm:%s319]
              %337 = vst [vmem:[%s327 + $0x60] sm:%s319] %v336
              %v338 = vld [vmem:[%s326 + $0x78] sm:%s319]
              %339 = vst [vmem:[%s327 + $0x78] sm:%s319] %v338
              %v340 = vld [vmem:[%s326 + $0x90] sm:%s319]
              %341 = vst [vmem:[%s327 + $0x90] sm:%s319] %v340
              %v342 = vld [vmem:[%s326 + $0xa8] sm:%s319]
              %343 = vst [vmem:[%s327 + $0xa8] sm:%s319] %v342
              %v344 = vld [vmem:[%s326 + $0xc0] sm:%s319]
              %345 = vst [vmem:[%s327 + $0xc0] sm:%s319] %v344
              %v346 = vld [vmem:[%s326 + $0xd8] sm:%s319]
              %347 = vst [vmem:[%s327 + $0xd8] sm:%s319] %v346
              %v348 = vld [vmem:[%s326 + $0xf0] sm:%s319]
              %349 = vst [vmem:[%s327 + $0xf0] sm:%s319] %v348
              %v350 = vld [vmem:[%s326 + $0x108] sm:%s319]
              %351 = vst [vmem:[%s327 + $0x108] sm:%s319] %v350
            $region71: #{tpu_custom_call.1} parent=58 // loop_footer
              %s325 = sadd.s32 1, %s321
            $region72: #{tpu_custom_call.1} parent=58 // loop_footer_branch
              %320 = sbr.rel target = $region68
            $region73: #{tpu_custom_call.1} parent=58 // loop_exit
              _
          $region59: #{tpu_custom_call.1} parent=43 // pred_fallthru
            _
        $region44: #{tpu_custom_call.1} parent=35 // pred_fallthru
          _
        // Predicated region
        $region45: #{tpu_custom_call.1} parent=35 // pred_check
          %p217 = pneg %p213
        $region46: #{tpu_custom_call.1} parent=35 // pred_check_branch
          %219 = sbr.rel (%p217) target = $region48
        $region47: #{tpu_custom_call.1} parent=35 // pred_region
          %s220 = sshllo.u32 0, 18
          loop: start=0, step=1, limit=1
          $region49: #{tpu_custom_call.1} parent=47 // loop_pre_header
            _
          $region50: #{tpu_custom_call.1} parent=47 // loop_header
            %s222 = sphi 0, %s226
            %p223 = scmp.ge.s32.totalorder %s222, 1
            %s227 = sphi %s211, %s211
            %s228 = sphi [#allocation2], [#allocation2]
          $region51: #{tpu_custom_call.1} parent=47 // loop_header_branch
            %225 = sbr.rel (%p223) target = $region55
          $region52: #{tpu_custom_call.1} parent=47 // loop_body
            %v229 = vld [vmem:[%s227] sm:%s220]
            %230 = vst [vmem:[%s228] sm:%s220] %v229
            %v231 = vld [vmem:[%s227 + $0x18] sm:%s220]
            %232 = vst [vmem:[%s228 + $0x18] sm:%s220] %v231
            %v233 = vld [vmem:[%s227 + $0x30] sm:%s220]
            %234 = vst [vmem:[%s228 + $0x30] sm:%s220] %v233
            %v235 = vld [vmem:[%s227 + $0x48] sm:%s220]
            %236 = vst [vmem:[%s228 + $0x48] sm:%s220] %v235
            %v237 = vld [vmem:[%s227 + $0x60] sm:%s220]
            %238 = vst [vmem:[%s228 + $0x60] sm:%s220] %v237
            %v239 = vld [vmem:[%s227 + $0x78] sm:%s220]
            %240 = vst [vmem:[%s228 + $0x78] sm:%s220] %v239
            %v241 = vld [vmem:[%s227 + $0x90] sm:%s220]
            %242 = vst [vmem:[%s228 + $0x90] sm:%s220] %v241
            %v243 = vld [vmem:[%s227 + $0xa8] sm:%s220]
            %244 = vst [vmem:[%s228 + $0xa8] sm:%s220] %v243
            %v245 = vld [vmem:[%s227 + $0xc0] sm:%s220]
            %246 = vst [vmem:[%s228 + $0xc0] sm:%s220] %v245
            %v247 = vld [vmem:[%s227 + $0xd8] sm:%s220]
            %248 = vst [vmem:[%s228 + $0xd8] sm:%s220] %v247
            %v249 = vld [vmem:[%s227 + $0xf0] sm:%s220]
            %250 = vst [vmem:[%s228 + $0xf0] sm:%s220] %v249
            %v251 = vld [vmem:[%s227 + $0x108] sm:%s220]
            %252 = vst [vmem:[%s228 + $0x108] sm:%s220] %v251
          $region53: #{tpu_custom_call.1} parent=47 // loop_footer
            %s226 = sadd.s32 1, %s222
          $region54: #{tpu_custom_call.1} parent=47 // loop_footer_branch
            %221 = sbr.rel target = $region50
          $region55: #{tpu_custom_call.1} parent=47 // loop_exit
            _
        $region48: #{tpu_custom_call.1} parent=35 // pred_fallthru
          _
        // Predicated region
        $region74: #{tpu_custom_call.1} parent=35 // pred_check
          _
        $region75: #{tpu_custom_call.1} parent=35 // pred_check_branch
          %354 = sbr.rel (0) target = $region77
        $region76: #{tpu_custom_call.1} parent=35 // pred_region
          %355 = vsyncadd [#allocation4], 3456
        $region77: #{tpu_custom_call.1} parent=35 // pred_fallthru
          _
        %s356 = smul.u32 12, 18
        %s357 = smul.u32 %s356, 1
        %s358 = sshll.u32 %s357, 4
        %359 = dma.done [#allocation4], %s358
        %v360 = vld [vmem:[#allocation2] sm:$0xff]
        %v361 = vld [vmem:[#allocation2 + $0x8] sm:$0xff]
        %v362 = vld [vmem:[#allocation2 + $0x18] sm:$0xff]
        %v363 = vld [vmem:[#allocation2 + $0x20] sm:$0xff]
        %v364 = vld [vmem:[#allocation2 + $0x30] sm:$0xff]
        %v365 = vld [vmem:[#allocation2 + $0x38] sm:$0xff]
        %v366 = vld [vmem:[#allocation2 + $0x48] sm:$0xff]
        %v367 = vld [vmem:[#allocation2 + $0x50] sm:$0xff]
        %v368 = vld [vmem:[#allocation2 + $0x60] sm:$0xff]
        %v369 = vld [vmem:[#allocation2 + $0x68] sm:$0xff]
        %v370 = vld [vmem:[#allocation2 + $0x78] sm:$0xff]
        %v371 = vld [vmem:[#allocation2 + $0x80] sm:$0xff]
        %v372 = vld [vmem:[#allocation2 + $0x90] sm:$0xff]
        %v373 = vld [vmem:[#allocation2 + $0x98] sm:$0xff]
        %v374 = vld [vmem:[#allocation2 + $0xa8] sm:$0xff]
        %v375 = vld [vmem:[#allocation2 + $0xb0] sm:$0xff]
        %v376 = vld [vmem:[#allocation2 + $0xc0] sm:$0xff]
        %v377 = vld [vmem:[#allocation2 + $0xc8] sm:$0xff]
        %v378 = vld [vmem:[#allocation2 + $0xd8] sm:$0xff]
        %v379 = vld [vmem:[#allocation2 + $0xe0] sm:$0xff]
        %v380 = vld [vmem:[#allocation2 + $0x1] sm:$0xff]
        %v381 = vld [vmem:[#allocation2 + $0x9] sm:$0xff]
        %v382 = vld [vmem:[#allocation2 + $0x19] sm:$0xff]
        %v383 = vld [vmem:[#allocation2 + $0x21] sm:$0xff]
        %v384 = vld [vmem:[#allocation2 + $0x31] sm:$0xff]
        %v385 = vld [vmem:[#allocation2 + $0x39] sm:$0xff]
        %v386 = vld [vmem:[#allocation2 + $0x49] sm:$0xff]
        %v387 = vld [vmem:[#allocation2 + $0x51] sm:$0xff]
        %v388 = vld [vmem:[#allocation2 + $0x61] sm:$0xff]
        %v389 = vld [vmem:[#allocation2 + $0x69] sm:$0xff]
        %v390 = vld [vmem:[#allocation2 + $0x79] sm:$0xff]
        %v391 = vld [vmem:[#allocation2 + $0x81] sm:$0xff]
        %v392 = vld [vmem:[#allocation2 + $0x91] sm:$0xff]
        %v393 = vld [vmem:[#allocation2 + $0x99] sm:$0xff]
        %v394 = vld [vmem:[#allocation2 + $0xa9] sm:$0xff]
        %v395 = vld [vmem:[#allocation2 + $0xb1] sm:$0xff]
        %v396 = vld [vmem:[#allocation2 + $0xc1] sm:$0xff]
        %v397 = vld [vmem:[#allocation2 + $0xc9] sm:$0xff]
        %v398 = vld [vmem:[#allocation2 + $0xd9] sm:$0xff]
        %v399 = vld [vmem:[#allocation2 + $0xe1] sm:$0xff]
        %v400 = vld [vmem:[#allocation2 + $0x2] sm:$0xff]
        %v401 = vld [vmem:[#allocation2 + $0xa] sm:$0xff]
        %v402 = vld [vmem:[#allocation2 + $0x1a] sm:$0xff]
        %v403 = vld [vmem:[#allocation2 + $0x22] sm:$0xff]
        %v404 = vld [vmem:[#allocation2 + $0x32] sm:$0xff]
        %v405 = vld [vmem:[#allocation2 + $0x3a] sm:$0xff]
        %v406 = vld [vmem:[#allocation2 + $0x4a] sm:$0xff]
        %v407 = vld [vmem:[#allocation2 + $0x52] sm:$0xff]
        %v408 = vld [vmem:[#allocation2 + $0x62] sm:$0xff]
        %v409 = vld [vmem:[#allocation2 + $0x6a] sm:$0xff]
        %v410 = vld [vmem:[#allocation2 + $0x7a] sm:$0xff]
        %v411 = vld [vmem:[#allocation2 + $0x82] sm:$0xff]
        %v412 = vld [vmem:[#allocation2 + $0x92] sm:$0xff]
        %v413 = vld [vmem:[#allocation2 + $0x9a] sm:$0xff]
        %v414 = vld [vmem:[#allocation2 + $0xaa] sm:$0xff]
        %v415 = vld [vmem:[#allocation2 + $0xb2] sm:$0xff]
        %v416 = vld [vmem:[#allocation2 + $0xc2] sm:$0xff]
        %v417 = vld [vmem:[#allocation2 + $0xca] sm:$0xff]
        %v418 = vld [vmem:[#allocation2 + $0xda] sm:$0xff]
        %v419 = vld [vmem:[#allocation2 + $0xe2] sm:$0xff]
        %s420 = scalar_lea.vmem [#allocation2], 24
        %v421 = vld [vmem:[%s420] sm:$0xff]
        %v422 = vld [vmem:[%s420 + $0x8] sm:$0xff]
        %v423 = vld [vmem:[%s420 + $0x18] sm:$0xff]
        %v424 = vld [vmem:[%s420 + $0x20] sm:$0xff]
        %v425 = vld [vmem:[%s420 + $0x30] sm:$0xff]
        %v426 = vld [vmem:[%s420 + $0x38] sm:$0xff]
        %v427 = vld [vmem:[%s420 + $0x48] sm:$0xff]
        %v428 = vld [vmem:[%s420 + $0x50] sm:$0xff]
        %v429 = vld [vmem:[%s420 + $0x60] sm:$0xff]
        %v430 = vld [vmem:[%s420 + $0x68] sm:$0xff]
        %v431 = vld [vmem:[%s420 + $0x78] sm:$0xff]
        %v432 = vld [vmem:[%s420 + $0x80] sm:$0xff]
        %v433 = vld [vmem:[%s420 + $0x90] sm:$0xff]
        %v434 = vld [vmem:[%s420 + $0x98] sm:$0xff]
        %v435 = vld [vmem:[%s420 + $0xa8] sm:$0xff]
        %v436 = vld [vmem:[%s420 + $0xb0] sm:$0xff]
        %v437 = vld [vmem:[%s420 + $0xc0] sm:$0xff]
        %v438 = vld [vmem:[%s420 + $0xc8] sm:$0xff]
        %v439 = vld [vmem:[%s420 + $0xd8] sm:$0xff]
        %v440 = vld [vmem:[%s420 + $0xe0] sm:$0xff]
        %v441 = vld [vmem:[%s420 + $0x1] sm:$0xff]
        %v442 = vld [vmem:[%s420 + $0x9] sm:$0xff]
        %v443 = vld [vmem:[%s420 + $0x19] sm:$0xff]
        %v444 = vld [vmem:[%s420 + $0x21] sm:$0xff]
        %v445 = vld [vmem:[%s420 + $0x31] sm:$0xff]
        %v446 = vld [vmem:[%s420 + $0x39] sm:$0xff]
        %v447 = vld [vmem:[%s420 + $0x49] sm:$0xff]
        %v448 = vld [vmem:[%s420 + $0x51] sm:$0xff]
        %v449 = vld [vmem:[%s420 + $0x61] sm:$0xff]
        %v450 = vld [vmem:[%s420 + $0x69] sm:$0xff]
        %v451 = vld [vmem:[%s420 + $0x79] sm:$0xff]
        %v452 = vld [vmem:[%s420 + $0x81] sm:$0xff]
        %v453 = vld [vmem:[%s420 + $0x91] sm:$0xff]
        %v454 = vld [vmem:[%s420 + $0x99] sm:$0xff]
        %v455 = vld [vmem:[%s420 + $0xa9] sm:$0xff]
        %v456 = vld [vmem:[%s420 + $0xb1] sm:$0xff]
        %v457 = vld [vmem:[%s420 + $0xc1] sm:$0xff]
        %v458 = vld [vmem:[%s420 + $0xc9] sm:$0xff]
        %v459 = vld [vmem:[%s420 + $0xd9] sm:$0xff]
        %v460 = vld [vmem:[%s420 + $0xe1] sm:$0xff]
        %v461 = vld [vmem:[%s420 + $0x2] sm:$0xff]
        %v462 = vld [vmem:[%s420 + $0xa] sm:$0xff]
        %v463 = vld [vmem:[%s420 + $0x1a] sm:$0xff]
        %v464 = vld [vmem:[%s420 + $0x22] sm:$0xff]
        %v465 = vld [vmem:[%s420 + $0x32] sm:$0xff]
        %v466 = vld [vmem:[%s420 + $0x3a] sm:$0xff]
        %v467 = vld [vmem:[%s420 + $0x4a] sm:$0xff]
        %v468 = vld [vmem:[%s420 + $0x52] sm:$0xff]
        %v469 = vld [vmem:[%s420 + $0x62] sm:$0xff]
        %v470 = vld [vmem:[%s420 + $0x6a] sm:$0xff]
        %v471 = vld [vmem:[%s420 + $0x7a] sm:$0xff]
        %v472 = vld [vmem:[%s420 + $0x82] sm:$0xff]
        %v473 = vld [vmem:[%s420 + $0x92] sm:$0xff]
        %v474 = vld [vmem:[%s420 + $0x9a] sm:$0xff]
        %v475 = vld [vmem:[%s420 + $0xaa] sm:$0xff]
        %v476 = vld [vmem:[%s420 + $0xb2] sm:$0xff]
        %v477 = vld [vmem:[%s420 + $0xc2] sm:$0xff]
        %v478 = vld [vmem:[%s420 + $0xca] sm:$0xff]
        %v479 = vld [vmem:[%s420 + $0xda] sm:$0xff]
        %v480 = vld [vmem:[%s420 + $0xe2] sm:$0xff]
        %s481 = scalar_lea.vmem [#allocation2], 48
        %v482 = vld [vmem:[%s481] sm:$0xff]
        %v483 = vld [vmem:[%s481 + $0x8] sm:$0xff]
        %v484 = vld [vmem:[%s481 + $0x18] sm:$0xff]
        %v485 = vld [vmem:[%s481 + $0x20] sm:$0xff]
        %v486 = vld [vmem:[%s481 + $0x30] sm:$0xff]
        %v487 = vld [vmem:[%s481 + $0x38] sm:$0xff]
        %v488 = vld [vmem:[%s481 + $0x48] sm:$0xff]
        %v489 = vld [vmem:[%s481 + $0x50] sm:$0xff]
        %v490 = vld [vmem:[%s481 + $0x60] sm:$0xff]
        %v491 = vld [vmem:[%s481 + $0x68] sm:$0xff]
        %v492 = vld [vmem:[%s481 + $0x78] sm:$0xff]
        %v493 = vld [vmem:[%s481 + $0x80] sm:$0xff]
        %v494 = vld [vmem:[%s481 + $0x90] sm:$0xff]
        %v495 = vld [vmem:[%s481 + $0x98] sm:$0xff]
        %v496 = vld [vmem:[%s481 + $0xa8] sm:$0xff]
        %v497 = vld [vmem:[%s481 + $0xb0] sm:$0xff]
        %v498 = vld [vmem:[%s481 + $0xc0] sm:$0xff]
        %v499 = vld [vmem:[%s481 + $0xc8] sm:$0xff]
        %v500 = vld [vmem:[%s481 + $0xd8] sm:$0xff]
        %v501 = vld [vmem:[%s481 + $0xe0] sm:$0xff]
        %v502 = vld [vmem:[%s481 + $0x1] sm:$0xff]
        %v503 = vld [vmem:[%s481 + $0x9] sm:$0xff]
        %v504 = vld [vmem:[%s481 + $0x19] sm:$0xff]
        %v505 = vld [vmem:[%s481 + $0x21] sm:$0xff]
        %v506 = vld [vmem:[%s481 + $0x31] sm:$0xff]
        %v507 = vld [vmem:[%s481 + $0x39] sm:$0xff]
        %v508 = vld [vmem:[%s481 + $0x49] sm:$0xff]
        %v509 = vld [vmem:[%s481 + $0x51] sm:$0xff]
        %v510 = vld [vmem:[%s481 + $0x61] sm:$0xff]
        %v511 = vld [vmem:[%s481 + $0x69] sm:$0xff]
        %v512 = vld [vmem:[%s481 + $0x79] sm:$0xff]
        %v513 = vld [vmem:[%s481 + $0x81] sm:$0xff]
        %v514 = vld [vmem:[%s481 + $0x91] sm:$0xff]
        %v515 = vld [vmem:[%s481 + $0x99] sm:$0xff]
        %v516 = vld [vmem:[%s481 + $0xa9] sm:$0xff]
        %v517 = vld [vmem:[%s481 + $0xb1] sm:$0xff]
        %v518 = vld [vmem:[%s481 + $0xc1] sm:$0xff]
        %v519 = vld [vmem:[%s481 + $0xc9] sm:$0xff]
        %v520 = vld [vmem:[%s481 + $0xd9] sm:$0xff]
        %v521 = vld [vmem:[%s481 + $0xe1] sm:$0xff]
        %v522 = vld [vmem:[%s481 + $0x2] sm:$0xff]
        %v523 = vld [vmem:[%s481 + $0xa] sm:$0xff]
        %v524 = vld [vmem:[%s481 + $0x1a] sm:$0xff]
        %v525 = vld [vmem:[%s481 + $0x22] sm:$0xff]
        %v526 = vld [vmem:[%s481 + $0x32] sm:$0xff]
        %v527 = vld [vmem:[%s481 + $0x3a] sm:$0xff]
        %v528 = vld [vmem:[%s481 + $0x4a] sm:$0xff]
        %v529 = vld [vmem:[%s481 + $0x52] sm:$0xff]
        %v530 = vld [vmem:[%s481 + $0x62] sm:$0xff]
        %v531 = vld [vmem:[%s481 + $0x6a] sm:$0xff]
        %v532 = vld [vmem:[%s481 + $0x7a] sm:$0xff]
        %v533 = vld [vmem:[%s481 + $0x82] sm:$0xff]
        %v534 = vld [vmem:[%s481 + $0x92] sm:$0xff]
        %v535 = vld [vmem:[%s481 + $0x9a] sm:$0xff]
        %v536 = vld [vmem:[%s481 + $0xaa] sm:$0xff]
        %v537 = vld [vmem:[%s481 + $0xb2] sm:$0xff]
        %v538 = vld [vmem:[%s481 + $0xc2] sm:$0xff]
        %v539 = vld [vmem:[%s481 + $0xca] sm:$0xff]
        %v540 = vld [vmem:[%s481 + $0xda] sm:$0xff]
        %v541 = vld [vmem:[%s481 + $0xe2] sm:$0xff]
        %v542 = vld [vmem:[%s1] sm:$0xff]
        %v543 = vld [vmem:[%s1 + $0x8] sm:$0xff]
        %v544 = vld [vmem:[%s1 + $0x10] sm:$0xff]
        %v545 = vld [vmem:[%s1 + $0x18] sm:$0xff]
        %v546 = vld [vmem:[%s1 + $0x20] sm:$0xff]
        %v547 = vld [vmem:[%s1 + $0x28] sm:$0xff]
        %v548 = vld [vmem:[%s1 + $0x30] sm:$0xff]
        %v549 = vld [vmem:[%s1 + $0x38] sm:$0xff]
        %v550 = vld [vmem:[%s1 + $0x40] sm:$0xff]
        %v551 = vld [vmem:[%s1 + $0x48] sm:$0xff]
        %v552 = vld [vmem:[%s1 + $0x50] sm:$0xff]
        %v553 = vld [vmem:[%s1 + $0x58] sm:$0xff]
        %v554 = vld [vmem:[%s1 + $0x60] sm:$0xff]
        %v555 = vld [vmem:[%s1 + $0x68] sm:$0xff]
        %v556 = vld [vmem:[%s1 + $0x70] sm:$0xff]
        %v557 = vld [vmem:[%s1 + $0x78] sm:$0xff]
        %v558 = vld [vmem:[%s1 + $0x80] sm:$0xff]
        %v559 = vld [vmem:[%s1 + $0x88] sm:$0xff]
        %v560 = vld [vmem:[%s1 + $0x90] sm:$0xff]
        %v561 = vld [vmem:[%s1 + $0x98] sm:$0xff]
        %v562 = vld [vmem:[%s1 + $0xa0] sm:$0xff]
        %v563 = vld [vmem:[%s1 + $0xa8] sm:$0xff]
        %v564 = vld [vmem:[%s1 + $0xb0] sm:$0xff]
        %v565 = vld [vmem:[%s1 + $0xb8] sm:$0xff]
        %v566 = vld [vmem:[%s1 + $0xc0] sm:$0xff]
        %v567 = vld [vmem:[%s1 + $0xc8] sm:$0xff]
        %v568 = vld [vmem:[%s1 + $0xd0] sm:$0xff]
        %v569 = vld [vmem:[%s1 + $0xd8] sm:$0xff]
        %v570 = vld [vmem:[%s1 + $0xe0] sm:$0xff]
        %v571 = vld [vmem:[%s1 + $0xe8] sm:$0xff]
        %v572 = vld [vmem:[%s1 + $0xf0] sm:$0xff]
        %v573 = vld [vmem:[%s1 + $0xf8] sm:$0xff]
        %v574 = vld [vmem:[%s1 + $0x100] sm:$0xff]
        %v575 = vld [vmem:[%s1 + $0x108] sm:$0xff]
        %v576 = vld [vmem:[%s1 + $0x110] sm:$0xff]
        %v577 = vld [vmem:[%s1 + $0x118] sm:$0xff]
        %v578 = vld [vmem:[%s1 + $0x120] sm:$0xff]
        %v579 = vld [vmem:[%s1 + $0x128] sm:$0xff]
        %v580 = vld [vmem:[%s1 + $0x130] sm:$0xff]
        %v581 = vld [vmem:[%s1 + $0x138] sm:$0xff]
        %v582 = vld [vmem:[%s1 + $0x140] sm:$0xff]
        %v583 = vld [vmem:[%s1 + $0x148] sm:$0xff]
        %v584 = vld [vmem:[%s1 + $0x150] sm:$0xff]
        %v585 = vld [vmem:[%s1 + $0x158] sm:$0xff]
        %v586 = vld [vmem:[%s1 + $0x160] sm:$0xff]
        %v587 = vld [vmem:[%s1 + $0x168] sm:$0xff]
        %v588 = vld [vmem:[%s1 + $0x170] sm:$0xff]
        %v589 = vld [vmem:[%s1 + $0x178] sm:$0xff]
        %v590 = vld [vmem:[%s1 + $0x180] sm:$0xff]
        %v591 = vld [vmem:[%s1 + $0x188] sm:$0xff]
        %v592 = vld [vmem:[%s1 + $0x190] sm:$0xff]
        %v593 = vld [vmem:[%s1 + $0x198] sm:$0xff]
        %v594 = vld [vmem:[%s1 + $0x1a0] sm:$0xff]
        %v595 = vld [vmem:[%s1 + $0x1a8] sm:$0xff]
        %v596 = vld [vmem:[%s1 + $0x1b0] sm:$0xff]
        %v597 = vld [vmem:[%s1 + $0x1b8] sm:$0xff]
        %v598 = vld [vmem:[%s1 + $0x1c0] sm:$0xff]
        %v599 = vld [vmem:[%s1 + $0x1c8] sm:$0xff]
        %v600 = vld [vmem:[%s1 + $0x1d0] sm:$0xff]
        %v601 = vld [vmem:[%s1 + $0x1d8] sm:$0xff]
        %v602 = vld [vmem:[%s1 + $0x1e0] sm:$0xff]
        %v603 = vld [vmem:[%s1 + $0x1e8] sm:$0xff]
        %v604 = vld [vmem:[%s1 + $0x1f0] sm:$0xff]
        %v605 = vld [vmem:[%s1 + $0x1f8] sm:$0xff]
        %v606 = vld [vmem:[%s1 + $0x200] sm:$0xff]
        %v607 = vld [vmem:[%s1 + $0x208] sm:$0xff]
        %v608 = vld [vmem:[%s1 + $0x210] sm:$0xff]
        %v609 = vld [vmem:[%s1 + $0x218] sm:$0xff]
        %v610 = vld [vmem:[%s1 + $0x220] sm:$0xff]
        %v611 = vld [vmem:[%s1 + $0x228] sm:$0xff]
        %v612 = vld [vmem:[%s1 + $0x230] sm:$0xff]
        %v613 = vld [vmem:[%s1 + $0x238] sm:$0xff]
        %v614 = vld [vmem:[%s1 + $0x240] sm:$0xff]
        %v615 = vld [vmem:[%s1 + $0x248] sm:$0xff]
        %v616 = vld [vmem:[%s1 + $0x250] sm:$0xff]
        %v617 = vld [vmem:[%s1 + $0x258] sm:$0xff]
        %v618 = vld [vmem:[%s1 + $0x260] sm:$0xff]
        %v619 = vld [vmem:[%s1 + $0x268] sm:$0xff]
        %v620 = vld [vmem:[%s1 + $0x270] sm:$0xff]
        %v621 = vld [vmem:[%s1 + $0x278] sm:$0xff]
        %v622 = vld [vmem:[%s1 + $0x280] sm:$0xff]
        %v623 = vld [vmem:[%s1 + $0x288] sm:$0xff]
        %v624 = vld [vmem:[%s1 + $0x290] sm:$0xff]
        %v625 = vld [vmem:[%s1 + $0x298] sm:$0xff]
        %v626 = vld [vmem:[%s1 + $0x2a0] sm:$0xff]
        %v627 = vld [vmem:[%s1 + $0x2a8] sm:$0xff]
        %v628 = vld [vmem:[%s1 + $0x2b0] sm:$0xff]
        %v629 = vld [vmem:[%s1 + $0x2b8] sm:$0xff]
        %v630 = vld [vmem:[%s1 + $0x2c0] sm:$0xff]
        %v631 = vld [vmem:[%s1 + $0x2c8] sm:$0xff]
        %v632 = vld [vmem:[%s1 + $0x2d0] sm:$0xff]
        %v633 = vld [vmem:[%s1 + $0x2d8] sm:$0xff]
        %v634 = vld [vmem:[%s1 + $0x2e0] sm:$0xff]
        %v635 = vld [vmem:[%s1 + $0x2e8] sm:$0xff]
        %v636 = vld [vmem:[%s1 + $0x2f0] sm:$0xff]
        %v637 = vld [vmem:[%s1 + $0x2f8] sm:$0xff]
        %v638 = vld [vmem:[%s1 + $0x300] sm:$0xff]
        %v639 = vld [vmem:[%s1 + $0x308] sm:$0xff]
        %v640 = vld [vmem:[%s1 + $0x310] sm:$0xff]
        %v641 = vld [vmem:[%s1 + $0x318] sm:$0xff]
        %v642 = vld [vmem:[%s1 + $0x320] sm:$0xff]
        %v643 = vld [vmem:[%s1 + $0x328] sm:$0xff]
        %v644 = vld [vmem:[%s1 + $0x330] sm:$0xff]
        %v645 = vld [vmem:[%s1 + $0x338] sm:$0xff]
        %v646 = vld [vmem:[%s1 + $0x340] sm:$0xff]
        %v647 = vld [vmem:[%s1 + $0x348] sm:$0xff]
        %v648 = vld [vmem:[%s1 + $0x350] sm:$0xff]
        %v649 = vld [vmem:[%s1 + $0x358] sm:$0xff]
        %v650 = vld [vmem:[%s1 + $0x360] sm:$0xff]
        %v651 = vld [vmem:[%s1 + $0x368] sm:$0xff]
        %v652 = vld [vmem:[%s1 + $0x370] sm:$0xff]
        %v653 = vld [vmem:[%s1 + $0x378] sm:$0xff]
        %v654 = vld [vmem:[%s1 + $0x380] sm:$0xff]
        %v655 = vld [vmem:[%s1 + $0x388] sm:$0xff]
        %v656 = vld [vmem:[%s1 + $0x390] sm:$0xff]
        %v657 = vld [vmem:[%s1 + $0x398] sm:$0xff]
        %v658 = vld [vmem:[%s1 + $0x3a0] sm:$0xff]
        %v659 = vld [vmem:[%s1 + $0x3a8] sm:$0xff]
        %v660 = vld [vmem:[%s1 + $0x3b0] sm:$0xff]
        %v661 = vld [vmem:[%s1 + $0x3b8] sm:$0xff]
        %v662 = vld [vmem:[%s1 + $0x3c0] sm:$0xff]
        %v663 = vld [vmem:[%s1 + $0x3c8] sm:$0xff]
        %v664 = vld [vmem:[%s1 + $0x3d0] sm:$0xff]
        %v665 = vld [vmem:[%s1 + $0x3d8] sm:$0xff]
        %v666 = vld [vmem:[%s1 + $0x3e0] sm:$0xff]
        %v667 = vld [vmem:[%s1 + $0x3e8] sm:$0xff]
        %v668 = vld [vmem:[%s1 + $0x3f0] sm:$0xff]
        %v669 = vld [vmem:[%s1 + $0x3f8] sm:$0xff]
        %v670 = vld [vmem:[%s1 + $0x400] sm:$0xff]
        %v671 = vld [vmem:[%s1 + $0x408] sm:$0xff]
        %v672 = vld [vmem:[%s1 + $0x410] sm:$0xff]
        %v673 = vld [vmem:[%s1 + $0x418] sm:$0xff]
        %v674 = vld [vmem:[%s1 + $0x420] sm:$0xff]
        %v675 = vld [vmem:[%s1 + $0x428] sm:$0xff]
        %v676 = vld [vmem:[%s1 + $0x430] sm:$0xff]
        %v677 = vld [vmem:[%s1 + $0x438] sm:$0xff]
        %v678 = vld [vmem:[%s1 + $0x440] sm:$0xff]
        %v679 = vld [vmem:[%s1 + $0x448] sm:$0xff]
        %v680 = vld [vmem:[%s1 + $0x450] sm:$0xff]
        %v681 = vld [vmem:[%s1 + $0x458] sm:$0xff]
        %v682 = vld [vmem:[%s1 + $0x460] sm:$0xff]
        %v683 = vld [vmem:[%s1 + $0x468] sm:$0xff]
        %v684 = vld [vmem:[%s1 + $0x470] sm:$0xff]
        %v685 = vld [vmem:[%s1 + $0x478] sm:$0xff]
        %v686 = vld [vmem:[%s2] sm:$0x1]
        %v688 = vlaneseq
        %v689 = vshrl.u32 %v688, 7
        %v690 = vsub.s32 0, %v689
        %v691 = vrot.slane %v686, %v690
        %693 = vmatprep.subr.mxu0 0.0
        %694 = vmatpush1.msra.mxu0 %v542
        %695 = vmatprep.subr.mxu0 0.0
        %696 = vmatpush1.msra.mxu0 %v543
        %697 = vmatprep.subr.mxu0 0.0
        %698 = vmatpush1.msra.mxu0 %v544
        %699 = vmatprep.subr.mxu0 0.0
        %700 = vmatpush1.msra.mxu0 %v545
        %701 = vmatprep.subr.mxu0 0.0
        %702 = vmatpush1.msra.mxu0 %v546
        %703 = vmatprep.subr.mxu0 0.0
        %704 = vmatpush1.msra.mxu0 %v547
        %705 = vmatprep.subr.mxu0 0.0
        %706 = vmatpush1.msra.mxu0 %v548
        %707 = vmatprep.subr.mxu0 0.0
        %708 = vmatpush1.msra.mxu0 %v549
        %709 = vmatprep.subr.mxu0 0.0
        %710 = vmatpush1.msra.mxu0 %v550
        %711 = vmatprep.subr.mxu0 0.0
        %712 = vmatpush1.msra.mxu0 %v551
        %713 = vmatprep.subr.mxu0 0.0
        %714 = vmatpush1.msra.mxu0 %v552
        %715 = vmatprep.subr.mxu0 0.0
        %716 = vmatpush1.msra.mxu0 %v553
        %717 = vmatprep.subr.mxu0 0.0
        %718 = vmatpush1.msra.mxu0 %v554
        %719 = vmatprep.subr.mxu0 0.0
        %720 = vmatpush1.msra.mxu0 %v555
        %721 = vmatprep.subr.mxu0 0.0
        %722 = vmatpush1.msra.mxu0 %v556
        %723 = vmatprep.subr.mxu0 0.0
        %724 = vmatpush1.msra.mxu0 %v557
        %725 = vmatprep.subr.mxu0 0.0
        %726 = vmatpush1.msra.mxu0 %v558
        %727 = vmatprep.subr.mxu0 0.0
        %728 = vmatpush1.msra.mxu0 %v559
        %729 = vmatprep.subr.mxu0 0.0
        %730 = vmatpush1.msra.mxu0 %v560
        %731 = vmatprep.subr.mxu0 0.0
        %732 = vmatpush1.msra.mxu0 %v561
        %733 = vmatprep.subr.mxu0 0.0
        %734 = vmatpush1.msra.mxu0 %v562
        %735 = vmatprep.subr.mxu0 0.0
        %736 = vmatpush1.msra.mxu0 %v563
        %737 = vmatprep.subr.mxu0 0.0
        %738 = vmatpush1.msra.mxu0 %v564
        %739 = vmatprep.subr.mxu0 0.0
        %740 = vmatpush1.msra.mxu0 %v565
        %741 = vmatprep.subr.mxu0 0.0
        %742 = vmatpush1.msra.mxu0 %v566
        %743 = vmatprep.subr.mxu0 0.0
        %744 = vmatpush1.msra.mxu0 %v567
        %745 = vmatprep.subr.mxu0 0.0
        %746 = vmatpush1.msra.mxu0 %v568
        %747 = vmatprep.subr.mxu0 0.0
        %748 = vmatpush1.msra.mxu0 %v569
        %749 = vmatprep.subr.mxu0 0.0
        %750 = vmatpush1.msra.mxu0 %v570
        %751 = vmatprep.subr.mxu0 0.0
        %752 = vmatpush1.msra.mxu0 %v571
        %753 = vmatprep.subr.mxu0 0.0
        %754 = vmatpush1.msra.mxu0 %v572
        %755 = vmatprep.subr.mxu0 0.0
        %756 = vmatpush1.msra.mxu0 %v573
        %757 = vmatprep.mubr.f32.mxu0 %v380
        %758 = vmatmul.mubr.f32.gmra.mrb[0].mxu0 %v360
        %v759 = vpop.f32.mrb[0].mxu0
        %v760 = vadd.f32 %v691, %v759
        %v761 = vpop.f32.mrb[0].mxu0
        %762 = vmatprep.mubr.f32.mxu0 %v381
        %763 = vmatmul.mubr.f32.gmra.mrb[0].mxu0 %v361
        %v764 = vpop.f32.mrb[0].mxu0
        %v765 = vadd.f32 %v691, %v764
        %v766 = vpop.f32.mrb[0].mxu0
        %767 = vmatprep.mubr.f32.mxu0 %v382
        %768 = vmatmul.mubr.f32.gmra.mrb[0].mxu0 %v362
        %v769 = vpop.f32.mrb[0].mxu0
        %v770 = vadd.f32 %v691, %v769
        %v771 = vpop.f32.mrb[0].mxu0
        %772 = vmatprep.mubr.f32.mxu0 %v383
        %773 = vmatmul.mubr.f32.gmra.mrb[0].mxu0 %v363
        %v774 = vpop.f32.mrb[0].mxu0
        %v775 = vadd.f32 %v691, %v774
        %v776 = vpop.f32.mrb[0].mxu0
        %777 = vmatprep.mubr.f32.mxu0 %v384
        %778 = vmatmul.mubr.f32.gmra.mrb[0].mxu0 %v364
        %v779 = vpop.f32.mrb[0].mxu0
        %v780 = vadd.f32 %v691, %v779
        %v781 = vpop.f32.mrb[0].mxu0
        %782 = vmatprep.mubr.f32.mxu0 %v385
        %783 = vmatmul.mubr.f32.gmra.mrb[0].mxu0 %v365
        %v784 = vpop.f32.mrb[0].mxu0
        %v785 = vadd.f32 %v691, %v784
        %v786 = vpop.f32.mrb[0].mxu0
        %787 = vmatprep.mubr.f32.mxu0 %v386
        %788 = vmatmul.mubr.f32.gmra.mrb[0].mxu0 %v366
        %v789 = vpop.f32.mrb[0].mxu0
        %v790 = vadd.f32 %v691, %v789
        %v791 = vpop.f32.mrb[0].mxu0
        %792 = vmatprep.mubr.f32.mxu0 %v387
        %793 = vmatmul.mubr.f32.gmra.mrb[0].mxu0 %v367
        %v794 = vpop.f32.mrb[0].mxu0
        %v795 = vadd.f32 %v691, %v794
        %v796 = vpop.f32.mrb[0].mxu0
        %797 = vmatprep.mubr.f32.mxu0 %v388
        %798 = vmatmul.mubr.f32.gmra.mrb[0].mxu0 %v368
        %v799 = vpop.f32.mrb[0].mxu0
        %v800 = vadd.f32 %v691, %v799
        %v801 = vpop.f32.mrb[0].mxu0
        %802 = vmatprep.mubr.f32.mxu0 %v389
        %803 = vmatmul.mubr.f32.gmra.mrb[0].mxu0 %v369
        %v804 = vpop.f32.mrb[0].mxu0
        %v805 = vadd.f32 %v691, %v804
        %v806 = vpop.f32.mrb[0].mxu0
        %807 = vmatprep.mubr.f32.mxu0 %v390
        %808 = vmatmul.mubr.f32.gmra.mrb[0].mxu0 %v370
        %v809 = vpop.f32.mrb[0].mxu0
        %v810 = vadd.f32 %v691, %v809
        %v811 = vpop.f32.mrb[0].mxu0
        %812 = vmatprep.mubr.f32.mxu0 %v391
        %813 = vmatmul.mubr.f32.gmra.mrb[0].mxu0 %v371
        %v814 = vpop.f32.mrb[0].mxu0
        %v815 = vadd.f32 %v691, %v814
        %v816 = vpop.f32.mrb[0].mxu0
        %817 = vmatprep.mubr.f32.mxu0 %v392
        %818 = vmatmul.mubr.f32.gmra.mrb[0].mxu0 %v372
        %v819 = vpop.f32.mrb[0].mxu0
        %v820 = vadd.f32 %v691, %v819
        %v821 = vpop.f32.mrb[0].mxu0
        %822 = vmatprep.mubr.f32.mxu0 %v393
        %823 = vmatmul.mubr.f32.gmra.mrb[0].mxu0 %v373
        %v824 = vpop.f32.mrb[0].mxu0
        %v825 = vadd.f32 %v691, %v824
        %v826 = vpop.f32.mrb[0].mxu0
        %827 = vmatprep.mubr.f32.mxu0 %v394
        %828 = vmatmul.mubr.f32.gmra.mrb[0].mxu0 %v374
        %v829 = vpop.f32.mrb[0].mxu0
        %v830 = vadd.f32 %v691, %v829
        %v831 = vpop.f32.mrb[0].mxu0
        %832 = vmatprep.mubr.f32.mxu0 %v395
        %833 = vmatmul.mubr.f32.gmra.mrb[0].mxu0 %v375
        %v834 = vpop.f32.mrb[0].mxu0
        %v835 = vadd.f32 %v691, %v834
        %v836 = vpop.f32.mrb[0].mxu0
        %837 = vmatprep.mubr.f32.mxu0 %v396
        %838 = vmatmul.mubr.f32.gmra.mrb[0].mxu0 %v376
        %v839 = vpop.f32.mrb[0].mxu0
        %v840 = vadd.f32 %v691, %v839
        %v841 = vpop.f32.mrb[0].mxu0
        %842 = vmatprep.mubr.f32.mxu0 %v397
        %843 = vmatmul.mubr.f32.gmra.mrb[0].mxu0 %v377
        %v844 = vpop.f32.mrb[0].mxu0
        %v845 = vadd.f32 %v691, %v844
        %v846 = vpop.f32.mrb[0].mxu0
        %847 = vmatprep.mubr.f32.mxu0 %v398
        %848 = vmatmul.mubr.f32.gmra.mrb[0].mxu0 %v378
        %v849 = vpop.f32.mrb[0].mxu0
        %v850 = vadd.f32 %v691, %v849
        %v851 = vpop.f32.mrb[0].mxu0
        %852 = vmatprep.mubr.f32.mxu0 %v399
        %853 = vmatmul.mubr.f32.gmra.mrb[0].mxu0 %v379
        %v854 = vpop.f32.mrb[0].mxu0
        %v855 = vadd.f32 %v691, %v854
        %v856 = vpop.f32.mrb[0].mxu0
        %857 = vdwg.mxu0
        %858 = vmatprep.subr.mxu0 0.0
        %859 = vmatpush1.msra.mxu0 %v574
        %860 = vmatprep.subr.mxu0 0.0
        %861 = vmatpush1.msra.mxu0 %v575
        %862 = vmatprep.subr.mxu0 0.0
        %863 = vmatpush1.msra.mxu0 %v576
        %864 = vmatprep.subr.mxu0 0.0
        %865 = vmatpush1.msra.mxu0 %v577
        %866 = vmatprep.subr.mxu0 0.0
        %867 = vmatpush1.msra.mxu0 %v578
        %868 = vmatprep.subr.mxu0 0.0
        %869 = vmatpush1.msra.mxu0 %v579
        %870 = vmatprep.subr.mxu0 0.0
        %871 = vmatpush1.msra.mxu0 %v580
        %872 = vmatprep.subr.mxu0 0.0
        %873 = vmatpush1.msra.mxu0 %v581
        %874 = vmatprep.subr.mxu0 0.0
        %875 = vmatpush1.msra.mxu0 %v582
        %876 = vmatprep.subr.mxu0 0.0
        %877 = vmatpush1.msra.mxu0 %v583
        %878 = vmatprep.subr.mxu0 0.0
        %879 = vmatpush1.msra.mxu0 %v584
        %880 = vmatprep.subr.mxu0 0.0
        %881 = vmatpush1.msra.mxu0 %v585
        %882 = vmatprep.subr.mxu0 0.0
        %883 = vmatpush1.msra.mxu0 %v586
        %884 = vmatprep.subr.mxu0 0.0
        %885 = vmatpush1.msra.mxu0 %v587
        %886 = vmatprep.subr.mxu0 0.0
        %887 = vmatpush1.msra.mxu0 %v588
        %888 = vmatprep.subr.mxu0 0.0
        %889 = vmatpush1.msra.mxu0 %v589
        %890 = vmatprep.subr.mxu0 0.0
        %891 = vmatpush1.msra.mxu0 %v590
        %892 = vmatprep.subr.mxu0 0.0
        %893 = vmatpush1.msra.mxu0 %v591
        %894 = vmatprep.subr.mxu0 0.0
        %895 = vmatpush1.msra.mxu0 %v592
        %896 = vmatprep.subr.mxu0 0.0
        %897 = vmatpush1.msra.mxu0 %v593
        %898 = vmatprep.subr.mxu0 0.0
        %899 = vmatpush1.msra.mxu0 %v594
        %900 = vmatprep.subr.mxu0 0.0
        %901 = vmatpush1.msra.mxu0 %v595
        %902 = vmatprep.subr.mxu0 0.0
        %903 = vmatpush1.msra.mxu0 %v596
        %904 = vmatprep.subr.mxu0 0.0
        %905 = vmatpush1.msra.mxu0 %v597
        %906 = vmatprep.subr.mxu0 0.0
        %907 = vmatpush1.msra.mxu0 %v598
        %908 = vmatprep.subr.mxu0 0.0
        %909 = vmatpush1.msra.mxu0 %v599
        %910 = vmatprep.subr.mxu0 0.0
        %911 = vmatpush1.msra.mxu0 %v600
        %912 = vmatprep.subr.mxu0 0.0
        %913 = vmatpush1.msra.mxu0 %v601
        %914 = vmatprep.subr.mxu0 0.0
        %915 = vmatpush1.msra.mxu0 %v602
        %916 = vmatprep.subr.mxu0 0.0
        %917 = vmatpush1.msra.mxu0 %v603
        %918 = vmatprep.subr.mxu0 0.0
        %919 = vmatpush1.msra.mxu0 %v604
        %920 = vmatprep.subr.mxu0 0.0
        %921 = vmatpush1.msra.mxu0 %v605
        %922 = vmatprep.mubr.f32.mxu0 %v421
        %923 = vmatmul.mubr.f32.gmra.mrb[0].mxu0 %v400
        %v924 = vpop.f32.mrb[0].mxu0
        %v925 = vadd.f32 %v760, %v924
        %v926 = vpop.f32.mrb[0].mxu0
        %927 = vmatprep.mubr.f32.mxu0 %v422
        %928 = vmatmul.mubr.f32.gmra.mrb[0].mxu0 %v401
        %v929 = vpop.f32.mrb[0].mxu0
        %v930 = vadd.f32 %v765, %v929
        %v931 = vpop.f32.mrb[0].mxu0
        %932 = vmatprep.mubr.f32.mxu0 %v423
        %933 = vmatmul.mubr.f32.gmra.mrb[0].mxu0 %v402
        %v934 = vpop.f32.mrb[0].mxu0
        %v935 = vadd.f32 %v770, %v934
        %v936 = vpop.f32.mrb[0].mxu0
        %937 = vmatprep.mubr.f32.mxu0 %v424
        %938 = vmatmul.mubr.f32.gmra.mrb[0].mxu0 %v403
        %v939 = vpop.f32.mrb[0].mxu0
        %v940 = vadd.f32 %v775, %v939
        %v941 = vpop.f32.mrb[0].mxu0
        %942 = vmatprep.mubr.f32.mxu0 %v425
        %943 = vmatmul.mubr.f32.gmra.mrb[0].mxu0 %v404
        %v944 = vpop.f32.mrb[0].mxu0
        %v945 = vadd.f32 %v780, %v944
        %v946 = vpop.f32.mrb[0].mxu0
        %947 = vmatprep.mubr.f32.mxu0 %v426
        %948 = vmatmul.mubr.f32.gmra.mrb[0].mxu0 %v405
        %v949 = vpop.f32.mrb[0].mxu0
        %v950 = vadd.f32 %v785, %v949
        %v951 = vpop.f32.mrb[0].mxu0
        %952 = vmatprep.mubr.f32.mxu0 %v427
        %953 = vmatmul.mubr.f32.gmra.mrb[0].mxu0 %v406
        %v954 = vpop.f32.mrb[0].mxu0
        %v955 = vadd.f32 %v790, %v954
        %v956 = vpop.f32.mrb[0].mxu0
        %957 = vmatprep.mubr.f32.mxu0 %v428
        %958 = vmatmul.mubr.f32.gmra.mrb[0].mxu0 %v407
        %v959 = vpop.f32.mrb[0].mxu0
        %v960 = vadd.f32 %v795, %v959
        %v961 = vpop.f32.mrb[0].mxu0
        %962 = vmatprep.mubr.f32.mxu0 %v429
        %963 = vmatmul.mubr.f32.gmra.mrb[0].mxu0 %v408
        %v964 = vpop.f32.mrb[0].mxu0
        %v965 = vadd.f32 %v800, %v964
        %v966 = vpop.f32.mrb[0].mxu0
        %967 = vmatprep.mubr.f32.mxu0 %v430
        %968 = vmatmul.mubr.f32.gmra.mrb[0].mxu0 %v409
        %v969 = vpop.f32.mrb[0].mxu0
        %v970 = vadd.f32 %v805, %v969
        %v971 = vpop.f32.mrb[0].mxu0
        %972 = vmatprep.mubr.f32.mxu0 %v431
        %973 = vmatmul.mubr.f32.gmra.mrb[0].mxu0 %v410
        %v974 = vpop.f32.mrb[0].mxu0
        %v975 = vadd.f32 %v810, %v974
        %v976 = vpop.f32.mrb[0].mxu0
        %977 = vmatprep.mubr.f32.mxu0 %v432
        %978 = vmatmul.mubr.f32.gmra.mrb[0].mxu0 %v411
        %v979 = vpop.f32.mrb[0].mxu0
        %v980 = vadd.f32 %v815, %v979
        %v981 = vpop.f32.mrb[0].mxu0
        %982 = vmatprep.mubr.f32.mxu0 %v433
        %983 = vmatmul.mubr.f32.gmra.mrb[0].mxu0 %v412
        %v984 = vpop.f32.mrb[0].mxu0
        %v985 = vadd.f32 %v820, %v984
        %v986 = vpop.f32.mrb[0].mxu0
        %987 = vmatprep.mubr.f32.mxu0 %v434
        %988 = vmatmul.mubr.f32.gmra.mrb[0].mxu0 %v413
        %v989 = vpop.f32.mrb[0].mxu0
        %v990 = vadd.f32 %v825, %v989
        %v991 = vpop.f32.mrb[0].mxu0
        %992 = vmatprep.mubr.f32.mxu0 %v435
        %993 = vmatmul.mubr.f32.gmra.mrb[0].mxu0 %v414
        %v994 = vpop.f32.mrb[0].mxu0
        %v995 = vadd.f32 %v830, %v994
        %v996 = vpop.f32.mrb[0].mxu0
        %997 = vmatprep.mubr.f32.mxu0 %v436
        %998 = vmatmul.mubr.f32.gmra.mrb[0].mxu0 %v415
        %v999 = vpop.f32.mrb[0].mxu0
        %v1000 = vadd.f32 %v835, %v999
        %v1001 = vpop.f32.mrb[0].mxu0
        %1002 = vmatprep.mubr.f32.mxu0 %v437
        %1003 = vmatmul.mubr.f32.gmra.mrb[0].mxu0 %v416
        %v1004 = vpop.f32.mrb[0].mxu0
        %v1005 = vadd.f32 %v840, %v1004
        %v1006 = vpop.f32.mrb[0].mxu0
        %1007 = vmatprep.mubr.f32.mxu0 %v438
        %1008 = vmatmul.mubr.f32.gmra.mrb[0].mxu0 %v417
        %v1009 = vpop.f32.mrb[0].mxu0
        %v1010 = vadd.f32 %v845, %v1009
        %v1011 = vpop.f32.mrb[0].mxu0
        %1012 = vmatprep.mubr.f32.mxu0 %v439
        %1013 = vmatmul.mubr.f32.gmra.mrb[0].mxu0 %v418
        %v1014 = vpop.f32.mrb[0].mxu0
        %v1015 = vadd.f32 %v850, %v1014
        %v1016 = vpop.f32.mrb[0].mxu0
        %1017 = vmatprep.mubr.f32.mxu0 %v440
        %1018 = vmatmul.mubr.f32.gmra.mrb[0].mxu0 %v419
        %v1019 = vpop.f32.mrb[0].mxu0
        %v1020 = vadd.f32 %v855, %v1019
        %v1021 = vpop.f32.mrb[0].mxu0
        %1022 = vdwg.mxu0
        %1023 = vmatprep.subr.mxu0 0.0
        %1024 = vmatpush1.msra.mxu0 %v606
        %1025 = vmatprep.subr.mxu0 0.0
        %1026 = vmatpush1.msra.mxu0 %v607
        %1027 = vmatprep.subr.mxu0 0.0
        %1028 = vmatpush1.msra.mxu0 %v608
        %1029 = vmatprep.subr.mxu0 0.0
        %1030 = vmatpush1.msra.mxu0 %v609
        %1031 = vmatprep.subr.mxu0 0.0
        %1032 = vmatpush1.msra.mxu0 %v610
        %1033 = vmatprep.subr.mxu0 0.0
        %1034 = vmatpush1.msra.mxu0 %v611
        %1035 = vmatprep.subr.mxu0 0.0
        %1036 = vmatpush1.msra.mxu0 %v612
        %1037 = vmatprep.subr.mxu0 0.0
        %1038 = vmatpush1.msra.mxu0 %v613
        %1039 = vmatprep.subr.mxu0 0.0
        %1040 = vmatpush1.msra.mxu0 %v614
        %1041 = vmatprep.subr.mxu0 0.0
        %1042 = vmatpush1.msra.mxu0 %v615
        %1043 = vmatprep.subr.mxu0 0.0
        %1044 = vmatpush1.msra.mxu0 %v616
        %1045 = vmatprep.subr.mxu0 0.0
        %1046 = vmatpush1.msra.mxu0 %v617
        %1047 = vmatprep.subr.mxu0 0.0
        %1048 = vmatpush1.msra.mxu0 %v618
        %1049 = vmatprep.subr.mxu0 0.0
        %1050 = vmatpush1.msra.mxu0 %v619
        %1051 = vmatprep.subr.mxu0 0.0
        %1052 = vmatpush1.msra.mxu0 %v620
        %1053 = vmatprep.subr.mxu0 0.0
        %1054 = vmatpush1.msra.mxu0 %v621
        %1055 = vmatprep.subr.mxu0 0.0
        %1056 = vmatpush1.msra.mxu0 %v622
        %1057 = vmatprep.subr.mxu0 0.0
        %1058 = vmatpush1.msra.mxu0 %v623
        %1059 = vmatprep.subr.mxu0 0.0
        %1060 = vmatpush1.msra.mxu0 %v624
        %1061 = vmatprep.subr.mxu0 0.0
        %1062 = vmatpush1.msra.mxu0 %v625
        %1063 = vmatprep.subr.mxu0 0.0
        %1064 = vmatpush1.msra.mxu0 %v626
        %1065 = vmatprep.subr.mxu0 0.0
        %1066 = vmatpush1.msra.mxu0 %v627
        %1067 = vmatprep.subr.mxu0 0.0
        %1068 = vmatpush1.msra.mxu0 %v628
        %1069 = vmatprep.subr.mxu0 0.0
        %1070 = vmatpush1.msra.mxu0 %v629
        %1071 = vmatprep.subr.mxu0 0.0
        %1072 = vmatpush1.msra.mxu0 %v630
        %1073 = vmatprep.subr.mxu0 0.0
        %1074 = vmatpush1.msra.mxu0 %v631
        %1075 = vmatprep.subr.mxu0 0.0
        %1076 = vmatpush1.msra.mxu0 %v632
        %1077 = vmatprep.subr.mxu0 0.0
        %1078 = vmatpush1.msra.mxu0 %v633
        %1079 = vmatprep.subr.mxu0 0.0
        %1080 = vmatpush1.msra.mxu0 %v634
        %1081 = vmatprep.subr.mxu0 0.0
        %1082 = vmatpush1.msra.mxu0 %v635
        %1083 = vmatprep.subr.mxu0 0.0
        %1084 = vmatpush1.msra.mxu0 %v636
        %1085 = vmatprep.subr.mxu0 0.0
        %1086 = vmatpush1.msra.mxu0 %v637
        %1087 = vmatprep.mubr.f32.mxu0 %v461
        %1088 = vmatmul.mubr.f32.gmra.mrb[0].mxu0 %v441
        %v1089 = vpop.f32.mrb[0].mxu0
        %v1090 = vadd.f32 %v925, %v1089
        %v1091 = vpop.f32.mrb[0].mxu0
        %1092 = vmatprep.mubr.f32.mxu0 %v462
        %1093 = vmatmul.mubr.f32.gmra.mrb[0].mxu0 %v442
        %v1094 = vpop.f32.mrb[0].mxu0
        %v1095 = vadd.f32 %v930, %v1094
        %v1096 = vpop.f32.mrb[0].mxu0
        %1097 = vmatprep.mubr.f32.mxu0 %v463
        %1098 = vmatmul.mubr.f32.gmra.mrb[0].mxu0 %v443
        %v1099 = vpop.f32.mrb[0].mxu0
        %v1100 = vadd.f32 %v935, %v1099
        %v1101 = vpop.f32.mrb[0].mxu0
        %1102 = vmatprep.mubr.f32.mxu0 %v464
        %1103 = vmatmul.mubr.f32.gmra.mrb[0].mxu0 %v444
        %v1104 = vpop.f32.mrb[0].mxu0
        %v1105 = vadd.f32 %v940, %v1104
        %v1106 = vpop.f32.mrb[0].mxu0
        %1107 = vmatprep.mubr.f32.mxu0 %v465
        %1108 = vmatmul.mubr.f32.gmra.mrb[0].mxu0 %v445
        %v1109 = vpop.f32.mrb[0].mxu0
        %v1110 = vadd.f32 %v945, %v1109
        %v1111 = vpop.f32.mrb[0].mxu0
        %1112 = vmatprep.mubr.f32.mxu0 %v466
        %1113 = vmatmul.mubr.f32.gmra.mrb[0].mxu0 %v446
        %v1114 = vpop.f32.mrb[0].mxu0
        %v1115 = vadd.f32 %v950, %v1114
        %v1116 = vpop.f32.mrb[0].mxu0
        %1117 = vmatprep.mubr.f32.mxu0 %v467
        %1118 = vmatmul.mubr.f32.gmra.mrb[0].mxu0 %v447
        %v1119 = vpop.f32.mrb[0].mxu0
        %v1120 = vadd.f32 %v955, %v1119
        %v1121 = vpop.f32.mrb[0].mxu0
        %1122 = vmatprep.mubr.f32.mxu0 %v468
        %1123 = vmatmul.mubr.f32.gmra.mrb[0].mxu0 %v448
        %v1124 = vpop.f32.mrb[0].mxu0
        %v1125 = vadd.f32 %v960, %v1124
        %v1126 = vpop.f32.mrb[0].mxu0
        %1127 = vmatprep.mubr.f32.mxu0 %v469
        %1128 = vmatmul.mubr.f32.gmra.mrb[0].mxu0 %v449
        %v1129 = vpop.f32.mrb[0].mxu0
        %v1130 = vadd.f32 %v965, %v1129
        %v1131 = vpop.f32.mrb[0].mxu0
        %1132 = vmatprep.mubr.f32.mxu0 %v470
        %1133 = vmatmul.mubr.f32.gmra.mrb[0].mxu0 %v450
        %v1134 = vpop.f32.mrb[0].mxu0
        %v1135 = vadd.f32 %v970, %v1134
        %v1136 = vpop.f32.mrb[0].mxu0
        %1137 = vmatprep.mubr.f32.mxu0 %v471
        %1138 = vmatmul.mubr.f32.gmra.mrb[0].mxu0 %v451
        %v1139 = vpop.f32.mrb[0].mxu0
        %v1140 = vadd.f32 %v975, %v1139
        %v1141 = vpop.f32.mrb[0].mxu0
        %1142 = vmatprep.mubr.f32.mxu0 %v472
        %1143 = vmatmul.mubr.f32.gmra.mrb[0].mxu0 %v452
        %v1144 = vpop.f32.mrb[0].mxu0
        %v1145 = vadd.f32 %v980, %v1144
        %v1146 = vpop.f32.mrb[0].mxu0
        %1147 = vmatprep.mubr.f32.mxu0 %v473
        %1148 = vmatmul.mubr.f32.gmra.mrb[0].mxu0 %v453
        %v1149 = vpop.f32.mrb[0].mxu0
        %v1150 = vadd.f32 %v985, %v1149
        %v1151 = vpop.f32.mrb[0].mxu0
        %1152 = vmatprep.mubr.f32.mxu0 %v474
        %1153 = vmatmul.mubr.f32.gmra.mrb[0].mxu0 %v454
        %v1154 = vpop.f32.mrb[0].mxu0
        %v1155 = vadd.f32 %v990, %v1154
        %v1156 = vpop.f32.mrb[0].mxu0
        %1157 = vmatprep.mubr.f32.mxu0 %v475
        %1158 = vmatmul.mubr.f32.gmra.mrb[0].mxu0 %v455
        %v1159 = vpop.f32.mrb[0].mxu0
        %v1160 = vadd.f32 %v995, %v1159
        %v1161 = vpop.f32.mrb[0].mxu0
        %1162 = vmatprep.mubr.f32.mxu0 %v476
        %1163 = vmatmul.mubr.f32.gmra.mrb[0].mxu0 %v456
        %v1164 = vpop.f32.mrb[0].mxu0
        %v1165 = vadd.f32 %v1000, %v1164
        %v1166 = vpop.f32.mrb[0].mxu0
        %1167 = vmatprep.mubr.f32.mxu0 %v477
        %1168 = vmatmul.mubr.f32.gmra.mrb[0].mxu0 %v457
        %v1169 = vpop.f32.mrb[0].mxu0
        %v1170 = vadd.f32 %v1005, %v1169
        %v1171 = vpop.f32.mrb[0].mxu0
        %1172 = vmatprep.mubr.f32.mxu0 %v478
        %1173 = vmatmul.mubr.f32.gmra.mrb[0].mxu0 %v458
        %v1174 = vpop.f32.mrb[0].mxu0
        %v1175 = vadd.f32 %v1010, %v1174
        %v1176 = vpop.f32.mrb[0].mxu0
        %1177 = vmatprep.mubr.f32.mxu0 %v479
        %1178 = vmatmul.mubr.f32.gmra.mrb[0].mxu0 %v459
        %v1179 = vpop.f32.mrb[0].mxu0
        %v1180 = vadd.f32 %v1015, %v1179
        %v1181 = vpop.f32.mrb[0].mxu0
        %1182 = vmatprep.mubr.f32.mxu0 %v480
        %1183 = vmatmul.mubr.f32.gmra.mrb[0].mxu0 %v460
        %v1184 = vpop.f32.mrb[0].mxu0
        %v1185 = vadd.f32 %v1020, %v1184
        %v1186 = vpop.f32.mrb[0].mxu0
        %1187 = vdwg.mxu0
        %1188 = vmatprep.subr.mxu0 0.0
        %1189 = vmatpush1.msra.mxu0 %v638
        %1190 = vmatprep.subr.mxu0 0.0
        %1191 = vmatpush1.msra.mxu0 %v639
        %1192 = vmatprep.subr.mxu0 0.0
        %1193 = vmatpush1.msra.mxu0 %v640
        %1194 = vmatprep.subr.mxu0 0.0
        %1195 = vmatpush1.msra.mxu0 %v641
        %1196 = vmatprep.subr.mxu0 0.0
        %1197 = vmatpush1.msra.mxu0 %v642
        %1198 = vmatprep.subr.mxu0 0.0
        %1199 = vmatpush1.msra.mxu0 %v643
        %1200 = vmatprep.subr.mxu0 0.0
        %1201 = vmatpush1.msra.mxu0 %v644
        %1202 = vmatprep.subr.mxu0 0.0
        %1203 = vmatpush1.msra.mxu0 %v645
        %1204 = vmatprep.subr.mxu0 0.0
        %1205 = vmatpush1.msra.mxu0 %v646
        %1206 = vmatprep.subr.mxu0 0.0
        %1207 = vmatpush1.msra.mxu0 %v647
        %1208 = vmatprep.subr.mxu0 0.0
        %1209 = vmatpush1.msra.mxu0 %v648
        %1210 = vmatprep.subr.mxu0 0.0
        %1211 = vmatpush1.msra.mxu0 %v649
        %1212 = vmatprep.subr.mxu0 0.0
        %1213 = vmatpush1.msra.mxu0 %v650
        %1214 = vmatprep.subr.mxu0 0.0
        %1215 = vmatpush1.msra.mxu0 %v651
        %1216 = vmatprep.subr.mxu0 0.0
        %1217 = vmatpush1.msra.mxu0 %v652
        %1218 = vmatprep.subr.mxu0 0.0
        %1219 = vmatpush1.msra.mxu0 %v653
        %1220 = vmatprep.subr.mxu0 0.0
        %1221 = vmatpush1.msra.mxu0 %v654
        %1222 = vmatprep.subr.mxu0 0.0
        %1223 = vmatpush1.msra.mxu0 %v655
        %1224 = vmatprep.subr.mxu0 0.0
        %1225 = vmatpush1.msra.mxu0 %v656
        %1226 = vmatprep.subr.mxu0 0.0
        %1227 = vmatpush1.msra.mxu0 %v657
        %1228 = vmatprep.subr.mxu0 0.0
        %1229 = vmatpush1.msra.mxu0 %v658
        %1230 = vmatprep.subr.mxu0 0.0
        %1231 = vmatpush1.msra.mxu0 %v659
        %1232 = vmatprep.subr.mxu0 0.0
        %1233 = vmatpush1.msra.mxu0 %v660
        %1234 = vmatprep.subr.mxu0 0.0
        %1235 = vmatpush1.msra.mxu0 %v661
        %1236 = vmatprep.subr.mxu0 0.0
        %1237 = vmatpush1.msra.mxu0 %v662
        %1238 = vmatprep.subr.mxu0 0.0
        %1239 = vmatpush1.msra.mxu0 %v663
        %1240 = vmatprep.subr.mxu0 0.0
        %1241 = vmatpush1.msra.mxu0 %v664
        %1242 = vmatprep.subr.mxu0 0.0
        %1243 = vmatpush1.msra.mxu0 %v665
        %1244 = vmatprep.subr.mxu0 0.0
        %1245 = vmatpush1.msra.mxu0 %v666
        %1246 = vmatprep.subr.mxu0 0.0
        %1247 = vmatpush1.msra.mxu0 %v667
        %1248 = vmatprep.subr.mxu0 0.0
        %1249 = vmatpush1.msra.mxu0 %v668
        %1250 = vmatprep.subr.mxu0 0.0
        %1251 = vmatpush1.msra.mxu0 %v669
        %1252 = vmatprep.mubr.f32.mxu0 %v502
        %1253 = vmatmul.mubr.f32.gmra.mrb[0].mxu0 %v482
        %v1254 = vpop.f32.mrb[0].mxu0
        %v1255 = vadd.f32 %v1090, %v1254
        %v1256 = vpop.f32.mrb[0].mxu0
        %1257 = vmatprep.mubr.f32.mxu0 %v503
        %1258 = vmatmul.mubr.f32.gmra.mrb[0].mxu0 %v483
        %v1259 = vpop.f32.mrb[0].mxu0
        %v1260 = vadd.f32 %v1095, %v1259
        %v1261 = vpop.f32.mrb[0].mxu0
        %1262 = vmatprep.mubr.f32.mxu0 %v504
        %1263 = vmatmul.mubr.f32.gmra.mrb[0].mxu0 %v484
        %v1264 = vpop.f32.mrb[0].mxu0
        %v1265 = vadd.f32 %v1100, %v1264
        %v1266 = vpop.f32.mrb[0].mxu0
        %1267 = vmatprep.mubr.f32.mxu0 %v505
        %1268 = vmatmul.mubr.f32.gmra.mrb[0].mxu0 %v485
        %v1269 = vpop.f32.mrb[0].mxu0
        %v1270 = vadd.f32 %v1105, %v1269
        %v1271 = vpop.f32.mrb[0].mxu0
        %1272 = vmatprep.mubr.f32.mxu0 %v506
        %1273 = vmatmul.mubr.f32.gmra.mrb[0].mxu0 %v486
        %v1274 = vpop.f32.mrb[0].mxu0
        %v1275 = vadd.f32 %v1110, %v1274
        %v1276 = vpop.f32.mrb[0].mxu0
        %1277 = vmatprep.mubr.f32.mxu0 %v507
        %1278 = vmatmul.mubr.f32.gmra.mrb[0].mxu0 %v487
        %v1279 = vpop.f32.mrb[0].mxu0
        %v1280 = vadd.f32 %v1115, %v1279
        %v1281 = vpop.f32.mrb[0].mxu0
        %1282 = vmatprep.mubr.f32.mxu0 %v508
        %1283 = vmatmul.mubr.f32.gmra.mrb[0].mxu0 %v488
        %v1284 = vpop.f32.mrb[0].mxu0
        %v1285 = vadd.f32 %v1120, %v1284
        %v1286 = vpop.f32.mrb[0].mxu0
        %1287 = vmatprep.mubr.f32.mxu0 %v509
        %1288 = vmatmul.mubr.f32.gmra.mrb[0].mxu0 %v489
        %v1289 = vpop.f32.mrb[0].mxu0
        %v1290 = vadd.f32 %v1125, %v1289
        %v1291 = vpop.f32.mrb[0].mxu0
        %1292 = vmatprep.mubr.f32.mxu0 %v510
        %1293 = vmatmul.mubr.f32.gmra.mrb[0].mxu0 %v490
        %v1294 = vpop.f32.mrb[0].mxu0
        %v1295 = vadd.f32 %v1130, %v1294
        %v1296 = vpop.f32.mrb[0].mxu0
        %1297 = vmatprep.mubr.f32.mxu0 %v511
        %1298 = vmatmul.mubr.f32.gmra.mrb[0].mxu0 %v491
        %v1299 = vpop.f32.mrb[0].mxu0
        %v1300 = vadd.f32 %v1135, %v1299
        %v1301 = vpop.f32.mrb[0].mxu0
        %1302 = vmatprep.mubr.f32.mxu0 %v512
        %1303 = vmatmul.mubr.f32.gmra.mrb[0].mxu0 %v492
        %v1304 = vpop.f32.mrb[0].mxu0
        %v1305 = vadd.f32 %v1140, %v1304
        %v1306 = vpop.f32.mrb[0].mxu0
        %1307 = vmatprep.mubr.f32.mxu0 %v513
        %1308 = vmatmul.mubr.f32.gmra.mrb[0].mxu0 %v493
        %v1309 = vpop.f32.mrb[0].mxu0
        %v1310 = vadd.f32 %v1145, %v1309
        %v1311 = vpop.f32.mrb[0].mxu0
        %1312 = vmatprep.mubr.f32.mxu0 %v514
        %1313 = vmatmul.mubr.f32.gmra.mrb[0].mxu0 %v494
        %v1314 = vpop.f32.mrb[0].mxu0
        %v1315 = vadd.f32 %v1150, %v1314
        %v1316 = vpop.f32.mrb[0].mxu0
        %1317 = vmatprep.mubr.f32.mxu0 %v515
        %1318 = vmatmul.mubr.f32.gmra.mrb[0].mxu0 %v495
        %v1319 = vpop.f32.mrb[0].mxu0
        %v1320 = vadd.f32 %v1155, %v1319
        %v1321 = vpop.f32.mrb[0].mxu0
        %1322 = vmatprep.mubr.f32.mxu0 %v516
        %1323 = vmatmul.mubr.f32.gmra.mrb[0].mxu0 %v496
        %v1324 = vpop.f32.mrb[0].mxu0
        %v1325 = vadd.f32 %v1160, %v1324
        %v1326 = vpop.f32.mrb[0].mxu0
        %1327 = vmatprep.mubr.f32.mxu0 %v517
        %1328 = vmatmul.mubr.f32.gmra.mrb[0].mxu0 %v497
        %v1329 = vpop.f32.mrb[0].mxu0
        %v1330 = vadd.f32 %v1165, %v1329
        %v1331 = vpop.f32.mrb[0].mxu0
        %1332 = vmatprep.mubr.f32.mxu0 %v518
        %1333 = vmatmul.mubr.f32.gmra.mrb[0].mxu0 %v498
        %v1334 = vpop.f32.mrb[0].mxu0
        %v1335 = vadd.f32 %v1170, %v1334
        %v1336 = vpop.f32.mrb[0].mxu0
        %1337 = vmatprep.mubr.f32.mxu0 %v519
        %1338 = vmatmul.mubr.f32.gmra.mrb[0].mxu0 %v499
        %v1339 = vpop.f32.mrb[0].mxu0
        %v1340 = vadd.f32 %v1175, %v1339
        %v1341 = vpop.f32.mrb[0].mxu0
        %1342 = vmatprep.mubr.f32.mxu0 %v520
        %1343 = vmatmul.mubr.f32.gmra.mrb[0].mxu0 %v500
        %v1344 = vpop.f32.mrb[0].mxu0
        %v1345 = vadd.f32 %v1180, %v1344
        %v1346 = vpop.f32.mrb[0].mxu0
        %1347 = vmatprep.mubr.f32.mxu0 %v521
        %1348 = vmatmul.mubr.f32.gmra.mrb[0].mxu0 %v501
        %v1349 = vpop.f32.mrb[0].mxu0
        %v1350 = vadd.f32 %v1185, %v1349
        %v1351 = vpop.f32.mrb[0].mxu0
        %1352 = vdwg.mxu0
        %1353 = vmatprep.subr.mxu0 0.0
        %1354 = vmatpush1.msra.mxu0 %v670
        %1355 = vmatprep.subr.mxu0 0.0
        %1356 = vmatpush1.msra.mxu0 %v671
        %1357 = vmatprep.subr.mxu0 0.0
        %1358 = vmatpush1.msra.mxu0 %v672
        %1359 = vmatprep.subr.mxu0 0.0
        %1360 = vmatpush1.msra.mxu0 %v673
        %1361 = vmatprep.subr.mxu0 0.0
        %1362 = vmatpush1.msra.mxu0 %v674
        %1363 = vmatprep.subr.mxu0 0.0
        %1364 = vmatpush1.msra.mxu0 %v675
        %1365 = vmatprep.subr.mxu0 0.0
        %1366 = vmatpush1.msra.mxu0 %v676
        %1367 = vmatprep.subr.mxu0 0.0
        %1368 = vmatpush1.msra.mxu0 %v677
        %1369 = vmatprep.subr.mxu0 0.0
        %1370 = vmatpush1.msra.mxu0 %v678
        %1371 = vmatprep.subr.mxu0 0.0
        %1372 = vmatpush1.msra.mxu0 %v679
        %1373 = vmatprep.subr.mxu0 0.0
        %1374 = vmatpush1.msra.mxu0 %v680
        %1375 = vmatprep.subr.mxu0 0.0
        %1376 = vmatpush1.msra.mxu0 %v681
        %1377 = vmatprep.subr.mxu0 0.0
        %1378 = vmatpush1.msra.mxu0 %v682
        %1379 = vmatprep.subr.mxu0 0.0
        %1380 = vmatpush1.msra.mxu0 %v683
        %1381 = vmatprep.subr.mxu0 0.0
        %1382 = vmatpush1.msra.mxu0 %v684
        %1383 = vmatprep.subr.mxu0 0.0
        %1384 = vmatpush1.msra.mxu0 %v685
        %1385 = vmatprep.subr.mxu0 0.0
        %1386 = vmatpush1.msra.mxu0 0.0
        %1387 = vmatprep.subr.mxu0 0.0
        %1388 = vmatpush1.msra.mxu0 0.0
        %1389 = vmatprep.subr.mxu0 0.0
        %1390 = vmatpush1.msra.mxu0 0.0
        %1391 = vmatprep.subr.mxu0 0.0
        %1392 = vmatpush1.msra.mxu0 0.0
        %1393 = vmatprep.subr.mxu0 0.0
        %1394 = vmatpush1.msra.mxu0 0.0
        %1395 = vmatprep.subr.mxu0 0.0
        %1396 = vmatpush1.msra.mxu0 0.0
        %1397 = vmatprep.subr.mxu0 0.0
        %1398 = vmatpush1.msra.mxu0 0.0
        %1399 = vmatprep.subr.mxu0 0.0
        %1400 = vmatpush1.msra.mxu0 0.0
        %1401 = vmatprep.subr.mxu0 0.0
        %1402 = vmatpush1.msra.mxu0 0.0
        %1403 = vmatprep.subr.mxu0 0.0
        %1404 = vmatpush1.msra.mxu0 0.0
        %1405 = vmatprep.subr.mxu0 0.0
        %1406 = vmatpush1.msra.mxu0 0.0
        %1407 = vmatprep.subr.mxu0 0.0
        %1408 = vmatpush1.msra.mxu0 0.0
        %1409 = vmatprep.subr.mxu0 0.0
        %1410 = vmatpush1.msra.mxu0 0.0
        %1411 = vmatprep.subr.mxu0 0.0
        %1412 = vmatpush1.msra.mxu0 0.0
        %1413 = vmatprep.subr.mxu0 0.0
        %1414 = vmatpush1.msra.mxu0 0.0
        %1415 = vmatprep.subr.mxu0 0.0
        %1416 = vmatpush1.msra.mxu0 0.0
        %1417 = vmatprep.mubr.f32.mxu0 0.0
        %1418 = vmatmul.mubr.f32.gmra.mrb[0].mxu0 %v522
        %v1419 = vpop.f32.mrb[0].mxu0
        %v1420 = vadd.f32 %v1255, %v1419
        %v1421 = vpop.f32.mrb[0].mxu0
        %1422 = vmatprep.mubr.f32.mxu0 0.0
        %1423 = vmatmul.mubr.f32.gmra.mrb[0].mxu0 %v523
        %v1424 = vpop.f32.mrb[0].mxu0
        %v1425 = vadd.f32 %v1260, %v1424
        %v1426 = vpop.f32.mrb[0].mxu0
        %1427 = vmatprep.mubr.f32.mxu0 0.0
        %1428 = vmatmul.mubr.f32.gmra.mrb[0].mxu0 %v524
        %v1429 = vpop.f32.mrb[0].mxu0
        %v1430 = vadd.f32 %v1265, %v1429
        %v1431 = vpop.f32.mrb[0].mxu0
        %1432 = vmatprep.mubr.f32.mxu0 0.0
        %1433 = vmatmul.mubr.f32.gmra.mrb[0].mxu0 %v525
        %v1434 = vpop.f32.mrb[0].mxu0
        %v1435 = vadd.f32 %v1270, %v1434
        %v1436 = vpop.f32.mrb[0].mxu0
        %1437 = vmatprep.mubr.f32.mxu0 0.0
        %1438 = vmatmul.mubr.f32.gmra.mrb[0].mxu0 %v526
        %v1439 = vpop.f32.mrb[0].mxu0
        %v1440 = vadd.f32 %v1275, %v1439
        %v1441 = vpop.f32.mrb[0].mxu0
        %1442 = vmatprep.mubr.f32.mxu0 0.0
        %1443 = vmatmul.mubr.f32.gmra.mrb[0].mxu0 %v527
        %v1444 = vpop.f32.mrb[0].mxu0
        %v1445 = vadd.f32 %v1280, %v1444
        %v1446 = vpop.f32.mrb[0].mxu0
        %1447 = vmatprep.mubr.f32.mxu0 0.0
        %1448 = vmatmul.mubr.f32.gmra.mrb[0].mxu0 %v528
        %v1449 = vpop.f32.mrb[0].mxu0
        %v1450 = vadd.f32 %v1285, %v1449
        %v1451 = vpop.f32.mrb[0].mxu0
        %1452 = vmatprep.mubr.f32.mxu0 0.0
        %1453 = vmatmul.mubr.f32.gmra.mrb[0].mxu0 %v529
        %v1454 = vpop.f32.mrb[0].mxu0
        %v1455 = vadd.f32 %v1290, %v1454
        %v1456 = vpop.f32.mrb[0].mxu0
        %1457 = vmatprep.mubr.f32.mxu0 0.0
        %1458 = vmatmul.mubr.f32.gmra.mrb[0].mxu0 %v530
        %v1459 = vpop.f32.mrb[0].mxu0
        %v1460 = vadd.f32 %v1295, %v1459
        %v1461 = vpop.f32.mrb[0].mxu0
        %1462 = vmatprep.mubr.f32.mxu0 0.0
        %1463 = vmatmul.mubr.f32.gmra.mrb[0].mxu0 %v531
        %v1464 = vpop.f32.mrb[0].mxu0
        %v1465 = vadd.f32 %v1300, %v1464
        %v1466 = vpop.f32.mrb[0].mxu0
        %1467 = vmatprep.mubr.f32.mxu0 0.0
        %1468 = vmatmul.mubr.f32.gmra.mrb[0].mxu0 %v532
        %v1469 = vpop.f32.mrb[0].mxu0
        %v1470 = vadd.f32 %v1305, %v1469
        %v1471 = vpop.f32.mrb[0].mxu0
        %1472 = vmatprep.mubr.f32.mxu0 0.0
        %1473 = vmatmul.mubr.f32.gmra.mrb[0].mxu0 %v533
        %v1474 = vpop.f32.mrb[0].mxu0
        %v1475 = vadd.f32 %v1310, %v1474
        %v1476 = vpop.f32.mrb[0].mxu0
        %1477 = vmatprep.mubr.f32.mxu0 0.0
        %1478 = vmatmul.mubr.f32.gmra.mrb[0].mxu0 %v534
        %v1479 = vpop.f32.mrb[0].mxu0
        %v1480 = vadd.f32 %v1315, %v1479
        %v1481 = vpop.f32.mrb[0].mxu0
        %1482 = vmatprep.mubr.f32.mxu0 0.0
        %1483 = vmatmul.mubr.f32.gmra.mrb[0].mxu0 %v535
        %v1484 = vpop.f32.mrb[0].mxu0
        %v1485 = vadd.f32 %v1320, %v1484
        %v1486 = vpop.f32.mrb[0].mxu0
        %1487 = vmatprep.mubr.f32.mxu0 0.0
        %1488 = vmatmul.mubr.f32.gmra.mrb[0].mxu0 %v536
        %v1489 = vpop.f32.mrb[0].mxu0
        %v1490 = vadd.f32 %v1325, %v1489
        %v1491 = vpop.f32.mrb[0].mxu0
        %1492 = vmatprep.mubr.f32.mxu0 0.0
        %1493 = vmatmul.mubr.f32.gmra.mrb[0].mxu0 %v537
        %v1494 = vpop.f32.mrb[0].mxu0
        %v1495 = vadd.f32 %v1330, %v1494
        %v1496 = vpop.f32.mrb[0].mxu0
        %1497 = vmatprep.mubr.f32.mxu0 0.0
        %1498 = vmatmul.mubr.f32.gmra.mrb[0].mxu0 %v538
        %v1499 = vpop.f32.mrb[0].mxu0
        %v1500 = vadd.f32 %v1335, %v1499
        %v1501 = vpop.f32.mrb[0].mxu0
        %1502 = vmatprep.mubr.f32.mxu0 0.0
        %1503 = vmatmul.mubr.f32.gmra.mrb[0].mxu0 %v539
        %v1504 = vpop.f32.mrb[0].mxu0
        %v1505 = vadd.f32 %v1340, %v1504
        %v1506 = vpop.f32.mrb[0].mxu0
        %1507 = vmatprep.mubr.f32.mxu0 0.0
        %1508 = vmatmul.mubr.f32.gmra.mrb[0].mxu0 %v540
        %v1509 = vpop.f32.mrb[0].mxu0
        %v1510 = vadd.f32 %v1345, %v1509
        %v1511 = vpop.f32.mrb[0].mxu0
        %1512 = vmatprep.mubr.f32.mxu0 0.0
        %1513 = vmatmul.mubr.f32.gmra.mrb[0].mxu0 %v541
        %v1514 = vpop.f32.mrb[0].mxu0
        %v1515 = vadd.f32 %v1350, %v1514
        %v1516 = vpop.f32.mrb[0].mxu0
        %1517 = vdwg.mxu0
        %v1518 = vmax.f32 %v1420, 0.0
        %v1519 = vmax.f32 %v1425, 0.0
        %v1520 = vmax.f32 %v1430, 0.0
        %v1521 = vmax.f32 %v1435, 0.0
        %v1522 = vmax.f32 %v1440, 0.0
        %v1523 = vmax.f32 %v1445, 0.0
        %v1524 = vmax.f32 %v1450, 0.0
        %v1525 = vmax.f32 %v1455, 0.0
        %v1526 = vmax.f32 %v1460, 0.0
        %v1527 = vmax.f32 %v1465, 0.0
        %v1528 = vmax.f32 %v1470, 0.0
        %v1529 = vmax.f32 %v1475, 0.0
        %v1530 = vmax.f32 %v1480, 0.0
        %v1531 = vmax.f32 %v1485, 0.0
        %v1532 = vmax.f32 %v1490, 0.0
        %v1533 = vmax.f32 %v1495, 0.0
        %v1534 = vmax.f32 %v1500, 0.0
        %v1535 = vmax.f32 %v1505, 0.0
        %v1536 = vmax.f32 %v1510, 0.0
        %v1537 = vmax.f32 %v1515, 0.0
        %1538 = vst [vmem:[#allocation3] sm:$0x1] 0.0
        %1539 = vst [vmem:[#allocation3 + $0x18] sm:$0x1] 0.0
        %1540 = vst [vmem:[#allocation3 + $0x30] sm:$0x1] 0.0
        %1541 = vst [vmem:[#allocation3 + $0x48] sm:$0x1] 0.0
        %1542 = vst [vmem:[#allocation3 + $0x60] sm:$0x1] 0.0
        %1543 = vst [vmem:[#allocation3 + $0x78] sm:$0x1] 0.0
        %1544 = vst [vmem:[#allocation3 + $0x90] sm:$0x1] 0.0
        %1545 = vst [vmem:[#allocation3 + $0xa8] sm:$0x1] 0.0
        %1546 = vst [vmem:[#allocation3 + $0xc0] sm:$0x1] 0.0
        %1547 = vst [vmem:[#allocation3 + $0xd8] sm:$0x1] 0.0
        %1548 = vst [vmem:[#allocation3 + $0x11] sm:$0x1] 0.0
        %1549 = vst [vmem:[#allocation3 + $0x29] sm:$0x1] 0.0
        %1550 = vst [vmem:[#allocation3 + $0x41] sm:$0x1] 0.0
        %1551 = vst [vmem:[#allocation3 + $0x59] sm:$0x1] 0.0
        %1552 = vst [vmem:[#allocation3 + $0x71] sm:$0x1] 0.0
        %1553 = vst [vmem:[#allocation3 + $0x89] sm:$0x1] 0.0
        %1554 = vst [vmem:[#allocation3 + $0xa1] sm:$0x1] 0.0
        %1555 = vst [vmem:[#allocation3 + $0xb9] sm:$0x1] 0.0
        %1556 = vst [vmem:[#allocation3 + $0xd1] sm:$0x1] 0.0
        %1557 = vst [vmem:[#allocation3 + $0xe9] sm:$0x1] 0.0
        %1558 = vst [vmem:[#allocation3 + $0x1] sm:$0xff] %v1518
        %1559 = vst [vmem:[#allocation3 + $0x9] sm:$0xff] %v1519
        %1560 = vst [vmem:[#allocation3 + $0x19] sm:$0xff] %v1520
        %1561 = vst [vmem:[#allocation3 + $0x21] sm:$0xff] %v1521
        %1562 = vst [vmem:[#allocation3 + $0x31] sm:$0xff] %v1522
        %1563 = vst [vmem:[#allocation3 + $0x39] sm:$0xff] %v1523
        %1564 = vst [vmem:[#allocation3 + $0x49] sm:$0xff] %v1524
        %1565 = vst [vmem:[#allocation3 + $0x51] sm:$0xff] %v1525
        %1566 = vst [vmem:[#allocation3 + $0x61] sm:$0xff] %v1526
        %1567 = vst [vmem:[#allocation3 + $0x69] sm:$0xff] %v1527
        %1568 = vst [vmem:[#allocation3 + $0x79] sm:$0xff] %v1528
        %1569 = vst [vmem:[#allocation3 + $0x81] sm:$0xff] %v1529
        %1570 = vst [vmem:[#allocation3 + $0x91] sm:$0xff] %v1530
        %1571 = vst [vmem:[#allocation3 + $0x99] sm:$0xff] %v1531
        %1572 = vst [vmem:[#allocation3 + $0xa9] sm:$0xff] %v1532
        %1573 = vst [vmem:[#allocation3 + $0xb1] sm:$0xff] %v1533
        %1574 = vst [vmem:[#allocation3 + $0xc1] sm:$0xff] %v1534
        %1575 = vst [vmem:[#allocation3 + $0xc9] sm:$0xff] %v1535
        %1576 = vst [vmem:[#allocation3 + $0xd9] sm:$0xff] %v1536
        %1577 = vst [vmem:[#allocation3 + $0xe1] sm:$0xff] %v1537
        %p1578 = scmp.eq.s32.totalorder %s25, 0
        // Predicated region
        $region78: #{tpu_custom_call.1} parent=35 // pred_check
          %p1579 = pneg %p1578
        $region79: #{tpu_custom_call.1} parent=35 // pred_check_branch
          %1581 = sbr.rel (%p1579) target = $region81
        $region80: #{tpu_custom_call.1} parent=35 // pred_region
          %1582 = vst [vmem:[#allocation3 + $0x1] sm:$0xff] 0.0
          %1583 = vst [vmem:[#allocation3 + $0x9] sm:$0xff] 0.0
        $region81: #{tpu_custom_call.1} parent=35 // pred_fallthru
          _
        %p1584 = scmp.eq.s32.totalorder %s25, 1
        // Predicated region
        $region82: #{tpu_custom_call.1} parent=35 // pred_check
          %p1585 = pneg %p1584
        $region83: #{tpu_custom_call.1} parent=35 // pred_check_branch
          %1587 = sbr.rel (%p1585) target = $region85
        $region84: #{tpu_custom_call.1} parent=35 // pred_region
          %s1588 = scalar_lea.vmem [#allocation3], 216
          %1589 = vst [vmem:[%s1588 + $0x1] sm:$0xff] 0.0
          %1590 = vst [vmem:[%s1588 + $0x9] sm:$0xff] 0.0
        $region85: #{tpu_custom_call.1} parent=35 // pred_fallthru
          _
        %v1591 = vld [vmem:[#allocation3] sm:$0xff]
        %v1592 = vld [vmem:[#allocation3 + $0x8] sm:$0xff]
        %v1593 = vld [vmem:[#allocation3 + $0x18] sm:$0xff]
        %v1594 = vld [vmem:[#allocation3 + $0x20] sm:$0xff]
        %v1595 = vld [vmem:[#allocation3 + $0x30] sm:$0xff]
        %v1596 = vld [vmem:[#allocation3 + $0x38] sm:$0xff]
        %v1597 = vld [vmem:[#allocation3 + $0x48] sm:$0xff]
        %v1598 = vld [vmem:[#allocation3 + $0x50] sm:$0xff]
        %v1599 = vld [vmem:[#allocation3 + $0x60] sm:$0xff]
        %v1600 = vld [vmem:[#allocation3 + $0x68] sm:$0xff]
        %v1601 = vld [vmem:[#allocation3 + $0x78] sm:$0xff]
        %v1602 = vld [vmem:[#allocation3 + $0x80] sm:$0xff]
        %v1603 = vld [vmem:[#allocation3 + $0x90] sm:$0xff]
        %v1604 = vld [vmem:[#allocation3 + $0x98] sm:$0xff]
        %v1605 = vld [vmem:[#allocation3 + $0xa8] sm:$0xff]
        %v1606 = vld [vmem:[#allocation3 + $0xb0] sm:$0xff]
        %v1607 = vld [vmem:[#allocation3 + $0x1] sm:$0xff]
        %v1608 = vld [vmem:[#allocation3 + $0x9] sm:$0xff]
        %v1609 = vld [vmem:[#allocation3 + $0x19] sm:$0xff]
        %v1610 = vld [vmem:[#allocation3 + $0x21] sm:$0xff]
        %v1611 = vld [vmem:[#allocation3 + $0x31] sm:$0xff]
        %v1612 = vld [vmem:[#allocation3 + $0x39] sm:$0xff]
        %v1613 = vld [vmem:[#allocation3 + $0x49] sm:$0xff]
        %v1614 = vld [vmem:[#allocation3 + $0x51] sm:$0xff]
        %v1615 = vld [vmem:[#allocation3 + $0x61] sm:$0xff]
        %v1616 = vld [vmem:[#allocation3 + $0x69] sm:$0xff]
        %v1617 = vld [vmem:[#allocation3 + $0x79] sm:$0xff]
        %v1618 = vld [vmem:[#allocation3 + $0x81] sm:$0xff]
        %v1619 = vld [vmem:[#allocation3 + $0x91] sm:$0xff]
        %v1620 = vld [vmem:[#allocation3 + $0x99] sm:$0xff]
        %v1621 = vld [vmem:[#allocation3 + $0xa9] sm:$0xff]
        %v1622 = vld [vmem:[#allocation3 + $0xb1] sm:$0xff]
        %v1623 = vld [vmem:[#allocation3 + $0x2] sm:$0xff]
        %v1624 = vld [vmem:[#allocation3 + $0xa] sm:$0xff]
        %v1625 = vld [vmem:[#allocation3 + $0x1a] sm:$0xff]
        %v1626 = vld [vmem:[#allocation3 + $0x22] sm:$0xff]
        %v1627 = vld [vmem:[#allocation3 + $0x32] sm:$0xff]
        %v1628 = vld [vmem:[#allocation3 + $0x3a] sm:$0xff]
        %v1629 = vld [vmem:[#allocation3 + $0x4a] sm:$0xff]
        %v1630 = vld [vmem:[#allocation3 + $0x52] sm:$0xff]
        %v1631 = vld [vmem:[#allocation3 + $0x62] sm:$0xff]
        %v1632 = vld [vmem:[#allocation3 + $0x6a] sm:$0xff]
        %v1633 = vld [vmem:[#allocation3 + $0x7a] sm:$0xff]
        %v1634 = vld [vmem:[#allocation3 + $0x82] sm:$0xff]
        %v1635 = vld [vmem:[#allocation3 + $0x92] sm:$0xff]
        %v1636 = vld [vmem:[#allocation3 + $0x9a] sm:$0xff]
        %v1637 = vld [vmem:[#allocation3 + $0xaa] sm:$0xff]
        %v1638 = vld [vmem:[#allocation3 + $0xb2] sm:$0xff]
        %s1639 = scalar_lea.vmem [#allocation3], 24
        %v1640 = vld [vmem:[%s1639] sm:$0xff]
        %v1641 = vld [vmem:[%s1639 + $0x8] sm:$0xff]
        %v1642 = vld [vmem:[%s1639 + $0x18] sm:$0xff]
        %v1643 = vld [vmem:[%s1639 + $0x20] sm:$0xff]
        %v1644 = vld [vmem:[%s1639 + $0x30] sm:$0xff]
        %v1645 = vld [vmem:[%s1639 + $0x38] sm:$0xff]
        %v1646 = vld [vmem:[%s1639 + $0x48] sm:$0xff]
        %v1647 = vld [vmem:[%s1639 + $0x50] sm:$0xff]
        %v1648 = vld [vmem:[%s1639 + $0x60] sm:$0xff]
        %v1649 = vld [vmem:[%s1639 + $0x68] sm:$0xff]
        %v1650 = vld [vmem:[%s1639 + $0x78] sm:$0xff]
        %v1651 = vld [vmem:[%s1639 + $0x80] sm:$0xff]
        %v1652 = vld [vmem:[%s1639 + $0x90] sm:$0xff]
        %v1653 = vld [vmem:[%s1639 + $0x98] sm:$0xff]
        %v1654 = vld [vmem:[%s1639 + $0xa8] sm:$0xff]
        %v1655 = vld [vmem:[%s1639 + $0xb0] sm:$0xff]
        %v1656 = vld [vmem:[%s1639 + $0x1] sm:$0xff]
        %v1657 = vld [vmem:[%s1639 + $0x9] sm:$0xff]
        %v1658 = vld [vmem:[%s1639 + $0x19] sm:$0xff]
        %v1659 = vld [vmem:[%s1639 + $0x21] sm:$0xff]
        %v1660 = vld [vmem:[%s1639 + $0x31] sm:$0xff]
        %v1661 = vld [vmem:[%s1639 + $0x39] sm:$0xff]
        %v1662 = vld [vmem:[%s1639 + $0x49] sm:$0xff]
        %v1663 = vld [vmem:[%s1639 + $0x51] sm:$0xff]
        %v1664 = vld [vmem:[%s1639 + $0x61] sm:$0xff]
        %v1665 = vld [vmem:[%s1639 + $0x69] sm:$0xff]
        %v1666 = vld [vmem:[%s1639 + $0x79] sm:$0xff]
        %v1667 = vld [vmem:[%s1639 + $0x81] sm:$0xff]
        %v1668 = vld [vmem:[%s1639 + $0x91] sm:$0xff]
        %v1669 = vld [vmem:[%s1639 + $0x99] sm:$0xff]
        %v1670 = vld [vmem:[%s1639 + $0xa9] sm:$0xff]
        %v1671 = vld [vmem:[%s1639 + $0xb1] sm:$0xff]
        %v1672 = vld [vmem:[%s1639 + $0x2] sm:$0xff]
        %v1673 = vld [vmem:[%s1639 + $0xa] sm:$0xff]
        %v1674 = vld [vmem:[%s1639 + $0x1a] sm:$0xff]
        %v1675 = vld [vmem:[%s1639 + $0x22] sm:$0xff]
        %v1676 = vld [vmem:[%s1639 + $0x32] sm:$0xff]
        %v1677 = vld [vmem:[%s1639 + $0x3a] sm:$0xff]
        %v1678 = vld [vmem:[%s1639 + $0x4a] sm:$0xff]
        %v1679 = vld [vmem:[%s1639 + $0x52] sm:$0xff]
        %v1680 = vld [vmem:[%s1639 + $0x62] sm:$0xff]
        %v1681 = vld [vmem:[%s1639 + $0x6a] sm:$0xff]
        %v1682 = vld [vmem:[%s1639 + $0x7a] sm:$0xff]
        %v1683 = vld [vmem:[%s1639 + $0x82] sm:$0xff]
        %v1684 = vld [vmem:[%s1639 + $0x92] sm:$0xff]
        %v1685 = vld [vmem:[%s1639 + $0x9a] sm:$0xff]
        %v1686 = vld [vmem:[%s1639 + $0xaa] sm:$0xff]
        %v1687 = vld [vmem:[%s1639 + $0xb2] sm:$0xff]
        %s1688 = scalar_lea.vmem [#allocation3], 48
        %v1689 = vld [vmem:[%s1688] sm:$0xff]
        %v1690 = vld [vmem:[%s1688 + $0x8] sm:$0xff]
        %v1691 = vld [vmem:[%s1688 + $0x18] sm:$0xff]
        %v1692 = vld [vmem:[%s1688 + $0x20] sm:$0xff]
        %v1693 = vld [vmem:[%s1688 + $0x30] sm:$0xff]
        %v1694 = vld [vmem:[%s1688 + $0x38] sm:$0xff]
        %v1695 = vld [vmem:[%s1688 + $0x48] sm:$0xff]
        %v1696 = vld [vmem:[%s1688 + $0x50] sm:$0xff]
        %v1697 = vld [vmem:[%s1688 + $0x60] sm:$0xff]
        %v1698 = vld [vmem:[%s1688 + $0x68] sm:$0xff]
        %v1699 = vld [vmem:[%s1688 + $0x78] sm:$0xff]
        %v1700 = vld [vmem:[%s1688 + $0x80] sm:$0xff]
        %v1701 = vld [vmem:[%s1688 + $0x90] sm:$0xff]
        %v1702 = vld [vmem:[%s1688 + $0x98] sm:$0xff]
        %v1703 = vld [vmem:[%s1688 + $0xa8] sm:$0xff]
        %v1704 = vld [vmem:[%s1688 + $0xb0] sm:$0xff]
        %v1705 = vld [vmem:[%s1688 + $0x1] sm:$0xff]
        %v1706 = vld [vmem:[%s1688 + $0x9] sm:$0xff]
        %v1707 = vld [vmem:[%s1688 + $0x19] sm:$0xff]
        %v1708 = vld [vmem:[%s1688 + $0x21] sm:$0xff]
        %v1709 = vld [vmem:[%s1688 + $0x31] sm:$0xff]
        %v1710 = vld [vmem:[%s1688 + $0x39] sm:$0xff]
        %v1711 = vld [vmem:[%s1688 + $0x49] sm:$0xff]
        %v1712 = vld [vmem:[%s1688 + $0x51] sm:$0xff]
        %v1713 = vld [vmem:[%s1688 + $0x61] sm:$0xff]
        %v1714 = vld [vmem:[%s1688 + $0x69] sm:$0xff]
        %v1715 = vld [vmem:[%s1688 + $0x79] sm:$0xff]
        %v1716 = vld [vmem:[%s1688 + $0x81] sm:$0xff]
        %v1717 = vld [vmem:[%s1688 + $0x91] sm:$0xff]
        %v1718 = vld [vmem:[%s1688 + $0x99] sm:$0xff]
        %v1719 = vld [vmem:[%s1688 + $0xa9] sm:$0xff]
        %v1720 = vld [vmem:[%s1688 + $0xb1] sm:$0xff]
        %v1721 = vld [vmem:[%s1688 + $0x2] sm:$0xff]
        %v1722 = vld [vmem:[%s1688 + $0xa] sm:$0xff]
        %v1723 = vld [vmem:[%s1688 + $0x1a] sm:$0xff]
        %v1724 = vld [vmem:[%s1688 + $0x22] sm:$0xff]
        %v1725 = vld [vmem:[%s1688 + $0x32] sm:$0xff]
        %v1726 = vld [vmem:[%s1688 + $0x3a] sm:$0xff]
        %v1727 = vld [vmem:[%s1688 + $0x4a] sm:$0xff]
        %v1728 = vld [vmem:[%s1688 + $0x52] sm:$0xff]
        %v1729 = vld [vmem:[%s1688 + $0x62] sm:$0xff]
        %v1730 = vld [vmem:[%s1688 + $0x6a] sm:$0xff]
        %v1731 = vld [vmem:[%s1688 + $0x7a] sm:$0xff]
        %v1732 = vld [vmem:[%s1688 + $0x82] sm:$0xff]
        %v1733 = vld [vmem:[%s1688 + $0x92] sm:$0xff]
        %v1734 = vld [vmem:[%s1688 + $0x9a] sm:$0xff]
        %v1735 = vld [vmem:[%s1688 + $0xaa] sm:$0xff]
        %v1736 = vld [vmem:[%s1688 + $0xb2] sm:$0xff]
        %v1737 = vld [vmem:[#allocation5] sm:$0xff]
        %v1738 = vld [vmem:[#allocation5 + $0x8] sm:$0xff]
        %v1739 = vld [vmem:[#allocation5 + $0x10] sm:$0xff]
        %v1740 = vld [vmem:[#allocation5 + $0x18] sm:$0xff]
        %v1741 = vld [vmem:[#allocation5 + $0x20] sm:$0xff]
        %v1742 = vld [vmem:[#allocation5 + $0x28] sm:$0xff]
        %v1743 = vld [vmem:[#allocation5 + $0x30] sm:$0xff]
        %v1744 = vld [vmem:[#allocation5 + $0x38] sm:$0xff]
        %v1745 = vld [vmem:[#allocation5 + $0x40] sm:$0xff]
        %v1746 = vld [vmem:[#allocation5 + $0x48] sm:$0xff]
        %v1747 = vld [vmem:[#allocation5 + $0x50] sm:$0xff]
        %v1748 = vld [vmem:[#allocation5 + $0x58] sm:$0xff]
        %v1749 = vld [vmem:[#allocation5 + $0x60] sm:$0xff]
        %v1750 = vld [vmem:[#allocation5 + $0x68] sm:$0xff]
        %v1751 = vld [vmem:[#allocation5 + $0x70] sm:$0xff]
        %v1752 = vld [vmem:[#allocation5 + $0x78] sm:$0xff]
        %v1753 = vld [vmem:[#allocation5 + $0x80] sm:$0xff]
        %v1754 = vld [vmem:[#allocation5 + $0x88] sm:$0xff]
        %v1755 = vld [vmem:[#allocation5 + $0x90] sm:$0xff]
        %v1756 = vld [vmem:[#allocation5 + $0x98] sm:$0xff]
        %v1757 = vld [vmem:[#allocation5 + $0xa0] sm:$0xff]
        %v1758 = vld [vmem:[#allocation5 + $0xa8] sm:$0xff]
        %v1759 = vld [vmem:[#allocation5 + $0xb0] sm:$0xff]
        %v1760 = vld [vmem:[#allocation5 + $0xb8] sm:$0xff]
        %v1761 = vld [vmem:[#allocation5 + $0xc0] sm:$0xff]
        %v1762 = vld [vmem:[#allocation5 + $0xc8] sm:$0xff]
        %v1763 = vld [vmem:[#allocation5 + $0xd0] sm:$0xff]
        %v1764 = vld [vmem:[#allocation5 + $0xd8] sm:$0xff]
        %v1765 = vld [vmem:[#allocation5 + $0xe0] sm:$0xff]
        %v1766 = vld [vmem:[#allocation5 + $0xe8] sm:$0xff]
        %v1767 = vld [vmem:[#allocation5 + $0xf0] sm:$0xff]
        %v1768 = vld [vmem:[#allocation5 + $0xf8] sm:$0xff]
        %v1769 = vld [vmem:[#allocation5 + $0x100] sm:$0xff]
        %v1770 = vld [vmem:[#allocation5 + $0x108] sm:$0xff]
        %v1771 = vld [vmem:[#allocation5 + $0x110] sm:$0xff]
        %v1772 = vld [vmem:[#allocation5 + $0x118] sm:$0xff]
        %v1773 = vld [vmem:[#allocation5 + $0x120] sm:$0xff]
        %v1774 = vld [vmem:[#allocation5 + $0x128] sm:$0xff]
        %v1775 = vld [vmem:[#allocation5 + $0x130] sm:$0xff]
        %v1776 = vld [vmem:[#allocation5 + $0x138] sm:$0xff]
        %v1777 = vld [vmem:[#allocation5 + $0x140] sm:$0xff]
        %v1778 = vld [vmem:[#allocation5 + $0x148] sm:$0xff]
        %v1779 = vld [vmem:[#allocation5 + $0x150] sm:$0xff]
        %v1780 = vld [vmem:[#allocation5 + $0x158] sm:$0xff]
        %v1781 = vld [vmem:[#allocation5 + $0x160] sm:$0xff]
        %v1782 = vld [vmem:[#allocation5 + $0x168] sm:$0xff]
        %v1783 = vld [vmem:[#allocation5 + $0x170] sm:$0xff]
        %v1784 = vld [vmem:[#allocation5 + $0x178] sm:$0xff]
        %v1785 = vld [vmem:[#allocation5 + $0x180] sm:$0xff]
        %v1786 = vld [vmem:[#allocation5 + $0x188] sm:$0xff]
        %v1787 = vld [vmem:[#allocation5 + $0x190] sm:$0xff]
        %v1788 = vld [vmem:[#allocation5 + $0x198] sm:$0xff]
        %v1789 = vld [vmem:[#allocation5 + $0x1a0] sm:$0xff]
        %v1790 = vld [vmem:[#allocation5 + $0x1a8] sm:$0xff]
        %v1791 = vld [vmem:[#allocation5 + $0x1b0] sm:$0xff]
        %v1792 = vld [vmem:[#allocation5 + $0x1b8] sm:$0xff]
        %v1793 = vld [vmem:[#allocation5 + $0x1c0] sm:$0xff]
        %v1794 = vld [vmem:[#allocation5 + $0x1c8] sm:$0xff]
        %v1795 = vld [vmem:[#allocation5 + $0x1d0] sm:$0xff]
        %v1796 = vld [vmem:[#allocation5 + $0x1d8] sm:$0xff]
        %v1797 = vld [vmem:[#allocation5 + $0x1e0] sm:$0xff]
        %v1798 = vld [vmem:[#allocation5 + $0x1e8] sm:$0xff]
        %v1799 = vld [vmem:[#allocation5 + $0x1f0] sm:$0xff]
        %v1800 = vld [vmem:[#allocation5 + $0x1f8] sm:$0xff]
        %v1801 = vld [vmem:[#allocation5 + $0x200] sm:$0xff]
        %v1802 = vld [vmem:[#allocation5 + $0x208] sm:$0xff]
        %v1803 = vld [vmem:[#allocation5 + $0x210] sm:$0xff]
        %v1804 = vld [vmem:[#allocation5 + $0x218] sm:$0xff]
        %v1805 = vld [vmem:[#allocation5 + $0x220] sm:$0xff]
        %v1806 = vld [vmem:[#allocation5 + $0x228] sm:$0xff]
        %v1807 = vld [vmem:[#allocation5 + $0x230] sm:$0xff]
        %v1808 = vld [vmem:[#allocation5 + $0x238] sm:$0xff]
        %v1809 = vld [vmem:[#allocation5 + $0x240] sm:$0xff]
        %v1810 = vld [vmem:[#allocation5 + $0x248] sm:$0xff]
        %v1811 = vld [vmem:[#allocation5 + $0x250] sm:$0xff]
        %v1812 = vld [vmem:[#allocation5 + $0x258] sm:$0xff]
        %v1813 = vld [vmem:[#allocation5 + $0x260] sm:$0xff]
        %v1814 = vld [vmem:[#allocation5 + $0x268] sm:$0xff]
        %v1815 = vld [vmem:[#allocation5 + $0x270] sm:$0xff]
        %v1816 = vld [vmem:[#allocation5 + $0x278] sm:$0xff]
        %v1817 = vld [vmem:[#allocation5 + $0x280] sm:$0xff]
        %v1818 = vld [vmem:[#allocation5 + $0x288] sm:$0xff]
        %v1819 = vld [vmem:[#allocation5 + $0x290] sm:$0xff]
        %v1820 = vld [vmem:[#allocation5 + $0x298] sm:$0xff]
        %v1821 = vld [vmem:[#allocation5 + $0x2a0] sm:$0xff]
        %v1822 = vld [vmem:[#allocation5 + $0x2a8] sm:$0xff]
        %v1823 = vld [vmem:[#allocation5 + $0x2b0] sm:$0xff]
        %v1824 = vld [vmem:[#allocation5 + $0x2b8] sm:$0xff]
        %v1825 = vld [vmem:[#allocation5 + $0x2c0] sm:$0xff]
        %v1826 = vld [vmem:[#allocation5 + $0x2c8] sm:$0xff]
        %v1827 = vld [vmem:[#allocation5 + $0x2d0] sm:$0xff]
        %v1828 = vld [vmem:[#allocation5 + $0x2d8] sm:$0xff]
        %v1829 = vld [vmem:[#allocation5 + $0x2e0] sm:$0xff]
        %v1830 = vld [vmem:[#allocation5 + $0x2e8] sm:$0xff]
        %v1831 = vld [vmem:[#allocation5 + $0x2f0] sm:$0xff]
        %v1832 = vld [vmem:[#allocation5 + $0x2f8] sm:$0xff]
        %v1833 = vld [vmem:[#allocation5 + $0x300] sm:$0xff]
        %v1834 = vld [vmem:[#allocation5 + $0x308] sm:$0xff]
        %v1835 = vld [vmem:[#allocation5 + $0x310] sm:$0xff]
        %v1836 = vld [vmem:[#allocation5 + $0x318] sm:$0xff]
        %v1837 = vld [vmem:[#allocation5 + $0x320] sm:$0xff]
        %v1838 = vld [vmem:[#allocation5 + $0x328] sm:$0xff]
        %v1839 = vld [vmem:[#allocation5 + $0x330] sm:$0xff]
        %v1840 = vld [vmem:[#allocation5 + $0x338] sm:$0xff]
        %v1841 = vld [vmem:[#allocation5 + $0x340] sm:$0xff]
        %v1842 = vld [vmem:[#allocation5 + $0x348] sm:$0xff]
        %v1843 = vld [vmem:[#allocation5 + $0x350] sm:$0xff]
        %v1844 = vld [vmem:[#allocation5 + $0x358] sm:$0xff]
        %v1845 = vld [vmem:[#allocation5 + $0x360] sm:$0xff]
        %v1846 = vld [vmem:[#allocation5 + $0x368] sm:$0xff]
        %v1847 = vld [vmem:[#allocation5 + $0x370] sm:$0xff]
        %v1848 = vld [vmem:[#allocation5 + $0x378] sm:$0xff]
        %v1849 = vld [vmem:[#allocation5 + $0x380] sm:$0xff]
        %v1850 = vld [vmem:[#allocation5 + $0x388] sm:$0xff]
        %v1851 = vld [vmem:[#allocation5 + $0x390] sm:$0xff]
        %v1852 = vld [vmem:[#allocation5 + $0x398] sm:$0xff]
        %v1853 = vld [vmem:[#allocation5 + $0x3a0] sm:$0xff]
        %v1854 = vld [vmem:[#allocation5 + $0x3a8] sm:$0xff]
        %v1855 = vld [vmem:[#allocation5 + $0x3b0] sm:$0xff]
        %v1856 = vld [vmem:[#allocation5 + $0x3b8] sm:$0xff]
        %v1857 = vld [vmem:[#allocation5 + $0x3c0] sm:$0xff]
        %v1858 = vld [vmem:[#allocation5 + $0x3c8] sm:$0xff]
        %v1859 = vld [vmem:[#allocation5 + $0x3d0] sm:$0xff]
        %v1860 = vld [vmem:[#allocation5 + $0x3d8] sm:$0xff]
        %v1861 = vld [vmem:[#allocation5 + $0x3e0] sm:$0xff]
        %v1862 = vld [vmem:[#allocation5 + $0x3e8] sm:$0xff]
        %v1863 = vld [vmem:[#allocation5 + $0x3f0] sm:$0xff]
        %v1864 = vld [vmem:[#allocation5 + $0x3f8] sm:$0xff]
        %v1865 = vld [vmem:[#allocation5 + $0x400] sm:$0xff]
        %v1866 = vld [vmem:[#allocation5 + $0x408] sm:$0xff]
        %v1867 = vld [vmem:[#allocation5 + $0x410] sm:$0xff]
        %v1868 = vld [vmem:[#allocation5 + $0x418] sm:$0xff]
        %v1869 = vld [vmem:[#allocation5 + $0x420] sm:$0xff]
        %v1870 = vld [vmem:[#allocation5 + $0x428] sm:$0xff]
        %v1871 = vld [vmem:[#allocation5 + $0x430] sm:$0xff]
        %v1872 = vld [vmem:[#allocation5 + $0x438] sm:$0xff]
        %v1873 = vld [vmem:[#allocation5 + $0x440] sm:$0xff]
        %v1874 = vld [vmem:[#allocation5 + $0x448] sm:$0xff]
        %v1875 = vld [vmem:[#allocation5 + $0x450] sm:$0xff]
        %v1876 = vld [vmem:[#allocation5 + $0x458] sm:$0xff]
        %v1877 = vld [vmem:[#allocation5 + $0x460] sm:$0xff]
        %v1878 = vld [vmem:[#allocation5 + $0x468] sm:$0xff]
        %v1879 = vld [vmem:[#allocation5 + $0x470] sm:$0xff]
        %v1880 = vld [vmem:[#allocation5 + $0x478] sm:$0xff]
        %v1881 = vld [vmem:[%s4] sm:$0x1]
        %v1883 = vlaneseq
        %v1884 = vshrl.u32 %v1883, 7
        %v1885 = vsub.s32 0, %v1884
        %v1886 = vrot.slane %v1881, %v1885
        %1888 = vmatprep.subr.mxu0 0.0
        %1889 = vmatpush1.msra.mxu0 %v1737
        %1890 = vmatprep.subr.mxu0 0.0
        %1891 = vmatpush1.msra.mxu0 %v1738
        %1892 = vmatprep.subr.mxu0 0.0
        %1893 = vmatpush1.msra.mxu0 %v1739
        %1894 = vmatprep.subr.mxu0 0.0
        %1895 = vmatpush1.msra.mxu0 %v1740
        %1896 = vmatprep.subr.mxu0 0.0
        %1897 = vmatpush1.msra.mxu0 %v1741
        %1898 = vmatprep.subr.mxu0 0.0
        %1899 = vmatpush1.msra.mxu0 %v1742
        %1900 = vmatprep.subr.mxu0 0.0
        %1901 = vmatpush1.msra.mxu0 %v1743
        %1902 = vmatprep.subr.mxu0 0.0
        %1903 = vmatpush1.msra.mxu0 %v1744
        %1904 = vmatprep.subr.mxu0 0.0
        %1905 = vmatpush1.msra.mxu0 %v1745
        %1906 = vmatprep.subr.mxu0 0.0
        %1907 = vmatpush1.msra.mxu0 %v1746
        %1908 = vmatprep.subr.mxu0 0.0
        %1909 = vmatpush1.msra.mxu0 %v1747
        %1910 = vmatprep.subr.mxu0 0.0
        %1911 = vmatpush1.msra.mxu0 %v1748
        %1912 = vmatprep.subr.mxu0 0.0
        %1913 = vmatpush1.msra.mxu0 %v1749
        %1914 = vmatprep.subr.mxu0 0.0
        %1915 = vmatpush1.msra.mxu0 %v1750
        %1916 = vmatprep.subr.mxu0 0.0
        %1917 = vmatpush1.msra.mxu0 %v1751
        %1918 = vmatprep.subr.mxu0 0.0
        %1919 = vmatpush1.msra.mxu0 %v1752
        %1920 = vmatprep.subr.mxu0 0.0
        %1921 = vmatpush1.msra.mxu0 %v1753
        %1922 = vmatprep.subr.mxu0 0.0
        %1923 = vmatpush1.msra.mxu0 %v1754
        %1924 = vmatprep.subr.mxu0 0.0
        %1925 = vmatpush1.msra.mxu0 %v1755
        %1926 = vmatprep.subr.mxu0 0.0
        %1927 = vmatpush1.msra.mxu0 %v1756
        %1928 = vmatprep.subr.mxu0 0.0
        %1929 = vmatpush1.msra.mxu0 %v1757
        %1930 = vmatprep.subr.mxu0 0.0
        %1931 = vmatpush1.msra.mxu0 %v1758
        %1932 = vmatprep.subr.mxu0 0.0
        %1933 = vmatpush1.msra.mxu0 %v1759
        %1934 = vmatprep.subr.mxu0 0.0
        %1935 = vmatpush1.msra.mxu0 %v1760
        %1936 = vmatprep.subr.mxu0 0.0
        %1937 = vmatpush1.msra.mxu0 %v1761
        %1938 = vmatprep.subr.mxu0 0.0
        %1939 = vmatpush1.msra.mxu0 %v1762
        %1940 = vmatprep.subr.mxu0 0.0
        %1941 = vmatpush1.msra.mxu0 %v1763
        %1942 = vmatprep.subr.mxu0 0.0
        %1943 = vmatpush1.msra.mxu0 %v1764
        %1944 = vmatprep.subr.mxu0 0.0
        %1945 = vmatpush1.msra.mxu0 %v1765
        %1946 = vmatprep.subr.mxu0 0.0
        %1947 = vmatpush1.msra.mxu0 %v1766
        %1948 = vmatprep.subr.mxu0 0.0
        %1949 = vmatpush1.msra.mxu0 %v1767
        %1950 = vmatprep.subr.mxu0 0.0
        %1951 = vmatpush1.msra.mxu0 %v1768
        %1952 = vmatprep.mubr.f32.mxu0 %v1607
        %1953 = vmatmul.mubr.f32.gmra.mrb[0].mxu0 %v1591
        %v1954 = vpop.f32.mrb[0].mxu0
        %v1955 = vadd.f32 %v1886, %v1954
        %v1956 = vpop.f32.mrb[0].mxu0
        %1957 = vmatprep.mubr.f32.mxu0 %v1608
        %1958 = vmatmul.mubr.f32.gmra.mrb[0].mxu0 %v1592
        %v1959 = vpop.f32.mrb[0].mxu0
        %v1960 = vadd.f32 %v1886, %v1959
        %v1961 = vpop.f32.mrb[0].mxu0
        %1962 = vmatprep.mubr.f32.mxu0 %v1609
        %1963 = vmatmul.mubr.f32.gmra.mrb[0].mxu0 %v1593
        %v1964 = vpop.f32.mrb[0].mxu0
        %v1965 = vadd.f32 %v1886, %v1964
        %v1966 = vpop.f32.mrb[0].mxu0
        %1967 = vmatprep.mubr.f32.mxu0 %v1610
        %1968 = vmatmul.mubr.f32.gmra.mrb[0].mxu0 %v1594
        %v1969 = vpop.f32.mrb[0].mxu0
        %v1970 = vadd.f32 %v1886, %v1969
        %v1971 = vpop.f32.mrb[0].mxu0
        %1972 = vmatprep.mubr.f32.mxu0 %v1611
        %1973 = vmatmul.mubr.f32.gmra.mrb[0].mxu0 %v1595
        %v1974 = vpop.f32.mrb[0].mxu0
        %v1975 = vadd.f32 %v1886, %v1974
        %v1976 = vpop.f32.mrb[0].mxu0
        %1977 = vmatprep.mubr.f32.mxu0 %v1612
        %1978 = vmatmul.mubr.f32.gmra.mrb[0].mxu0 %v1596
        %v1979 = vpop.f32.mrb[0].mxu0
        %v1980 = vadd.f32 %v1886, %v1979
        %v1981 = vpop.f32.mrb[0].mxu0
        %1982 = vmatprep.mubr.f32.mxu0 %v1613
        %1983 = vmatmul.mubr.f32.gmra.mrb[0].mxu0 %v1597
        %v1984 = vpop.f32.mrb[0].mxu0
        %v1985 = vadd.f32 %v1886, %v1984
        %v1986 = vpop.f32.mrb[0].mxu0
        %1987 = vmatprep.mubr.f32.mxu0 %v1614
        %1988 = vmatmul.mubr.f32.gmra.mrb[0].mxu0 %v1598
        %v1989 = vpop.f32.mrb[0].mxu0
        %v1990 = vadd.f32 %v1886, %v1989
        %v1991 = vpop.f32.mrb[0].mxu0
        %1992 = vmatprep.mubr.f32.mxu0 %v1615
        %1993 = vmatmul.mubr.f32.gmra.mrb[0].mxu0 %v1599
        %v1994 = vpop.f32.mrb[0].mxu0
        %v1995 = vadd.f32 %v1886, %v1994
        %v1996 = vpop.f32.mrb[0].mxu0
        %1997 = vmatprep.mubr.f32.mxu0 %v1616
        %1998 = vmatmul.mubr.f32.gmra.mrb[0].mxu0 %v1600
        %v1999 = vpop.f32.mrb[0].mxu0
        %v2000 = vadd.f32 %v1886, %v1999
        %v2001 = vpop.f32.mrb[0].mxu0
        %2002 = vmatprep.mubr.f32.mxu0 %v1617
        %2003 = vmatmul.mubr.f32.gmra.mrb[0].mxu0 %v1601
        %v2004 = vpop.f32.mrb[0].mxu0
        %v2005 = vadd.f32 %v1886, %v2004
        %v2006 = vpop.f32.mrb[0].mxu0
        %2007 = vmatprep.mubr.f32.mxu0 %v1618
        %2008 = vmatmul.mubr.f32.gmra.mrb[0].mxu0 %v1602
        %v2009 = vpop.f32.mrb[0].mxu0
        %v2010 = vadd.f32 %v1886, %v2009
        %v2011 = vpop.f32.mrb[0].mxu0
        %2012 = vmatprep.mubr.f32.mxu0 %v1619
        %2013 = vmatmul.mubr.f32.gmra.mrb[0].mxu0 %v1603
        %v2014 = vpop.f32.mrb[0].mxu0
        %v2015 = vadd.f32 %v1886, %v2014
        %v2016 = vpop.f32.mrb[0].mxu0
        %2017 = vmatprep.mubr.f32.mxu0 %v1620
        %2018 = vmatmul.mubr.f32.gmra.mrb[0].mxu0 %v1604
        %v2019 = vpop.f32.mrb[0].mxu0
        %v2020 = vadd.f32 %v1886, %v2019
        %v2021 = vpop.f32.mrb[0].mxu0
        %2022 = vmatprep.mubr.f32.mxu0 %v1621
        %2023 = vmatmul.mubr.f32.gmra.mrb[0].mxu0 %v1605
        %v2024 = vpop.f32.mrb[0].mxu0
        %v2025 = vadd.f32 %v1886, %v2024
        %v2026 = vpop.f32.mrb[0].mxu0
        %2027 = vmatprep.mubr.f32.mxu0 %v1622
        %2028 = vmatmul.mubr.f32.gmra.mrb[0].mxu0 %v1606
        %v2029 = vpop.f32.mrb[0].mxu0
        %v2030 = vadd.f32 %v1886, %v2029
        %v2031 = vpop.f32.mrb[0].mxu0
        %2032 = vdwg.mxu0
        %2033 = vmatprep.subr.mxu0 0.0
        %2034 = vmatpush1.msra.mxu0 %v1769
        %2035 = vmatprep.subr.mxu0 0.0
        %2036 = vmatpush1.msra.mxu0 %v1770
        %2037 = vmatprep.subr.mxu0 0.0
        %2038 = vmatpush1.msra.mxu0 %v1771
        %2039 = vmatprep.subr.mxu0 0.0
        %2040 = vmatpush1.msra.mxu0 %v1772
        %2041 = vmatprep.subr.mxu0 0.0
        %2042 = vmatpush1.msra.mxu0 %v1773
        %2043 = vmatprep.subr.mxu0 0.0
        %2044 = vmatpush1.msra.mxu0 %v1774
        %2045 = vmatprep.subr.mxu0 0.0
        %2046 = vmatpush1.msra.mxu0 %v1775
        %2047 = vmatprep.subr.mxu0 0.0
        %2048 = vmatpush1.msra.mxu0 %v1776
        %2049 = vmatprep.subr.mxu0 0.0
        %2050 = vmatpush1.msra.mxu0 %v1777
        %2051 = vmatprep.subr.mxu0 0.0
        %2052 = vmatpush1.msra.mxu0 %v1778
        %2053 = vmatprep.subr.mxu0 0.0
        %2054 = vmatpush1.msra.mxu0 %v1779
        %2055 = vmatprep.subr.mxu0 0.0
        %2056 = vmatpush1.msra.mxu0 %v1780
        %2057 = vmatprep.subr.mxu0 0.0
        %2058 = vmatpush1.msra.mxu0 %v1781
        %2059 = vmatprep.subr.mxu0 0.0
        %2060 = vmatpush1.msra.mxu0 %v1782
        %2061 = vmatprep.subr.mxu0 0.0
        %2062 = vmatpush1.msra.mxu0 %v1783
        %2063 = vmatprep.subr.mxu0 0.0
        %2064 = vmatpush1.msra.mxu0 %v1784
        %2065 = vmatprep.subr.mxu0 0.0
        %2066 = vmatpush1.msra.mxu0 %v1785
        %2067 = vmatprep.subr.mxu0 0.0
        %2068 = vmatpush1.msra.mxu0 %v1786
        %2069 = vmatprep.subr.mxu0 0.0
        %2070 = vmatpush1.msra.mxu0 %v1787
        %2071 = vmatprep.subr.mxu0 0.0
        %2072 = vmatpush1.msra.mxu0 %v1788
        %2073 = vmatprep.subr.mxu0 0.0
        %2074 = vmatpush1.msra.mxu0 %v1789
        %2075 = vmatprep.subr.mxu0 0.0
        %2076 = vmatpush1.msra.mxu0 %v1790
        %2077 = vmatprep.subr.mxu0 0.0
        %2078 = vmatpush1.msra.mxu0 %v1791
        %2079 = vmatprep.subr.mxu0 0.0
        %2080 = vmatpush1.msra.mxu0 %v1792
        %2081 = vmatprep.subr.mxu0 0.0
        %2082 = vmatpush1.msra.mxu0 %v1793
        %2083 = vmatprep.subr.mxu0 0.0
        %2084 = vmatpush1.msra.mxu0 %v1794
        %2085 = vmatprep.subr.mxu0 0.0
        %2086 = vmatpush1.msra.mxu0 %v1795
        %2087 = vmatprep.subr.mxu0 0.0
        %2088 = vmatpush1.msra.mxu0 %v1796
        %2089 = vmatprep.subr.mxu0 0.0
        %2090 = vmatpush1.msra.mxu0 %v1797
        %2091 = vmatprep.subr.mxu0 0.0
        %2092 = vmatpush1.msra.mxu0 %v1798
        %2093 = vmatprep.subr.mxu0 0.0
        %2094 = vmatpush1.msra.mxu0 %v1799
        %2095 = vmatprep.subr.mxu0 0.0
        %2096 = vmatpush1.msra.mxu0 %v1800
        %2097 = vmatprep.mubr.f32.mxu0 %v1640
        %2098 = vmatmul.mubr.f32.gmra.mrb[0].mxu0 %v1623
        %v2099 = vpop.f32.mrb[0].mxu0
        %v2100 = vadd.f32 %v1955, %v2099
        %v2101 = vpop.f32.mrb[0].mxu0
        %2102 = vmatprep.mubr.f32.mxu0 %v1641
        %2103 = vmatmul.mubr.f32.gmra.mrb[0].mxu0 %v1624
        %v2104 = vpop.f32.mrb[0].mxu0
        %v2105 = vadd.f32 %v1960, %v2104
        %v2106 = vpop.f32.mrb[0].mxu0
        %2107 = vmatprep.mubr.f32.mxu0 %v1642
        %2108 = vmatmul.mubr.f32.gmra.mrb[0].mxu0 %v1625
        %v2109 = vpop.f32.mrb[0].mxu0
        %v2110 = vadd.f32 %v1965, %v2109
        %v2111 = vpop.f32.mrb[0].mxu0
        %2112 = vmatprep.mubr.f32.mxu0 %v1643
        %2113 = vmatmul.mubr.f32.gmra.mrb[0].mxu0 %v1626
        %v2114 = vpop.f32.mrb[0].mxu0
        %v2115 = vadd.f32 %v1970, %v2114
        %v2116 = vpop.f32.mrb[0].mxu0
        %2117 = vmatprep.mubr.f32.mxu0 %v1644
        %2118 = vmatmul.mubr.f32.gmra.mrb[0].mxu0 %v1627
        %v2119 = vpop.f32.mrb[0].mxu0
        %v2120 = vadd.f32 %v1975, %v2119
        %v2121 = vpop.f32.mrb[0].mxu0
        %2122 = vmatprep.mubr.f32.mxu0 %v1645
        %2123 = vmatmul.mubr.f32.gmra.mrb[0].mxu0 %v1628
        %v2124 = vpop.f32.mrb[0].mxu0
        %v2125 = vadd.f32 %v1980, %v2124
        %v2126 = vpop.f32.mrb[0].mxu0
        %2127 = vmatprep.mubr.f32.mxu0 %v1646
        %2128 = vmatmul.mubr.f32.gmra.mrb[0].mxu0 %v1629
        %v2129 = vpop.f32.mrb[0].mxu0
        %v2130 = vadd.f32 %v1985, %v2129
        %v2131 = vpop.f32.mrb[0].mxu0
        %2132 = vmatprep.mubr.f32.mxu0 %v1647
        %2133 = vmatmul.mubr.f32.gmra.mrb[0].mxu0 %v1630
        %v2134 = vpop.f32.mrb[0].mxu0
        %v2135 = vadd.f32 %v1990, %v2134
        %v2136 = vpop.f32.mrb[0].mxu0
        %2137 = vmatprep.mubr.f32.mxu0 %v1648
        %2138 = vmatmul.mubr.f32.gmra.mrb[0].mxu0 %v1631
        %v2139 = vpop.f32.mrb[0].mxu0
        %v2140 = vadd.f32 %v1995, %v2139
        %v2141 = vpop.f32.mrb[0].mxu0
        %2142 = vmatprep.mubr.f32.mxu0 %v1649
        %2143 = vmatmul.mubr.f32.gmra.mrb[0].mxu0 %v1632
        %v2144 = vpop.f32.mrb[0].mxu0
        %v2145 = vadd.f32 %v2000, %v2144
        %v2146 = vpop.f32.mrb[0].mxu0
        %2147 = vmatprep.mubr.f32.mxu0 %v1650
        %2148 = vmatmul.mubr.f32.gmra.mrb[0].mxu0 %v1633
        %v2149 = vpop.f32.mrb[0].mxu0
        %v2150 = vadd.f32 %v2005, %v2149
        %v2151 = vpop.f32.mrb[0].mxu0
        %2152 = vmatprep.mubr.f32.mxu0 %v1651
        %2153 = vmatmul.mubr.f32.gmra.mrb[0].mxu0 %v1634
        %v2154 = vpop.f32.mrb[0].mxu0
        %v2155 = vadd.f32 %v2010, %v2154
        %v2156 = vpop.f32.mrb[0].mxu0
        %2157 = vmatprep.mubr.f32.mxu0 %v1652
        %2158 = vmatmul.mubr.f32.gmra.mrb[0].mxu0 %v1635
        %v2159 = vpop.f32.mrb[0].mxu0
        %v2160 = vadd.f32 %v2015, %v2159
        %v2161 = vpop.f32.mrb[0].mxu0
        %2162 = vmatprep.mubr.f32.mxu0 %v1653
        %2163 = vmatmul.mubr.f32.gmra.mrb[0].mxu0 %v1636
        %v2164 = vpop.f32.mrb[0].mxu0
        %v2165 = vadd.f32 %v2020, %v2164
        %v2166 = vpop.f32.mrb[0].mxu0
        %2167 = vmatprep.mubr.f32.mxu0 %v1654
        %2168 = vmatmul.mubr.f32.gmra.mrb[0].mxu0 %v1637
        %v2169 = vpop.f32.mrb[0].mxu0
        %v2170 = vadd.f32 %v2025, %v2169
        %v2171 = vpop.f32.mrb[0].mxu0
        %2172 = vmatprep.mubr.f32.mxu0 %v1655
        %2173 = vmatmul.mubr.f32.gmra.mrb[0].mxu0 %v1638
        %v2174 = vpop.f32.mrb[0].mxu0
        %v2175 = vadd.f32 %v2030, %v2174
        %v2176 = vpop.f32.mrb[0].mxu0
        %2177 = vdwg.mxu0
        %2178 = vmatprep.subr.mxu0 0.0
        %2179 = vmatpush1.msra.mxu0 %v1801
        %2180 = vmatprep.subr.mxu0 0.0
        %2181 = vmatpush1.msra.mxu0 %v1802
        %2182 = vmatprep.subr.mxu0 0.0
        %2183 = vmatpush1.msra.mxu0 %v1803
        %2184 = vmatprep.subr.mxu0 0.0
        %2185 = vmatpush1.msra.mxu0 %v1804
        %2186 = vmatprep.subr.mxu0 0.0
        %2187 = vmatpush1.msra.mxu0 %v1805
        %2188 = vmatprep.subr.mxu0 0.0
        %2189 = vmatpush1.msra.mxu0 %v1806
        %2190 = vmatprep.subr.mxu0 0.0
        %2191 = vmatpush1.msra.mxu0 %v1807
        %2192 = vmatprep.subr.mxu0 0.0
        %2193 = vmatpush1.msra.mxu0 %v1808
        %2194 = vmatprep.subr.mxu0 0.0
        %2195 = vmatpush1.msra.mxu0 %v1809
        %2196 = vmatprep.subr.mxu0 0.0
        %2197 = vmatpush1.msra.mxu0 %v1810
        %2198 = vmatprep.subr.mxu0 0.0
        %2199 = vmatpush1.msra.mxu0 %v1811
        %2200 = vmatprep.subr.mxu0 0.0
        %2201 = vmatpush1.msra.mxu0 %v1812
        %2202 = vmatprep.subr.mxu0 0.0
        %2203 = vmatpush1.msra.mxu0 %v1813
        %2204 = vmatprep.subr.mxu0 0.0
        %2205 = vmatpush1.msra.mxu0 %v1814
        %2206 = vmatprep.subr.mxu0 0.0
        %2207 = vmatpush1.msra.mxu0 %v1815
        %2208 = vmatprep.subr.mxu0 0.0
        %2209 = vmatpush1.msra.mxu0 %v1816
        %2210 = vmatprep.subr.mxu0 0.0
        %2211 = vmatpush1.msra.mxu0 %v1817
        %2212 = vmatprep.subr.mxu0 0.0
        %2213 = vmatpush1.msra.mxu0 %v1818
        %2214 = vmatprep.subr.mxu0 0.0
        %2215 = vmatpush1.msra.mxu0 %v1819
        %2216 = vmatprep.subr.mxu0 0.0
        %2217 = vmatpush1.msra.mxu0 %v1820
        %2218 = vmatprep.subr.mxu0 0.0
        %2219 = vmatpush1.msra.mxu0 %v1821
        %2220 = vmatprep.subr.mxu0 0.0
        %2221 = vmatpush1.msra.mxu0 %v1822
        %2222 = vmatprep.subr.mxu0 0.0
        %2223 = vmatpush1.msra.mxu0 %v1823
        %2224 = vmatprep.subr.mxu0 0.0
        %2225 = vmatpush1.msra.mxu0 %v1824
        %2226 = vmatprep.subr.mxu0 0.0
        %2227 = vmatpush1.msra.mxu0 %v1825
        %2228 = vmatprep.subr.mxu0 0.0
        %2229 = vmatpush1.msra.mxu0 %v1826
        %2230 = vmatprep.subr.mxu0 0.0
        %2231 = vmatpush1.msra.mxu0 %v1827
        %2232 = vmatprep.subr.mxu0 0.0
        %2233 = vmatpush1.msra.mxu0 %v1828
        %2234 = vmatprep.subr.mxu0 0.0
        %2235 = vmatpush1.msra.mxu0 %v1829
        %2236 = vmatprep.subr.mxu0 0.0
        %2237 = vmatpush1.msra.mxu0 %v1830
        %2238 = vmatprep.subr.mxu0 0.0
        %2239 = vmatpush1.msra.mxu0 %v1831
        %2240 = vmatprep.subr.mxu0 0.0
        %2241 = vmatpush1.msra.mxu0 %v1832
        %2242 = vmatprep.mubr.f32.mxu0 %v1672
        %2243 = vmatmul.mubr.f32.gmra.mrb[0].mxu0 %v1656
        %v2244 = vpop.f32.mrb[0].mxu0
        %v2245 = vadd.f32 %v2100, %v2244
        %v2246 = vpop.f32.mrb[0].mxu0
        %2247 = vmatprep.mubr.f32.mxu0 %v1673
        %2248 = vmatmul.mubr.f32.gmra.mrb[0].mxu0 %v1657
        %v2249 = vpop.f32.mrb[0].mxu0
        %v2250 = vadd.f32 %v2105, %v2249
        %v2251 = vpop.f32.mrb[0].mxu0
        %2252 = vmatprep.mubr.f32.mxu0 %v1674
        %2253 = vmatmul.mubr.f32.gmra.mrb[0].mxu0 %v1658
        %v2254 = vpop.f32.mrb[0].mxu0
        %v2255 = vadd.f32 %v2110, %v2254
        %v2256 = vpop.f32.mrb[0].mxu0
        %2257 = vmatprep.mubr.f32.mxu0 %v1675
        %2258 = vmatmul.mubr.f32.gmra.mrb[0].mxu0 %v1659
        %v2259 = vpop.f32.mrb[0].mxu0
        %v2260 = vadd.f32 %v2115, %v2259
        %v2261 = vpop.f32.mrb[0].mxu0
        %2262 = vmatprep.mubr.f32.mxu0 %v1676
        %2263 = vmatmul.mubr.f32.gmra.mrb[0].mxu0 %v1660
        %v2264 = vpop.f32.mrb[0].mxu0
        %v2265 = vadd.f32 %v2120, %v2264
        %v2266 = vpop.f32.mrb[0].mxu0
        %2267 = vmatprep.mubr.f32.mxu0 %v1677
        %2268 = vmatmul.mubr.f32.gmra.mrb[0].mxu0 %v1661
        %v2269 = vpop.f32.mrb[0].mxu0
        %v2270 = vadd.f32 %v2125, %v2269
        %v2271 = vpop.f32.mrb[0].mxu0
        %2272 = vmatprep.mubr.f32.mxu0 %v1678
        %2273 = vmatmul.mubr.f32.gmra.mrb[0].mxu0 %v1662
        %v2274 = vpop.f32.mrb[0].mxu0
        %v2275 = vadd.f32 %v2130, %v2274
        %v2276 = vpop.f32.mrb[0].mxu0
        %2277 = vmatprep.mubr.f32.mxu0 %v1679
        %2278 = vmatmul.mubr.f32.gmra.mrb[0].mxu0 %v1663
        %v2279 = vpop.f32.mrb[0].mxu0
        %v2280 = vadd.f32 %v2135, %v2279
        %v2281 = vpop.f32.mrb[0].mxu0
        %2282 = vmatprep.mubr.f32.mxu0 %v1680
        %2283 = vmatmul.mubr.f32.gmra.mrb[0].mxu0 %v1664
        %v2284 = vpop.f32.mrb[0].mxu0
        %v2285 = vadd.f32 %v2140, %v2284
        %v2286 = vpop.f32.mrb[0].mxu0
        %2287 = vmatprep.mubr.f32.mxu0 %v1681
        %2288 = vmatmul.mubr.f32.gmra.mrb[0].mxu0 %v1665
        %v2289 = vpop.f32.mrb[0].mxu0
        %v2290 = vadd.f32 %v2145, %v2289
        %v2291 = vpop.f32.mrb[0].mxu0
        %2292 = vmatprep.mubr.f32.mxu0 %v1682
        %2293 = vmatmul.mubr.f32.gmra.mrb[0].mxu0 %v1666
        %v2294 = vpop.f32.mrb[0].mxu0
        %v2295 = vadd.f32 %v2150, %v2294
        %v2296 = vpop.f32.mrb[0].mxu0
        %2297 = vmatprep.mubr.f32.mxu0 %v1683
        %2298 = vmatmul.mubr.f32.gmra.mrb[0].mxu0 %v1667
        %v2299 = vpop.f32.mrb[0].mxu0
        %v2300 = vadd.f32 %v2155, %v2299
        %v2301 = vpop.f32.mrb[0].mxu0
        %2302 = vmatprep.mubr.f32.mxu0 %v1684
        %2303 = vmatmul.mubr.f32.gmra.mrb[0].mxu0 %v1668
        %v2304 = vpop.f32.mrb[0].mxu0
        %v2305 = vadd.f32 %v2160, %v2304
        %v2306 = vpop.f32.mrb[0].mxu0
        %2307 = vmatprep.mubr.f32.mxu0 %v1685
        %2308 = vmatmul.mubr.f32.gmra.mrb[0].mxu0 %v1669
        %v2309 = vpop.f32.mrb[0].mxu0
        %v2310 = vadd.f32 %v2165, %v2309
        %v2311 = vpop.f32.mrb[0].mxu0
        %2312 = vmatprep.mubr.f32.mxu0 %v1686
        %2313 = vmatmul.mubr.f32.gmra.mrb[0].mxu0 %v1670
        %v2314 = vpop.f32.mrb[0].mxu0
        %v2315 = vadd.f32 %v2170, %v2314
        %v2316 = vpop.f32.mrb[0].mxu0
        %2317 = vmatprep.mubr.f32.mxu0 %v1687
        %2318 = vmatmul.mubr.f32.gmra.mrb[0].mxu0 %v1671
        %v2319 = vpop.f32.mrb[0].mxu0
        %v2320 = vadd.f32 %v2175, %v2319
        %v2321 = vpop.f32.mrb[0].mxu0
        %2322 = vdwg.mxu0
        %2323 = vmatprep.subr.mxu0 0.0
        %2324 = vmatpush1.msra.mxu0 %v1833
        %2325 = vmatprep.subr.mxu0 0.0
        %2326 = vmatpush1.msra.mxu0 %v1834
        %2327 = vmatprep.subr.mxu0 0.0
        %2328 = vmatpush1.msra.mxu0 %v1835
        %2329 = vmatprep.subr.mxu0 0.0
        %2330 = vmatpush1.msra.mxu0 %v1836
        %2331 = vmatprep.subr.mxu0 0.0
        %2332 = vmatpush1.msra.mxu0 %v1837
        %2333 = vmatprep.subr.mxu0 0.0
        %2334 = vmatpush1.msra.mxu0 %v1838
        %2335 = vmatprep.subr.mxu0 0.0
        %2336 = vmatpush1.msra.mxu0 %v1839
        %2337 = vmatprep.subr.mxu0 0.0
        %2338 = vmatpush1.msra.mxu0 %v1840
        %2339 = vmatprep.subr.mxu0 0.0
        %2340 = vmatpush1.msra.mxu0 %v1841
        %2341 = vmatprep.subr.mxu0 0.0
        %2342 = vmatpush1.msra.mxu0 %v1842
        %2343 = vmatprep.subr.mxu0 0.0
        %2344 = vmatpush1.msra.mxu0 %v1843
        %2345 = vmatprep.subr.mxu0 0.0
        %2346 = vmatpush1.msra.mxu0 %v1844
        %2347 = vmatprep.subr.mxu0 0.0
        %2348 = vmatpush1.msra.mxu0 %v1845
        %2349 = vmatprep.subr.mxu0 0.0
        %2350 = vmatpush1.msra.mxu0 %v1846
        %2351 = vmatprep.subr.mxu0 0.0
        %2352 = vmatpush1.msra.mxu0 %v1847
        %2353 = vmatprep.subr.mxu0 0.0
        %2354 = vmatpush1.msra.mxu0 %v1848
        %2355 = vmatprep.subr.mxu0 0.0
        %2356 = vmatpush1.msra.mxu0 %v1849
        %2357 = vmatprep.subr.mxu0 0.0
        %2358 = vmatpush1.msra.mxu0 %v1850
        %2359 = vmatprep.subr.mxu0 0.0
        %2360 = vmatpush1.msra.mxu0 %v1851
        %2361 = vmatprep.subr.mxu0 0.0
        %2362 = vmatpush1.msra.mxu0 %v1852
        %2363 = vmatprep.subr.mxu0 0.0
        %2364 = vmatpush1.msra.mxu0 %v1853
        %2365 = vmatprep.subr.mxu0 0.0
        %2366 = vmatpush1.msra.mxu0 %v1854
        %2367 = vmatprep.subr.mxu0 0.0
        %2368 = vmatpush1.msra.mxu0 %v1855
        %2369 = vmatprep.subr.mxu0 0.0
        %2370 = vmatpush1.msra.mxu0 %v1856
        %2371 = vmatprep.subr.mxu0 0.0
        %2372 = vmatpush1.msra.mxu0 %v1857
        %2373 = vmatprep.subr.mxu0 0.0
        %2374 = vmatpush1.msra.mxu0 %v1858
        %2375 = vmatprep.subr.mxu0 0.0
        %2376 = vmatpush1.msra.mxu0 %v1859
        %2377 = vmatprep.subr.mxu0 0.0
        %2378 = vmatpush1.msra.mxu0 %v1860
        %2379 = vmatprep.subr.mxu0 0.0
        %2380 = vmatpush1.msra.mxu0 %v1861
        %2381 = vmatprep.subr.mxu0 0.0
        %2382 = vmatpush1.msra.mxu0 %v1862
        %2383 = vmatprep.subr.mxu0 0.0
        %2384 = vmatpush1.msra.mxu0 %v1863
        %2385 = vmatprep.subr.mxu0 0.0
        %2386 = vmatpush1.msra.mxu0 %v1864
        %2387 = vmatprep.mubr.f32.mxu0 %v1705
        %2388 = vmatmul.mubr.f32.gmra.mrb[0].mxu0 %v1689
        %v2389 = vpop.f32.mrb[0].mxu0
        %v2390 = vadd.f32 %v2245, %v2389
        %v2391 = vpop.f32.mrb[0].mxu0
        %2392 = vmatprep.mubr.f32.mxu0 %v1706
        %2393 = vmatmul.mubr.f32.gmra.mrb[0].mxu0 %v1690
        %v2394 = vpop.f32.mrb[0].mxu0
        %v2395 = vadd.f32 %v2250, %v2394
        %v2396 = vpop.f32.mrb[0].mxu0
        %2397 = vmatprep.mubr.f32.mxu0 %v1707
        %2398 = vmatmul.mubr.f32.gmra.mrb[0].mxu0 %v1691
        %v2399 = vpop.f32.mrb[0].mxu0
        %v2400 = vadd.f32 %v2255, %v2399
        %v2401 = vpop.f32.mrb[0].mxu0
        %2402 = vmatprep.mubr.f32.mxu0 %v1708
        %2403 = vmatmul.mubr.f32.gmra.mrb[0].mxu0 %v1692
        %v2404 = vpop.f32.mrb[0].mxu0
        %v2405 = vadd.f32 %v2260, %v2404
        %v2406 = vpop.f32.mrb[0].mxu0
        %2407 = vmatprep.mubr.f32.mxu0 %v1709
        %2408 = vmatmul.mubr.f32.gmra.mrb[0].mxu0 %v1693
        %v2409 = vpop.f32.mrb[0].mxu0
        %v2410 = vadd.f32 %v2265, %v2409
        %v2411 = vpop.f32.mrb[0].mxu0
        %2412 = vmatprep.mubr.f32.mxu0 %v1710
        %2413 = vmatmul.mubr.f32.gmra.mrb[0].mxu0 %v1694
        %v2414 = vpop.f32.mrb[0].mxu0
        %v2415 = vadd.f32 %v2270, %v2414
        %v2416 = vpop.f32.mrb[0].mxu0
        %2417 = vmatprep.mubr.f32.mxu0 %v1711
        %2418 = vmatmul.mubr.f32.gmra.mrb[0].mxu0 %v1695
        %v2419 = vpop.f32.mrb[0].mxu0
        %v2420 = vadd.f32 %v2275, %v2419
        %v2421 = vpop.f32.mrb[0].mxu0
        %2422 = vmatprep.mubr.f32.mxu0 %v1712
        %2423 = vmatmul.mubr.f32.gmra.mrb[0].mxu0 %v1696
        %v2424 = vpop.f32.mrb[0].mxu0
        %v2425 = vadd.f32 %v2280, %v2424
        %v2426 = vpop.f32.mrb[0].mxu0
        %2427 = vmatprep.mubr.f32.mxu0 %v1713
        %2428 = vmatmul.mubr.f32.gmra.mrb[0].mxu0 %v1697
        %v2429 = vpop.f32.mrb[0].mxu0
        %v2430 = vadd.f32 %v2285, %v2429
        %v2431 = vpop.f32.mrb[0].mxu0
        %2432 = vmatprep.mubr.f32.mxu0 %v1714
        %2433 = vmatmul.mubr.f32.gmra.mrb[0].mxu0 %v1698
        %v2434 = vpop.f32.mrb[0].mxu0
        %v2435 = vadd.f32 %v2290, %v2434
        %v2436 = vpop.f32.mrb[0].mxu0
        %2437 = vmatprep.mubr.f32.mxu0 %v1715
        %2438 = vmatmul.mubr.f32.gmra.mrb[0].mxu0 %v1699
        %v2439 = vpop.f32.mrb[0].mxu0
        %v2440 = vadd.f32 %v2295, %v2439
        %v2441 = vpop.f32.mrb[0].mxu0
        %2442 = vmatprep.mubr.f32.mxu0 %v1716
        %2443 = vmatmul.mubr.f32.gmra.mrb[0].mxu0 %v1700
        %v2444 = vpop.f32.mrb[0].mxu0
        %v2445 = vadd.f32 %v2300, %v2444
        %v2446 = vpop.f32.mrb[0].mxu0
        %2447 = vmatprep.mubr.f32.mxu0 %v1717
        %2448 = vmatmul.mubr.f32.gmra.mrb[0].mxu0 %v1701
        %v2449 = vpop.f32.mrb[0].mxu0
        %v2450 = vadd.f32 %v2305, %v2449
        %v2451 = vpop.f32.mrb[0].mxu0
        %2452 = vmatprep.mubr.f32.mxu0 %v1718
        %2453 = vmatmul.mubr.f32.gmra.mrb[0].mxu0 %v1702
        %v2454 = vpop.f32.mrb[0].mxu0
        %v2455 = vadd.f32 %v2310, %v2454
        %v2456 = vpop.f32.mrb[0].mxu0
        %2457 = vmatprep.mubr.f32.mxu0 %v1719
        %2458 = vmatmul.mubr.f32.gmra.mrb[0].mxu0 %v1703
        %v2459 = vpop.f32.mrb[0].mxu0
        %v2460 = vadd.f32 %v2315, %v2459
        %v2461 = vpop.f32.mrb[0].mxu0
        %2462 = vmatprep.mubr.f32.mxu0 %v1720
        %2463 = vmatmul.mubr.f32.gmra.mrb[0].mxu0 %v1704
        %v2464 = vpop.f32.mrb[0].mxu0
        %v2465 = vadd.f32 %v2320, %v2464
        %v2466 = vpop.f32.mrb[0].mxu0
        %2467 = vdwg.mxu0
        %2468 = vmatprep.subr.mxu0 0.0
        %2469 = vmatpush1.msra.mxu0 %v1865
        %2470 = vmatprep.subr.mxu0 0.0
        %2471 = vmatpush1.msra.mxu0 %v1866
        %2472 = vmatprep.subr.mxu0 0.0
        %2473 = vmatpush1.msra.mxu0 %v1867
        %2474 = vmatprep.subr.mxu0 0.0
        %2475 = vmatpush1.msra.mxu0 %v1868
        %2476 = vmatprep.subr.mxu0 0.0
        %2477 = vmatpush1.msra.mxu0 %v1869
        %2478 = vmatprep.subr.mxu0 0.0
        %2479 = vmatpush1.msra.mxu0 %v1870
        %2480 = vmatprep.subr.mxu0 0.0
        %2481 = vmatpush1.msra.mxu0 %v1871
        %2482 = vmatprep.subr.mxu0 0.0
        %2483 = vmatpush1.msra.mxu0 %v1872
        %2484 = vmatprep.subr.mxu0 0.0
        %2485 = vmatpush1.msra.mxu0 %v1873
        %2486 = vmatprep.subr.mxu0 0.0
        %2487 = vmatpush1.msra.mxu0 %v1874
        %2488 = vmatprep.subr.mxu0 0.0
        %2489 = vmatpush1.msra.mxu0 %v1875
        %2490 = vmatprep.subr.mxu0 0.0
        %2491 = vmatpush1.msra.mxu0 %v1876
        %2492 = vmatprep.subr.mxu0 0.0
        %2493 = vmatpush1.msra.mxu0 %v1877
        %2494 = vmatprep.subr.mxu0 0.0
        %2495 = vmatpush1.msra.mxu0 %v1878
        %2496 = vmatprep.subr.mxu0 0.0
        %2497 = vmatpush1.msra.mxu0 %v1879
        %2498 = vmatprep.subr.mxu0 0.0
        %2499 = vmatpush1.msra.mxu0 %v1880
        %2500 = vmatprep.subr.mxu0 0.0
        %2501 = vmatpush1.msra.mxu0 0.0
        %2502 = vmatprep.subr.mxu0 0.0
        %2503 = vmatpush1.msra.mxu0 0.0
        %2504 = vmatprep.subr.mxu0 0.0
        %2505 = vmatpush1.msra.mxu0 0.0
        %2506 = vmatprep.subr.mxu0 0.0
        %2507 = vmatpush1.msra.mxu0 0.0
        %2508 = vmatprep.subr.mxu0 0.0
        %2509 = vmatpush1.msra.mxu0 0.0
        %2510 = vmatprep.subr.mxu0 0.0
        %2511 = vmatpush1.msra.mxu0 0.0
        %2512 = vmatprep.subr.mxu0 0.0
        %2513 = vmatpush1.msra.mxu0 0.0
        %2514 = vmatprep.subr.mxu0 0.0
        %2515 = vmatpush1.msra.mxu0 0.0
        %2516 = vmatprep.subr.mxu0 0.0
        %2517 = vmatpush1.msra.mxu0 0.0
        %2518 = vmatprep.subr.mxu0 0.0
        %2519 = vmatpush1.msra.mxu0 0.0
        %2520 = vmatprep.subr.mxu0 0.0
        %2521 = vmatpush1.msra.mxu0 0.0
        %2522 = vmatprep.subr.mxu0 0.0
        %2523 = vmatpush1.msra.mxu0 0.0
        %2524 = vmatprep.subr.mxu0 0.0
        %2525 = vmatpush1.msra.mxu0 0.0
        %2526 = vmatprep.subr.mxu0 0.0
        %2527 = vmatpush1.msra.mxu0 0.0
        %2528 = vmatprep.subr.mxu0 0.0
        %2529 = vmatpush1.msra.mxu0 0.0
        %2530 = vmatprep.subr.mxu0 0.0
        %2531 = vmatpush1.msra.mxu0 0.0
        %2532 = vmatprep.mubr.f32.mxu0 0.0
        %2533 = vmatmul.mubr.f32.gmra.mrb[0].mxu0 %v1721
        %v2534 = vpop.f32.mrb[0].mxu0
        %v2535 = vadd.f32 %v2390, %v2534
        %v2536 = vpop.f32.mrb[0].mxu0
        %2537 = vmatprep.mubr.f32.mxu0 0.0
        %2538 = vmatmul.mubr.f32.gmra.mrb[0].mxu0 %v1722
        %v2539 = vpop.f32.mrb[0].mxu0
        %v2540 = vadd.f32 %v2395, %v2539
        %v2541 = vpop.f32.mrb[0].mxu0
        %2542 = vmatprep.mubr.f32.mxu0 0.0
        %2543 = vmatmul.mubr.f32.gmra.mrb[0].mxu0 %v1723
        %v2544 = vpop.f32.mrb[0].mxu0
        %v2545 = vadd.f32 %v2400, %v2544
        %v2546 = vpop.f32.mrb[0].mxu0
        %2547 = vmatprep.mubr.f32.mxu0 0.0
        %2548 = vmatmul.mubr.f32.gmra.mrb[0].mxu0 %v1724
        %v2549 = vpop.f32.mrb[0].mxu0
        %v2550 = vadd.f32 %v2405, %v2549
        %v2551 = vpop.f32.mrb[0].mxu0
        %2552 = vmatprep.mubr.f32.mxu0 0.0
        %2553 = vmatmul.mubr.f32.gmra.mrb[0].mxu0 %v1725
        %v2554 = vpop.f32.mrb[0].mxu0
        %v2555 = vadd.f32 %v2410, %v2554
        %v2556 = vpop.f32.mrb[0].mxu0
        %2557 = vmatprep.mubr.f32.mxu0 0.0
        %2558 = vmatmul.mubr.f32.gmra.mrb[0].mxu0 %v1726
        %v2559 = vpop.f32.mrb[0].mxu0
        %v2560 = vadd.f32 %v2415, %v2559
        %v2561 = vpop.f32.mrb[0].mxu0
        %2562 = vmatprep.mubr.f32.mxu0 0.0
        %2563 = vmatmul.mubr.f32.gmra.mrb[0].mxu0 %v1727
        %v2564 = vpop.f32.mrb[0].mxu0
        %v2565 = vadd.f32 %v2420, %v2564
        %v2566 = vpop.f32.mrb[0].mxu0
        %2567 = vmatprep.mubr.f32.mxu0 0.0
        %2568 = vmatmul.mubr.f32.gmra.mrb[0].mxu0 %v1728
        %v2569 = vpop.f32.mrb[0].mxu0
        %v2570 = vadd.f32 %v2425, %v2569
        %v2571 = vpop.f32.mrb[0].mxu0
        %2572 = vmatprep.mubr.f32.mxu0 0.0
        %2573 = vmatmul.mubr.f32.gmra.mrb[0].mxu0 %v1729
        %v2574 = vpop.f32.mrb[0].mxu0
        %v2575 = vadd.f32 %v2430, %v2574
        %v2576 = vpop.f32.mrb[0].mxu0
        %2577 = vmatprep.mubr.f32.mxu0 0.0
        %2578 = vmatmul.mubr.f32.gmra.mrb[0].mxu0 %v1730
        %v2579 = vpop.f32.mrb[0].mxu0
        %v2580 = vadd.f32 %v2435, %v2579
        %v2581 = vpop.f32.mrb[0].mxu0
        %2582 = vmatprep.mubr.f32.mxu0 0.0
        %2583 = vmatmul.mubr.f32.gmra.mrb[0].mxu0 %v1731
        %v2584 = vpop.f32.mrb[0].mxu0
        %v2585 = vadd.f32 %v2440, %v2584
        %v2586 = vpop.f32.mrb[0].mxu0
        %2587 = vmatprep.mubr.f32.mxu0 0.0
        %2588 = vmatmul.mubr.f32.gmra.mrb[0].mxu0 %v1732
        %v2589 = vpop.f32.mrb[0].mxu0
        %v2590 = vadd.f32 %v2445, %v2589
        %v2591 = vpop.f32.mrb[0].mxu0
        %2592 = vmatprep.mubr.f32.mxu0 0.0
        %2593 = vmatmul.mubr.f32.gmra.mrb[0].mxu0 %v1733
        %v2594 = vpop.f32.mrb[0].mxu0
        %v2595 = vadd.f32 %v2450, %v2594
        %v2596 = vpop.f32.mrb[0].mxu0
        %2597 = vmatprep.mubr.f32.mxu0 0.0
        %2598 = vmatmul.mubr.f32.gmra.mrb[0].mxu0 %v1734
        %v2599 = vpop.f32.mrb[0].mxu0
        %v2600 = vadd.f32 %v2455, %v2599
        %v2601 = vpop.f32.mrb[0].mxu0
        %2602 = vmatprep.mubr.f32.mxu0 0.0
        %2603 = vmatmul.mubr.f32.gmra.mrb[0].mxu0 %v1735
        %v2604 = vpop.f32.mrb[0].mxu0
        %v2605 = vadd.f32 %v2460, %v2604
        %v2606 = vpop.f32.mrb[0].mxu0
        %2607 = vmatprep.mubr.f32.mxu0 0.0
        %2608 = vmatmul.mubr.f32.gmra.mrb[0].mxu0 %v1736
        %v2609 = vpop.f32.mrb[0].mxu0
        %v2610 = vadd.f32 %v2465, %v2609
        %v2611 = vpop.f32.mrb[0].mxu0
        %2612 = vdwg.mxu0
        %v2613 = vld [vmem:[%s481 + $0x1] sm:$0xff]
        %v2614 = vld [vmem:[%s481 + $0x9] sm:$0xff]
        %v2615 = vld [vmem:[%s481 + $0x19] sm:$0xff]
        %v2616 = vld [vmem:[%s481 + $0x21] sm:$0xff]
        %v2617 = vld [vmem:[%s481 + $0x31] sm:$0xff]
        %v2618 = vld [vmem:[%s481 + $0x39] sm:$0xff]
        %v2619 = vld [vmem:[%s481 + $0x49] sm:$0xff]
        %v2620 = vld [vmem:[%s481 + $0x51] sm:$0xff]
        %v2621 = vld [vmem:[%s481 + $0x61] sm:$0xff]
        %v2622 = vld [vmem:[%s481 + $0x69] sm:$0xff]
        %v2623 = vld [vmem:[%s481 + $0x79] sm:$0xff]
        %v2624 = vld [vmem:[%s481 + $0x81] sm:$0xff]
        %v2625 = vld [vmem:[%s481 + $0x91] sm:$0xff]
        %v2626 = vld [vmem:[%s481 + $0x99] sm:$0xff]
        %v2627 = vld [vmem:[%s481 + $0xa9] sm:$0xff]
        %v2628 = vld [vmem:[%s481 + $0xb1] sm:$0xff]
        %v2629 = vadd.f32 %v2535, %v2613
        %v2630 = vadd.f32 %v2540, %v2614
        %v2631 = vadd.f32 %v2545, %v2615
        %v2632 = vadd.f32 %v2550, %v2616
        %v2633 = vadd.f32 %v2555, %v2617
        %v2634 = vadd.f32 %v2560, %v2618
        %v2635 = vadd.f32 %v2565, %v2619
        %v2636 = vadd.f32 %v2570, %v2620
        %v2637 = vadd.f32 %v2575, %v2621
        %v2638 = vadd.f32 %v2580, %v2622
        %v2639 = vadd.f32 %v2585, %v2623
        %v2640 = vadd.f32 %v2590, %v2624
        %v2641 = vadd.f32 %v2595, %v2625
        %v2642 = vadd.f32 %v2600, %v2626
        %v2643 = vadd.f32 %v2605, %v2627
        %v2644 = vadd.f32 %v2610, %v2628
        %2645 = vst [vmem:[%s205] sm:$0xff] %v2629
        %2646 = vst [vmem:[%s205 + $0x8] sm:$0xff] %v2630
        %2647 = vst [vmem:[%s205 + $0x10] sm:$0xff] %v2631
        %2648 = vst [vmem:[%s205 + $0x18] sm:$0xff] %v2632
        %2649 = vst [vmem:[%s205 + $0x20] sm:$0xff] %v2633
        %2650 = vst [vmem:[%s205 + $0x28] sm:$0xff] %v2634
        %2651 = vst [vmem:[%s205 + $0x30] sm:$0xff] %v2635
        %2652 = vst [vmem:[%s205 + $0x38] sm:$0xff] %v2636
        %2653 = vst [vmem:[%s205 + $0x40] sm:$0xff] %v2637
        %2654 = vst [vmem:[%s205 + $0x48] sm:$0xff] %v2638
        %2655 = vst [vmem:[%s205 + $0x50] sm:$0xff] %v2639
        %2656 = vst [vmem:[%s205 + $0x58] sm:$0xff] %v2640
        %2657 = vst [vmem:[%s205 + $0x60] sm:$0xff] %v2641
        %2658 = vst [vmem:[%s205 + $0x68] sm:$0xff] %v2642
        %2659 = vst [vmem:[%s205 + $0x70] sm:$0xff] %v2643
        %2660 = vst [vmem:[%s205 + $0x78] sm:$0xff] %v2644
        %s2661 = sand.u32 %s126, 1
        %s2662 = scalar_lea.sflag [#allocation7], %s2661
        %s2663 = sand.u32 %s126, 1
        %s2664 = smul.addr %s2663, 128
        %s2665 = scalar_lea.vmem [#allocation8], %s2664
        // Predicated region
        $region86: #{tpu_custom_call.1} parent=35 // pred_check
          %p2666 = pneg %p136
        $region87: #{tpu_custom_call.1} parent=35 // pred_check_branch
          %2668 = sbr.rel (%p2666) target = $region89
        $region88: #{tpu_custom_call.1} parent=35 // pred_region
          %s2669 = smul.u32 8, %s25
          %s2671 = ssub.s32 2048, 2048
          %2672 = vsyncadd %s2662, %s2671
          %s2673 = smul.addr %s2669, 2
          %s2674 = smul.addr %s24, 32
          %s2675 = sadd.s32 %s2673, %s2674
          %s2676 = smul.addr %s2675, 128
          %s2677 = scalar_lea.hbm %s5, %s2676
          %s2678 = sshll.u32 %s2665, 4
          %s2679 = int_to_ptr.vmem [resolvable:$true] %s2678
          %2684 = dma.vmem_to_hbm [thread:$0]  %s2679, 2048, %s2677, %s2662, 128, 128, 8
        $region89: #{tpu_custom_call.1} parent=35 // pred_fallthru
          _
      $region36: #{tpu_custom_call.1} parent=5 // pred_fallthru
        _
      %p2685 = scmp.le.s32.totalorder 2, %s15
      // Predicated region
      $region90: #{tpu_custom_call.1} parent=5 // pred_check
        %p2686 = pneg %p2685
      $region91: #{tpu_custom_call.1} parent=5 // pred_check_branch
        %2688 = sbr.rel (%p2686) target = $region93
      $region92: #{tpu_custom_call.1} parent=5 // pred_region
        %s2689 = ssub.s32 %s15, 2
        // Predicated region
        $region94: #{tpu_custom_call.1} parent=92 // pred_check
          %p2690 = pneg %p142
        $region95: #{tpu_custom_call.1} parent=92 // pred_check_branch
          %2692 = sbr.rel (%p2690) target = $region97
        $region96: #{tpu_custom_call.1} parent=92 // pred_region
          %s2693 = sand.u32 %s127, 1
          %s2694 = scalar_lea.sflag [#allocation7], %s2693
          %s2695 = sand.u32 %s127, 1
          %s2696 = smul.addr %s2695, 128
          %s2697 = scalar_lea.vmem [#allocation8], %s2696
          %2698 = dma.done %s2694, 2048
        $region97: #{tpu_custom_call.1} parent=92 // pred_fallthru
          _
      $region93: #{tpu_custom_call.1} parent=5 // pred_fallthru
        _
    $region6: #{tpu_custom_call.1} parent=1 // loop_footer
      %s19 = sadd.s32 1, %s15
    $region7: #{tpu_custom_call.1} parent=1 // loop_footer_branch
      %14 = sbr.rel target = $region3
    $region8: #{tpu_custom_call.1} parent=1 // loop_exit
      _
    %2699 = vsyncpa [#allocation6], 1
    %s2700 = scalar_lea.sflag [#allocation6], 1
    %2701 = vsyncpa %s2700, 1
    %2702 = vsyncpa [#allocation7], 1
    %s2703 = scalar_lea.sflag [#allocation7], 1
    %2704 = vsyncpa %s2703, 1
  %2705 = vsyncmov [#allocation4]
  %s2706 = vpop.sfrf %2705
  %p2707 = scmp.eq.s32.totalorder %s2706, 0
  %p2708 = pneg %p2707
  %2710 = shalt.err (%p2708)

</llo_original>
